<compile_context>
chip_gen: v5e
topology: v5e:2x2
jax: 0.10.0
libtpu: 0.0.40
codegen_flags: <defaults>
</compile_context>

<pallas_src>
import numpy as np
import jax
import jax.numpy as jnp
from jax import lax
from jax.experimental import pallas as pl
from jax.experimental.pallas import tpu as pltpu

# Full-f32 matmuls everywhere (reference XLA dots, interpret-mode kernel dots, and
# the Mosaic MXU lowering all honor this).
jax.config.update("jax_default_matmul_precision", "highest")

HI = jax.lax.Precision.HIGHEST


def attended_seq_kernel(
    x_ref,        # (T, Bt, D)   f32   padded inputs, time-major (batch tile)
    lens_ref,     # (Bt, 1)      int32 sequence lengths (padded rows clamped to 1)
    wih_ref,      # (D, 6H)      f32   fused input weights  [fwd r|z|n | bwd r|z|n]
    whh_f_ref,    # (H, 3H)      f32   fwd hidden weights, gates fused
    whh_b_ref,    # (H, 3H)      f32   bwd hidden weights, gates fused
    bih_ref,      # (1, 6H)      f32   fused bias (b_ih with b_hh folded for r,z)
    bhn_f_ref,    # (1, H)       f32   fwd b_hn (stays inside r*(...))
    bhn_b_ref,    # (1, H)       f32   bwd b_hn
    wmlp_ref,     # (2H, O)      f32
    bmlp_ref,     # (1, O)       f32
    cv_ref,       # (1, 1, O)    f32   context vector
    out_ref,      # (Bt, 2H)     f32   attended output
    gi_ref,       # scratch (T, Bt, 6H)  fused precomputed input projections
    outs_ref,     # scratch (T, Bt, 2H)  [fwd | bwd] GRU outputs
):
    T, B, D = x_ref.shape
    H = whh_f_ref.shape[0]
    H2 = 2 * H
    H3 = 3 * H

    lens = lens_ref[...]                                   # (Bt, 1) int32

    # ---- hoisted, direction-fused input projection: one big matmul ----
    x2d = x_ref[...].reshape(T * B, D)
    gi_ref[...] = (jnp.dot(x2d, wih_ref[...], preferred_element_type=jnp.float32)
                   + bih_ref[...]).reshape(T, B, 6 * H)

    whh_f = whh_f_ref[...]
    whh_b = whh_b_ref[...]
    bhn_f = bhn_f_ref[...]
    bhn_b = bhn_b_ref[...]

    def gru_step(gi3, h, whh, bhn):
        # gi3 already contains b_ih (+ b_hh for r,z); only h @ W_hh is recurrent.
        gh = jnp.dot(h, whh, preferred_element_type=jnp.float32)     # (Bt, 3H)
        r = jax.nn.sigmoid(gi3[:, :H] + gh[:, :H])
        z = jax.nn.sigmoid(gi3[:, H:H2] + gh[:, H:H2])
        n = jnp.tanh(gi3[:, H2:] + r * (gh[:, H2:] + bhn))
        return n + z * (h - n)                                       # (1-z)*n + z*h

    # ---- merged fwd/bwd recurrence: two independent chains per iteration ----
    def merged_body(i, carry):
        h_f, h_b = carry
        t_b = T - 1 - i
        gi_fw = gi_ref[i]                                            # (Bt, 6H)
        gi_bw = gi_ref[t_b]                                          # (Bt, 6H)
        # forward step at t = i  (h keeps evolving past end; stored output masked)
        h_f = gru_step(gi_fw[:, :H3], h_f, whh_f, bhn_f)
        outs_ref[i, :, :H] = jnp.where(lens > i, h_f, 0.0)
        # backward step at t = T-1-i  (hold h at 0 over padding)
        h_b = gru_step(gi_bw[:, H3:], h_b, whh_b, bhn_b)
        h_b = jnp.where(lens > t_b, h_b, 0.0)
        outs_ref[t_b, :, H:] = h_b
        return (h_f, h_b)

    h0 = jnp.zeros((B, H), jnp.float32)
    lax.fori_loop(0, T, merged_body, (h0, h0), unroll=min(T, 8))

    # ---- attention MLP + masked softmax + weighted sum (hoisted/vectorized) ----
    outs = outs_ref[...]                                             # (T, Bt, 2H)
    m = jnp.tanh(jnp.dot(outs.reshape(T * B, H2), wmlp_ref[...],
                         preferred_element_type=jnp.float32)
                 + bmlp_ref[...]).reshape(T, B, -1)                  # (T, Bt, O)
    score = jnp.sum(m * cv_ref[...], axis=-1, keepdims=True)         # (T, Bt, 1)

    t_iota = lax.broadcasted_iota(jnp.int32, (T, B, 1), 0)
    valid = t_iota < lens[None]                                      # (T, Bt, 1)
    NEG = jnp.float32(-1e30)
    mx = jnp.max(jnp.where(valid, score, NEG), axis=0, keepdims=True)  # (1, Bt, 1)
    e = jnp.where(valid, jnp.exp(score - mx), 0.0)                   # (T, Bt, 1)
    den = jnp.sum(e, axis=0, keepdims=True)                          # (1, Bt, 1)
    w = e / den                                                      # exact softmax
    out_ref[...] = jnp.sum(outs * w, axis=0)                         # (Bt, 2H)


def _round_up(x, m):
    return ((x + m - 1) // m) * m


def _tile_bytes(shape, itemsize=4):
    """Bytes of a VMEM buffer after (8,128) tile rounding of the last two dims."""
    s = list(shape)
    if len(s) == 1:
        s = [1] + s
    s[-1] = _round_up(s[-1], 128)
    s[-2] = _round_up(s[-2], 8)
    return itemsize * int(np.prod(s))


def attended_seq_embedding(sequences, seqlens, params, hidden_dim, batch_tile=8):
    """sequences: (sum(seqlens), D) flat; seqlens: numpy int array (B,)."""
    seqlens = np.asarray(seqlens)
    assert np.count_nonzero(seqlens) == seqlens.shape[0]
    B = seqlens.shape[0]
    Tmax = int(seqlens.max())
    D = int(sequences.shape[1])
    H = int(hidden_dim)
    O = int(np.asarray(params["w_mlp"]).shape[0])

    B_TILE = max(8, _round_up(int(batch_tile), 8))
    B_pad = max(B_TILE, _round_up(B, B_TILE))     # batch padded to tile multiple
    T_pad = max(8, _round_up(Tmax, 8))            # bucketed time axis

    # pack(): host-side numpy padding -> single device transfer (sort/unsort skipped).
    seqs_np = np.asarray(sequences, dtype=np.float32)
    padded_np = np.zeros((B_pad, T_pad, D), np.float32)
    begin = 0
    for i, L in enumerate(seqlens):
        L = int(L)
        padded_np[i, :L] = seqs_np[begin:begin + L]
        begin += L
    x_tbd = jnp.asarray(np.ascontiguousarray(padded_np.transpose(1, 0, 2)))  # (T,B,D)

    lens_np = np.ones((B_pad, 1), np.int32)       # padded rows get len=1 (avoid 0-div)
    lens_np[:B, 0] = seqlens.astype(np.int32)
    lens_col = jnp.asarray(lens_np)

    def prep_dir(prefix):
        wih = np.asarray(params[f"w_ih_{prefix}"], np.float32).T     # (D, 3H), r|z|n
        whh = np.asarray(params[f"w_hh_{prefix}"], np.float32).T     # (H, 3H)
        bih = np.asarray(params[f"b_ih_{prefix}"], np.float32).copy()
        bhh = np.asarray(params[f"b_hh_{prefix}"], np.float32)
        bih[:2 * H] += bhh[:2 * H]            # fold b_hh into r,z gate biases
        bhn = bhh[2 * H:].reshape(1, H)       # n-gate hidden bias stays separate
        return wih, whh, bih, bhn

    wih_f_np, whh_f_np, bih_f_np, bhn_f_np = prep_dir("f")
    wih_b_np, whh_b_np, bih_b_np, bhn_b_np = prep_dir("b")

    # Fuse the two directions along the output axis: (D, 6H) / (1, 6H).
    wih = jnp.asarray(np.ascontiguousarray(
        np.concatenate([wih_f_np, wih_b_np], axis=1)))               # (D, 6H)
    bih = jnp.asarray(np.concatenate([bih_f_np, bih_b_np]).reshape(1, 6 * H))
    whh_f = jnp.asarray(np.ascontiguousarray(whh_f_np))
    whh_b = jnp.asarray(np.ascontiguousarray(whh_b_np))
    bhn_f = jnp.asarray(bhn_f_np)
    bhn_b = jnp.asarray(bhn_b_np)
    wmlp_t = jnp.asarray(np.ascontiguousarray(np.asarray(params["w_mlp"], np.float32).T))
    bmlp = jnp.asarray(np.asarray(params["b_mlp"], np.float32).reshape(1, O))
    cv = jnp.asarray(np.asarray(params["cv"], np.float32).reshape(1, 1, O))

    # VMEM budget: double-buffered blocks + per-tile scratches (tile-rounded).
    block_bytes = (
        _tile_bytes((T_pad, B_TILE, D)) + _tile_bytes((B_TILE, 1)) +
        _tile_bytes((D, 6 * H)) + 2 * _tile_bytes((H, 3 * H)) +
        _tile_bytes((1, 6 * H)) + 2 * _tile_bytes((1, H)) +
        _tile_bytes((2 * H, O)) + _tile_bytes((1, O)) + _tile_bytes((1, 1, O)) +
        _tile_bytes((B_TILE, 2 * H)))
    scratch_bytes = (_tile_bytes((T_pad, B_TILE, 6 * H)) +
                     _tile_bytes((T_pad, B_TILE, 2 * H)))
    vmem_limit = int(min(max(2 * (2 * block_bytes + scratch_bytes) + (4 << 20),
                             16 << 20), 96 << 20))

    grid_spec = pltpu.PrefetchScalarGridSpec(
        num_scalar_prefetch=0,
        grid=(B_pad // B_TILE,),
        in_specs=[
            pl.BlockSpec((T_pad, B_TILE, D), lambda b: (0, b, 0)),   # x (time-major)
            pl.BlockSpec((B_TILE, 1), lambda b: (b, 0)),             # lens
            pl.BlockSpec((D, 6 * H), lambda b: (0, 0)),              # wih fused
            pl.BlockSpec((H, 3 * H), lambda b: (0, 0)),              # whh_f
            pl.BlockSpec((H, 3 * H), lambda b: (0, 0)),              # whh_b
            pl.BlockSpec((1, 6 * H), lambda b: (0, 0)),              # bih fused
            pl.BlockSpec((1, H), lambda b: (0, 0)),                  # bhn_f
            pl.BlockSpec((1, H), lambda b: (0, 0)),                  # bhn_b
            pl.BlockSpec((2 * H, O), lambda b: (0, 0)),              # wmlp
            pl.BlockSpec((1, O), lambda b: (0, 0)),                  # bmlp
            pl.BlockSpec((1, 1, O), lambda b: (0, 0, 0)),            # cv
        ],
        out_specs=pl.BlockSpec((B_TILE, 2 * H), lambda b: (b, 0)),
        scratch_shapes=[
            pltpu.VMEM((T_pad, B_TILE, 6 * H), jnp.float32),         # gi (both dirs)
            pltpu.VMEM((T_pad, B_TILE, 2 * H), jnp.float32),         # GRU outputs
        ],
    )

    out = pl.pallas_call(
        attended_seq_kernel,
        out_shape=jax.ShapeDtypeStruct((B_pad, 2 * H), jnp.float32),
        grid_spec=grid_spec,
        compiler_params=pltpu.CompilerParams(
            dimension_semantics=("parallel",),
            vmem_limit_bytes=vmem_limit,
        ),
    )(x_tbd, lens_col, wih, whh_f, whh_b, bih, bhn_f, bhn_b, wmlp_t, bmlp, cv)

    out = out[:B]                                           # drop batch padding
    padded = jnp.asarray(padded_np[:B, :Tmax])
    return out, padded


def reference(padded, seqlens, params, hidden_dim):
    """Pure-JAX reference with identical semantics (full-f32 matmuls)."""
    B, Tmax, D = padded.shape
    H = hidden_dim
    lens = jnp.asarray(np.asarray(seqlens), dtype=jnp.int32)

    def gru_dir(w_ih, w_hh, b_ih, b_hh, reverse):
        outs = jnp.zeros((B, Tmax, H), jnp.float32)
        h = jnp.zeros((B, H), jnp.float32)
        order = range(Tmax - 1, -1, -1) if reverse else range(Tmax)
        for t in order:
            x_t = padded[:, t, :]
            gi = jnp.dot(x_t, w_ih.T, precision=HI) + b_ih
            gh = jnp.dot(h, w_hh.T, precision=HI) + b_hh
            r = jax.nn.sigmoid(gi[:, :H] + gh[:, :H])
            z = jax.nn.sigmoid(gi[:, H:2 * H] + gh[:, H:2 * H])
            n = jnp.tanh(gi[:, 2 * H:] + r * gh[:, 2 * H:])
            h_new = (1.0 - z) * n + z * h
            valid = (lens > t)[:, None]
            if reverse:
                h = jnp.where(valid, h_new, 0.0)
                outs = outs.at[:, t].set(h)
            else:
                h = h_new
                outs = outs.at[:, t].set(jnp.where(valid, h_new, 0.0))
        return outs

    out_f = gru_dir(params["w_ih_f"], params["w_hh_f"],
                    params["b_ih_f"], params["b_hh_f"], False)
    out_b = gru_dir(params["w_ih_b"], params["w_hh_b"],
                    params["b_ih_b"], params["b_hh_b"], True)
    gru_out = jnp.concatenate([out_f, out_b], axis=-1)      # (B, T, 2H)
    mlp = jnp.tanh(jnp.dot(gru_out, params["w_mlp"].T, precision=HI)
                   + params["b_mlp"])
    attn = jnp.dot(mlp, params["cv"], precision=HI)         # (B, T)
    rows = []
    for i, L in enumerate(np.asarray(seqlens)):
        L = int(L)
        w = jax.nn.softmax(attn[i, :L])
        rows.append(jnp.dot(w, gru_out[i, :L], precision=HI))
    return jnp.stack(rows, axis=0)


if __name__ == "__main__":
    # Small shapes consistent with the module's forward.
    D, H, O = 32, 16, 32                  # input_dim, hidden_dim, output_dim
    seqlens = np.array([5, 8, 3, 6], dtype=np.int32)
    B, total = seqlens.shape[0], int(seqlens.sum())

    key = jax.random.PRNGKey(0)
    ks = jax.random.split(key, 16)
    params = {
        "w_ih_f": 0.1 * jax.random.normal(ks[0], (3 * H, D), jnp.float32),
        "w_hh_f": 0.1 * jax.random.normal(ks[1], (3 * H, H), jnp.float32),
        "b_ih_f": 0.1 * jax.random.normal(ks[2], (3 * H,), jnp.float32),
        "b_hh_f": 0.1 * jax.random.normal(ks[3], (3 * H,), jnp.float32),
        "w_ih_b": 0.1 * jax.random.normal(ks[4], (3 * H, D), jnp.float32),
        "w_hh_b": 0.1 * jax.random.normal(ks[5], (3 * H, H), jnp.float32),
        "b_ih_b": 0.1 * jax.random.normal(ks[6], (3 * H,), jnp.float32),
        "b_hh_b": 0.1 * jax.random.normal(ks[7], (3 * H,), jnp.float32),
        "w_mlp": 0.1 * jax.random.normal(ks[8], (O, 2 * H), jnp.float32),
        "b_mlp": 0.1 * jax.random.normal(ks[9], (O,), jnp.float32),
        "cv":    0.1 * jax.random.normal(ks[10], (O,), jnp.float32),
    }
    sequences = jax.random.normal(ks[11], (total, D), jnp.float32)

    out, padded = attended_seq_embedding(sequences, seqlens, params, H)
    out = jax.block_until_ready(out)

    ref = reference(padded, seqlens, params, H)
    assert out.shape == (B, 2 * H)
    assert np.all(np.isfinite(np.asarray(out)))
    np.testing.assert_allclose(np.asarray(out), np.asarray(ref), rtol=5e-4, atol=1e-5)

    print("KERNEL_OK")
</pallas_src>

<mosaic_0001>
module attributes {stable_mosaic.version = 11 : i64} {
  func.func @attended_seq_kernel(%arg0: i32, %arg1: memref<8x8x32xf32, #tpu.memory_space<vmem>>, %arg2: memref<8x1xi32, #tpu.memory_space<vmem>>, %arg3: memref<32x96xf32, #tpu.memory_space<vmem>>, %arg4: memref<16x48xf32, #tpu.memory_space<vmem>>, %arg5: memref<16x48xf32, #tpu.memory_space<vmem>>, %arg6: memref<1x96xf32, #tpu.memory_space<vmem>>, %arg7: memref<1x16xf32, #tpu.memory_space<vmem>>, %arg8: memref<1x16xf32, #tpu.memory_space<vmem>>, %arg9: memref<32x32xf32, #tpu.memory_space<vmem>>, %arg10: memref<1x32xf32, #tpu.memory_space<vmem>>, %arg11: memref<1x1x32xf32, #tpu.memory_space<vmem>>, %arg12: memref<8x32xf32, #tpu.memory_space<vmem>>, %arg13: memref<8x8x96xf32, #tpu.memory_space<vmem>>, %arg14: memref<8x8x32xf32, #tpu.memory_space<vmem>>) attributes {dimension_semantics = [#tpu.dimension_semantics<parallel>], iteration_bounds = array<i64: 1>, scalar_prefetch = 0 : i64, scratch_operands = 2 : i64, tpu.core_type = #tpu.core_type<tc>, window_params = [{transform_indices = @transform_0, window_bounds = array<i64: 8, 8, 32>}, {transform_indices = @transform_1, window_bounds = array<i64: 8, 1>}, {pipeline_mode = #tpu.pipeline_mode<synchronous>, transform_indices = @transform_2, window_bounds = array<i64: 32, 96>}, {pipeline_mode = #tpu.pipeline_mode<synchronous>, transform_indices = @transform_3, window_bounds = array<i64: 16, 48>}, {pipeline_mode = #tpu.pipeline_mode<synchronous>, transform_indices = @transform_4, window_bounds = array<i64: 16, 48>}, {pipeline_mode = #tpu.pipeline_mode<synchronous>, transform_indices = @transform_5, window_bounds = array<i64: 1, 96>}, {pipeline_mode = #tpu.pipeline_mode<synchronous>, transform_indices = @transform_6, window_bounds = array<i64: 1, 16>}, {pipeline_mode = #tpu.pipeline_mode<synchronous>, transform_indices = @transform_7, window_bounds = array<i64: 1, 16>}, {pipeline_mode = #tpu.pipeline_mode<synchronous>, transform_indices = @transform_8, window_bounds = array<i64: 32, 32>}, {pipeline_mode = #tpu.pipeline_mode<synchronous>, transform_indices = @transform_9, window_bounds = array<i64: 1, 32>}, {pipeline_mode = #tpu.pipeline_mode<synchronous>, transform_indices = @transform_10, window_bounds = array<i64: 1, 1, 32>}, {transform_indices = @transform_11, window_bounds = array<i64: 8, 32>}]} {
    %c0 = arith.constant 0 : index
    %c0_0 = arith.constant 0 : index
    %0 = vector.load %arg2[%c0, %c0_0] : memref<8x1xi32, #tpu.memory_space<vmem>>, vector<8x1xi32>
    %c0_1 = arith.constant 0 : index
    %c0_2 = arith.constant 0 : index
    %c0_3 = arith.constant 0 : index
    %1 = vector.load %arg1[%c0_1, %c0_2, %c0_3] : memref<8x8x32xf32, #tpu.memory_space<vmem>>, vector<8x8x32xf32>
    %2 = vector.shape_cast %1 : vector<8x8x32xf32> to vector<64x32xf32>
    %c0_4 = arith.constant 0 : index
    %c0_5 = arith.constant 0 : index
    %3 = vector.load %arg3[%c0_4, %c0_5] : memref<32x96xf32, #tpu.memory_space<vmem>>, vector<32x96xf32>
    %cst = arith.constant dense<0.000000e+00> : vector<64x96xf32>
    %4 = tpu.matmul %2, %3, %cst {dimension_numbers = #tpu.dot_dimension_numbers<[1], [0], [0], [1], [0, 0, 1, 1], [], []>, precision = #tpu.contract_precision<fp32>} : vector<64x32xf32>, vector<32x96xf32>, vector<64x96xf32> -> vector<64x96xf32>
    %c0_6 = arith.constant 0 : index
    %c0_7 = arith.constant 0 : index
    %5 = vector.load %arg6[%c0_6, %c0_7] : memref<1x96xf32, #tpu.memory_space<vmem>>, vector<1x96xf32>
    %6 = vector.broadcast %5 : vector<1x96xf32> to vector<64x96xf32>
    %7 = arith.addf %4, %6 : vector<64x96xf32>
    %8 = vector.shape_cast %7 : vector<64x96xf32> to vector<8x8x96xf32>
    %c0_8 = arith.constant 0 : index
    %c0_9 = arith.constant 0 : index
    %c0_10 = arith.constant 0 : index
    %9 = vector.load %arg13[%c0_8, %c0_9, %c0_10] : memref<8x8x96xf32, #tpu.memory_space<vmem>>, vector<8x8x96xf32>
    tpu.vector_store %arg13[%c0_8, %c0_9, %c0_10], %8 {strides = array<i32>} : memref<8x8x96xf32, #tpu.memory_space<vmem>>, vector<8x8x96xf32>,
    %c0_11 = arith.constant 0 : index
    %c0_12 = arith.constant 0 : index
    %10 = vector.load %arg4[%c0_11, %c0_12] : memref<16x48xf32, #tpu.memory_space<vmem>>, vector<16x48xf32>
    %c0_13 = arith.constant 0 : index
    %c0_14 = arith.constant 0 : index
    %11 = vector.load %arg5[%c0_13, %c0_14] : memref<16x48xf32, #tpu.memory_space<vmem>>, vector<16x48xf32>
    %c0_15 = arith.constant 0 : index
    %c0_16 = arith.constant 0 : index
    %12 = vector.load %arg7[%c0_15, %c0_16] : memref<1x16xf32, #tpu.memory_space<vmem>>, vector<1x16xf32>
    %c0_17 = arith.constant 0 : index
    %c0_18 = arith.constant 0 : index
    %13 = vector.load %arg8[%c0_17, %c0_18] : memref<1x16xf32, #tpu.memory_space<vmem>>, vector<1x16xf32>
    %cst_19 = arith.constant 0.000000e+00 : f32
    %14 = vector.broadcast %cst_19 : f32 to vector<8x16xf32>
    %c0_i32 = arith.constant 0 : i32
    %c7_i32 = arith.constant 7 : i32
    %15 = arith.subi %c7_i32, %c0_i32 : i32
    %16 = arith.index_cast %c0_i32 : i32 to index
    %c0_20 = arith.constant 0 : index
    %c0_21 = arith.constant 0 : index
    %17 = vector.load %arg13[%16, %c0_20, %c0_21] : memref<8x8x96xf32, #tpu.memory_space<vmem>>, vector<1x8x96xf32>
    %18 = vector.shape_cast %17 : vector<1x8x96xf32> to vector<8x96xf32>
    %19 = arith.index_cast %15 : i32 to index
    %c0_22 = arith.constant 0 : index
    %c0_23 = arith.constant 0 : index
    %20 = vector.load %arg13[%19, %c0_22, %c0_23] : memref<8x8x96xf32, #tpu.memory_space<vmem>>, vector<1x8x96xf32>
    %21 = vector.shape_cast %20 : vector<1x8x96xf32> to vector<8x96xf32>
    %22 = vector.extract_strided_slice %18 {offsets = [0, 0], sizes = [8, 48], strides = [1, 1]} : vector<8x96xf32> to vector<8x48xf32>
    %cst_24 = arith.constant dense<0.000000e+00> : vector<8x48xf32>
    %23 = tpu.matmul %14, %10, %cst_24 {dimension_numbers = #tpu.dot_dimension_numbers<[1], [0], [0], [1], [0, 0, 1, 1], [], []>, precision = #tpu.contract_precision<fp32>} : vector<8x16xf32>, vector<16x48xf32>, vector<8x48xf32> -> vector<8x48xf32>
    %24 = vector.extract_strided_slice %22 {offsets = [0, 0], sizes = [8, 16], strides = [1, 1]} : vector<8x48xf32> to vector<8x16xf32>
    %25 = vector.extract_strided_slice %23 {offsets = [0, 0], sizes = [8, 16], strides = [1, 1]} : vector<8x48xf32> to vector<8x16xf32>
    %26 = arith.addf %24, %25 : vector<8x16xf32>
    %27 = arith.negf %26 : vector<8x16xf32>
    %28 = math.exp %27 : vector<8x16xf32>
    %cst_25 = arith.constant 1.000000e+00 : f32
    %29 = vector.broadcast %cst_25 : f32 to vector<8x16xf32>
    %30 = arith.addf %29, %28 : vector<8x16xf32>
    %31 = arith.divf %29, %30 : vector<8x16xf32>
    %32 = vector.extract_strided_slice %22 {offsets = [0, 16], sizes = [8, 16], strides = [1, 1]} : vector<8x48xf32> to vector<8x16xf32>
    %33 = vector.extract_strided_slice %23 {offsets = [0, 16], sizes = [8, 16], strides = [1, 1]} : vector<8x48xf32> to vector<8x16xf32>
    %34 = arith.addf %32, %33 : vector<8x16xf32>
    %35 = arith.negf %34 : vector<8x16xf32>
    %36 = math.exp %35 : vector<8x16xf32>
    %cst_26 = arith.constant 1.000000e+00 : f32
    %37 = vector.broadcast %cst_26 : f32 to vector<8x16xf32>
    %38 = arith.addf %37, %36 : vector<8x16xf32>
    %39 = arith.divf %37, %38 : vector<8x16xf32>
    %40 = vector.extract_strided_slice %22 {offsets = [0, 32], sizes = [8, 16], strides = [1, 1]} : vector<8x48xf32> to vector<8x16xf32>
    %41 = vector.extract_strided_slice %23 {offsets = [0, 32], sizes = [8, 16], strides = [1, 1]} : vector<8x48xf32> to vector<8x16xf32>
    %42 = vector.broadcast %12 : vector<1x16xf32> to vector<8x16xf32>
    %43 = arith.addf %41, %42 : vector<8x16xf32>
    %44 = arith.mulf %31, %43 : vector<8x16xf32>
    %45 = arith.addf %40, %44 : vector<8x16xf32>
    %46 = math.tanh %45 : vector<8x16xf32>
    %47 = arith.subf %14, %46 : vector<8x16xf32>
    %48 = arith.mulf %39, %47 : vector<8x16xf32>
    %49 = arith.addf %46, %48 : vector<8x16xf32>
    %50 = vector.broadcast %c0_i32 : i32 to vector<8x1xi32>
    %51 = arith.cmpi sgt, %0, %50 : vector<8x1xi32>
    %cst_27 = arith.constant 0.000000e+00 : f32
    %52 = vector.shape_cast %51 : vector<8x1xi1> to vector<8x1xi1>
    %53 = vector.broadcast %52 : vector<8x1xi1> to vector<8x16xi1>
    %54 = vector.broadcast %cst_27 : f32 to vector<8x16xf32>
    %55 = arith.select %53, %49, %54 : vector<8x16xi1>, vector<8x16xf32>
    %56 = arith.index_cast %c0_i32 : i32 to index
    %c0_28 = arith.constant 0 : index
    %c0_29 = arith.constant 0 : index
    %57 = vector.load %arg14[%56, %c0_28, %c0_29] : memref<8x8x32xf32, #tpu.memory_space<vmem>>, vector<1x8x16xf32>
    %58 = vector.shape_cast %57 : vector<1x8x16xf32> to vector<8x16xf32>
    %59 = vector.shape_cast %55 : vector<8x16xf32> to vector<1x8x16xf32>
    tpu.vector_store %arg14[%56, %c0_28, %c0_29], %59 {strides = array<i32>} : memref<8x8x32xf32, #tpu.memory_space<vmem>>, vector<1x8x16xf32>,
    %60 = vector.extract_strided_slice %21 {offsets = [0, 48], sizes = [8, 48], strides = [1, 1]} : vector<8x96xf32> to vector<8x48xf32>
    %cst_30 = arith.constant dense<0.000000e+00> : vector<8x48xf32>
    %61 = tpu.matmul %14, %11, %cst_30 {dimension_numbers = #tpu.dot_dimension_numbers<[1], [0], [0], [1], [0, 0, 1, 1], [], []>, precision = #tpu.contract_precision<fp32>} : vector<8x16xf32>, vector<16x48xf32>, vector<8x48xf32> -> vector<8x48xf32>
    %62 = vector.extract_strided_slice %60 {offsets = [0, 0], sizes = [8, 16], strides = [1, 1]} : vector<8x48xf32> to vector<8x16xf32>
    %63 = vector.extract_strided_slice %61 {offsets = [0, 0], sizes = [8, 16], strides = [1, 1]} : vector<8x48xf32> to vector<8x16xf32>
    %64 = arith.addf %62, %63 : vector<8x16xf32>
    %65 = arith.negf %64 : vector<8x16xf32>
    %66 = math.exp %65 : vector<8x16xf32>
    %cst_31 = arith.constant 1.000000e+00 : f32
    %67 = vector.broadcast %cst_31 : f32 to vector<8x16xf32>
    %68 = arith.addf %67, %66 : vector<8x16xf32>
    %69 = arith.divf %67, %68 : vector<8x16xf32>
    %70 = vector.extract_strided_slice %60 {offsets = [0, 16], sizes = [8, 16], strides = [1, 1]} : vector<8x48xf32> to vector<8x16xf32>
    %71 = vector.extract_strided_slice %61 {offsets = [0, 16], sizes = [8, 16], strides = [1, 1]} : vector<8x48xf32> to vector<8x16xf32>
    %72 = arith.addf %70, %71 : vector<8x16xf32>
    %73 = arith.negf %72 : vector<8x16xf32>
    %74 = math.exp %73 : vector<8x16xf32>
    %cst_32 = arith.constant 1.000000e+00 : f32
    %75 = vector.broadcast %cst_32 : f32 to vector<8x16xf32>
    %76 = arith.addf %75, %74 : vector<8x16xf32>
    %77 = arith.divf %75, %76 : vector<8x16xf32>
    %78 = vector.extract_strided_slice %60 {offsets = [0, 32], sizes = [8, 16], strides = [1, 1]} : vector<8x48xf32> to vector<8x16xf32>
    %79 = vector.extract_strided_slice %61 {offsets = [0, 32], sizes = [8, 16], strides = [1, 1]} : vector<8x48xf32> to vector<8x16xf32>
    %80 = vector.broadcast %13 : vector<1x16xf32> to vector<8x16xf32>
    %81 = arith.addf %79, %80 : vector<8x16xf32>
    %82 = arith.mulf %69, %81 : vector<8x16xf32>
    %83 = arith.addf %78, %82 : vector<8x16xf32>
    %84 = math.tanh %83 : vector<8x16xf32>
    %85 = arith.subf %14, %84 : vector<8x16xf32>
    %86 = arith.mulf %77, %85 : vector<8x16xf32>
    %87 = arith.addf %84, %86 : vector<8x16xf32>
    %88 = vector.broadcast %15 : i32 to vector<8x1xi32>
    %89 = arith.cmpi sgt, %0, %88 : vector<8x1xi32>
    %cst_33 = arith.constant 0.000000e+00 : f32
    %90 = vector.shape_cast %89 : vector<8x1xi1> to vector<8x1xi1>
    %91 = vector.broadcast %90 : vector<8x1xi1> to vector<8x16xi1>
    %92 = vector.broadcast %cst_33 : f32 to vector<8x16xf32>
    %93 = arith.select %91, %87, %92 : vector<8x16xi1>, vector<8x16xf32>
    %94 = arith.index_cast %15 : i32 to index
    %c0_34 = arith.constant 0 : index
    %c16 = arith.constant 16 : index
    %95 = vector.load %arg14[%94, %c0_34, %c16] : memref<8x8x32xf32, #tpu.memory_space<vmem>>, vector<1x8x16xf32>
    %96 = vector.shape_cast %95 : vector<1x8x16xf32> to vector<8x16xf32>
    %97 = vector.shape_cast %93 : vector<8x16xf32> to vector<1x8x16xf32>
    tpu.vector_store %arg14[%94, %c0_34, %c16], %97 {strides = array<i32>} : memref<8x8x32xf32, #tpu.memory_space<vmem>>, vector<1x8x16xf32>,
    %c1_i32 = arith.constant 1 : i32
    %c7_i32_35 = arith.constant 7 : i32
    %98 = arith.subi %c7_i32_35, %c1_i32 : i32
    %99 = arith.index_cast %c1_i32 : i32 to index
    %c0_36 = arith.constant 0 : index
    %c0_37 = arith.constant 0 : index
    %100 = vector.load %arg13[%99, %c0_36, %c0_37] : memref<8x8x96xf32, #tpu.memory_space<vmem>>, vector<1x8x96xf32>
    %101 = vector.shape_cast %100 : vector<1x8x96xf32> to vector<8x96xf32>
    %102 = arith.index_cast %98 : i32 to index
    %c0_38 = arith.constant 0 : index
    %c0_39 = arith.constant 0 : index
    %103 = vector.load %arg13[%102, %c0_38, %c0_39] : memref<8x8x96xf32, #tpu.memory_space<vmem>>, vector<1x8x96xf32>
    %104 = vector.shape_cast %103 : vector<1x8x96xf32> to vector<8x96xf32>
    %105 = vector.extract_strided_slice %101 {offsets = [0, 0], sizes = [8, 48], strides = [1, 1]} : vector<8x96xf32> to vector<8x48xf32>
    %cst_40 = arith.constant dense<0.000000e+00> : vector<8x48xf32>
    %106 = tpu.matmul %49, %10, %cst_40 {dimension_numbers = #tpu.dot_dimension_numbers<[1], [0], [0], [1], [0, 0, 1, 1], [], []>, precision = #tpu.contract_precision<fp32>} : vector<8x16xf32>, vector<16x48xf32>, vector<8x48xf32> -> vector<8x48xf32>
    %107 = vector.extract_strided_slice %105 {offsets = [0, 0], sizes = [8, 16], strides = [1, 1]} : vector<8x48xf32> to vector<8x16xf32>
    %108 = vector.extract_strided_slice %106 {offsets = [0, 0], sizes = [8, 16], strides = [1, 1]} : vector<8x48xf32> to vector<8x16xf32>
    %109 = arith.addf %107, %108 : vector<8x16xf32>
    %110 = arith.negf %109 : vector<8x16xf32>
    %111 = math.exp %110 : vector<8x16xf32>
    %cst_41 = arith.constant 1.000000e+00 : f32
    %112 = vector.broadcast %cst_41 : f32 to vector<8x16xf32>
    %113 = arith.addf %112, %111 : vector<8x16xf32>
    %114 = arith.divf %112, %113 : vector<8x16xf32>
    %115 = vector.extract_strided_slice %105 {offsets = [0, 16], sizes = [8, 16], strides = [1, 1]} : vector<8x48xf32> to vector<8x16xf32>
    %116 = vector.extract_strided_slice %106 {offsets = [0, 16], sizes = [8, 16], strides = [1, 1]} : vector<8x48xf32> to vector<8x16xf32>
    %117 = arith.addf %115, %116 : vector<8x16xf32>
    %118 = arith.negf %117 : vector<8x16xf32>
    %119 = math.exp %118 : vector<8x16xf32>
    %cst_42 = arith.constant 1.000000e+00 : f32
    %120 = vector.broadcast %cst_42 : f32 to vector<8x16xf32>
    %121 = arith.addf %120, %119 : vector<8x16xf32>
    %122 = arith.divf %120, %121 : vector<8x16xf32>
    %123 = vector.extract_strided_slice %105 {offsets = [0, 32], sizes = [8, 16], strides = [1, 1]} : vector<8x48xf32> to vector<8x16xf32>
    %124 = vector.extract_strided_slice %106 {offsets = [0, 32], sizes = [8, 16], strides = [1, 1]} : vector<8x48xf32> to vector<8x16xf32>
    %125 = vector.broadcast %12 : vector<1x16xf32> to vector<8x16xf32>
    %126 = arith.addf %124, %125 : vector<8x16xf32>
    %127 = arith.mulf %114, %126 : vector<8x16xf32>
    %128 = arith.addf %123, %127 : vector<8x16xf32>
    %129 = math.tanh %128 : vector<8x16xf32>
    %130 = arith.subf %49, %129 : vector<8x16xf32>
    %131 = arith.mulf %122, %130 : vector<8x16xf32>
    %132 = arith.addf %129, %131 : vector<8x16xf32>
    %133 = vector.broadcast %c1_i32 : i32 to vector<8x1xi32>
    %134 = arith.cmpi sgt, %0, %133 : vector<8x1xi32>
    %cst_43 = arith.constant 0.000000e+00 : f32
    %135 = vector.shape_cast %134 : vector<8x1xi1> to vector<8x1xi1>
    %136 = vector.broadcast %135 : vector<8x1xi1> to vector<8x16xi1>
    %137 = vector.broadcast %cst_43 : f32 to vector<8x16xf32>
    %138 = arith.select %136, %132, %137 : vector<8x16xi1>, vector<8x16xf32>
    %139 = arith.index_cast %c1_i32 : i32 to index
    %c0_44 = arith.constant 0 : index
    %c0_45 = arith.constant 0 : index
    %140 = vector.load %arg14[%139, %c0_44, %c0_45] : memref<8x8x32xf32, #tpu.memory_space<vmem>>, vector<1x8x16xf32>
    %141 = vector.shape_cast %140 : vector<1x8x16xf32> to vector<8x16xf32>
    %142 = vector.shape_cast %138 : vector<8x16xf32> to vector<1x8x16xf32>
    tpu.vector_store %arg14[%139, %c0_44, %c0_45], %142 {strides = array<i32>} : memref<8x8x32xf32, #tpu.memory_space<vmem>>, vector<1x8x16xf32>,
    %143 = vector.extract_strided_slice %104 {offsets = [0, 48], sizes = [8, 48], strides = [1, 1]} : vector<8x96xf32> to vector<8x48xf32>
    %cst_46 = arith.constant dense<0.000000e+00> : vector<8x48xf32>
    %144 = tpu.matmul %93, %11, %cst_46 {dimension_numbers = #tpu.dot_dimension_numbers<[1], [0], [0], [1], [0, 0, 1, 1], [], []>, precision = #tpu.contract_precision<fp32>} : vector<8x16xf32>, vector<16x48xf32>, vector<8x48xf32> -> vector<8x48xf32>
    %145 = vector.extract_strided_slice %143 {offsets = [0, 0], sizes = [8, 16], strides = [1, 1]} : vector<8x48xf32> to vector<8x16xf32>
    %146 = vector.extract_strided_slice %144 {offsets = [0, 0], sizes = [8, 16], strides = [1, 1]} : vector<8x48xf32> to vector<8x16xf32>
    %147 = arith.addf %145, %146 : vector<8x16xf32>
    %148 = arith.negf %147 : vector<8x16xf32>
    %149 = math.exp %148 : vector<8x16xf32>
    %cst_47 = arith.constant 1.000000e+00 : f32
    %150 = vector.broadcast %cst_47 : f32 to vector<8x16xf32>
    %151 = arith.addf %150, %149 : vector<8x16xf32>
    %152 = arith.divf %150, %151 : vector<8x16xf32>
    %153 = vector.extract_strided_slice %143 {offsets = [0, 16], sizes = [8, 16], strides = [1, 1]} : vector<8x48xf32> to vector<8x16xf32>
    %154 = vector.extract_strided_slice %144 {offsets = [0, 16], sizes = [8, 16], strides = [1, 1]} : vector<8x48xf32> to vector<8x16xf32>
    %155 = arith.addf %153, %154 : vector<8x16xf32>
    %156 = arith.negf %155 : vector<8x16xf32>
    %157 = math.exp %156 : vector<8x16xf32>
    %cst_48 = arith.constant 1.000000e+00 : f32
    %158 = vector.broadcast %cst_48 : f32 to vector<8x16xf32>
    %159 = arith.addf %158, %157 : vector<8x16xf32>
    %160 = arith.divf %158, %159 : vector<8x16xf32>
    %161 = vector.extract_strided_slice %143 {offsets = [0, 32], sizes = [8, 16], strides = [1, 1]} : vector<8x48xf32> to vector<8x16xf32>
    %162 = vector.extract_strided_slice %144 {offsets = [0, 32], sizes = [8, 16], strides = [1, 1]} : vector<8x48xf32> to vector<8x16xf32>
    %163 = vector.broadcast %13 : vector<1x16xf32> to vector<8x16xf32>
    %164 = arith.addf %162, %163 : vector<8x16xf32>
    %165 = arith.mulf %152, %164 : vector<8x16xf32>
    %166 = arith.addf %161, %165 : vector<8x16xf32>
    %167 = math.tanh %166 : vector<8x16xf32>
    %168 = arith.subf %93, %167 : vector<8x16xf32>
    %169 = arith.mulf %160, %168 : vector<8x16xf32>
    %170 = arith.addf %167, %169 : vector<8x16xf32>
    %171 = vector.broadcast %98 : i32 to vector<8x1xi32>
    %172 = arith.cmpi sgt, %0, %171 : vector<8x1xi32>
    %cst_49 = arith.constant 0.000000e+00 : f32
    %173 = vector.shape_cast %172 : vector<8x1xi1> to vector<8x1xi1>
    %174 = vector.broadcast %173 : vector<8x1xi1> to vector<8x16xi1>
    %175 = vector.broadcast %cst_49 : f32 to vector<8x16xf32>
    %176 = arith.select %174, %170, %175 : vector<8x16xi1>, vector<8x16xf32>
    %177 = arith.index_cast %98 : i32 to index
    %c0_50 = arith.constant 0 : index
    %c16_51 = arith.constant 16 : index
    %178 = vector.load %arg14[%177, %c0_50, %c16_51] : memref<8x8x32xf32, #tpu.memory_space<vmem>>, vector<1x8x16xf32>
    %179 = vector.shape_cast %178 : vector<1x8x16xf32> to vector<8x16xf32>
    %180 = vector.shape_cast %176 : vector<8x16xf32> to vector<1x8x16xf32>
    tpu.vector_store %arg14[%177, %c0_50, %c16_51], %180 {strides = array<i32>} : memref<8x8x32xf32, #tpu.memory_space<vmem>>, vector<1x8x16xf32>,
    %c2_i32 = arith.constant 2 : i32
    %c7_i32_52 = arith.constant 7 : i32
    %181 = arith.subi %c7_i32_52, %c2_i32 : i32
    %182 = arith.index_cast %c2_i32 : i32 to index
    %c0_53 = arith.constant 0 : index
    %c0_54 = arith.constant 0 : index
    %183 = vector.load %arg13[%182, %c0_53, %c0_54] : memref<8x8x96xf32, #tpu.memory_space<vmem>>, vector<1x8x96xf32>
    %184 = vector.shape_cast %183 : vector<1x8x96xf32> to vector<8x96xf32>
    %185 = arith.index_cast %181 : i32 to index
    %c0_55 = arith.constant 0 : index
    %c0_56 = arith.constant 0 : index
    %186 = vector.load %arg13[%185, %c0_55, %c0_56] : memref<8x8x96xf32, #tpu.memory_space<vmem>>, vector<1x8x96xf32>
    %187 = vector.shape_cast %186 : vector<1x8x96xf32> to vector<8x96xf32>
    %188 = vector.extract_strided_slice %184 {offsets = [0, 0], sizes = [8, 48], strides = [1, 1]} : vector<8x96xf32> to vector<8x48xf32>
    %cst_57 = arith.constant dense<0.000000e+00> : vector<8x48xf32>
    %189 = tpu.matmul %132, %10, %cst_57 {dimension_numbers = #tpu.dot_dimension_numbers<[1], [0], [0], [1], [0, 0, 1, 1], [], []>, precision = #tpu.contract_precision<fp32>} : vector<8x16xf32>, vector<16x48xf32>, vector<8x48xf32> -> vector<8x48xf32>
    %190 = vector.extract_strided_slice %188 {offsets = [0, 0], sizes = [8, 16], strides = [1, 1]} : vector<8x48xf32> to vector<8x16xf32>
    %191 = vector.extract_strided_slice %189 {offsets = [0, 0], sizes = [8, 16], strides = [1, 1]} : vector<8x48xf32> to vector<8x16xf32>
    %192 = arith.addf %190, %191 : vector<8x16xf32>
    %193 = arith.negf %192 : vector<8x16xf32>
    %194 = math.exp %193 : vector<8x16xf32>
    %cst_58 = arith.constant 1.000000e+00 : f32
    %195 = vector.broadcast %cst_58 : f32 to vector<8x16xf32>
    %196 = arith.addf %195, %194 : vector<8x16xf32>
    %197 = arith.divf %195, %196 : vector<8x16xf32>
    %198 = vector.extract_strided_slice %188 {offsets = [0, 16], sizes = [8, 16], strides = [1, 1]} : vector<8x48xf32> to vector<8x16xf32>
    %199 = vector.extract_strided_slice %189 {offsets = [0, 16], sizes = [8, 16], strides = [1, 1]} : vector<8x48xf32> to vector<8x16xf32>
    %200 = arith.addf %198, %199 : vector<8x16xf32>
    %201 = arith.negf %200 : vector<8x16xf32>
    %202 = math.exp %201 : vector<8x16xf32>
    %cst_59 = arith.constant 1.000000e+00 : f32
    %203 = vector.broadcast %cst_59 : f32 to vector<8x16xf32>
    %204 = arith.addf %203, %202 : vector<8x16xf32>
    %205 = arith.divf %203, %204 : vector<8x16xf32>
    %206 = vector.extract_strided_slice %188 {offsets = [0, 32], sizes = [8, 16], strides = [1, 1]} : vector<8x48xf32> to vector<8x16xf32>
    %207 = vector.extract_strided_slice %189 {offsets = [0, 32], sizes = [8, 16], strides = [1, 1]} : vector<8x48xf32> to vector<8x16xf32>
    %208 = vector.broadcast %12 : vector<1x16xf32> to vector<8x16xf32>
    %209 = arith.addf %207, %208 : vector<8x16xf32>
    %210 = arith.mulf %197, %209 : vector<8x16xf32>
    %211 = arith.addf %206, %210 : vector<8x16xf32>
    %212 = math.tanh %211 : vector<8x16xf32>
    %213 = arith.subf %132, %212 : vector<8x16xf32>
    %214 = arith.mulf %205, %213 : vector<8x16xf32>
    %215 = arith.addf %212, %214 : vector<8x16xf32>
    %216 = vector.broadcast %c2_i32 : i32 to vector<8x1xi32>
    %217 = arith.cmpi sgt, %0, %216 : vector<8x1xi32>
    %cst_60 = arith.constant 0.000000e+00 : f32
    %218 = vector.shape_cast %217 : vector<8x1xi1> to vector<8x1xi1>
    %219 = vector.broadcast %218 : vector<8x1xi1> to vector<8x16xi1>
    %220 = vector.broadcast %cst_60 : f32 to vector<8x16xf32>
    %221 = arith.select %219, %215, %220 : vector<8x16xi1>, vector<8x16xf32>
    %222 = arith.index_cast %c2_i32 : i32 to index
    %c0_61 = arith.constant 0 : index
    %c0_62 = arith.constant 0 : index
    %223 = vector.load %arg14[%222, %c0_61, %c0_62] : memref<8x8x32xf32, #tpu.memory_space<vmem>>, vector<1x8x16xf32>
    %224 = vector.shape_cast %223 : vector<1x8x16xf32> to vector<8x16xf32>
    %225 = vector.shape_cast %221 : vector<8x16xf32> to vector<1x8x16xf32>
    tpu.vector_store %arg14[%222, %c0_61, %c0_62], %225 {strides = array<i32>} : memref<8x8x32xf32, #tpu.memory_space<vmem>>, vector<1x8x16xf32>,
    %226 = vector.extract_strided_slice %187 {offsets = [0, 48], sizes = [8, 48], strides = [1, 1]} : vector<8x96xf32> to vector<8x48xf32>
    %cst_63 = arith.constant dense<0.000000e+00> : vector<8x48xf32>
    %227 = tpu.matmul %176, %11, %cst_63 {dimension_numbers = #tpu.dot_dimension_numbers<[1], [0], [0], [1], [0, 0, 1, 1], [], []>, precision = #tpu.contract_precision<fp32>} : vector<8x16xf32>, vector<16x48xf32>, vector<8x48xf32> -> vector<8x48xf32>
    %228 = vector.extract_strided_slice %226 {offsets = [0, 0], sizes = [8, 16], strides = [1, 1]} : vector<8x48xf32> to vector<8x16xf32>
    %229 = vector.extract_strided_slice %227 {offsets = [0, 0], sizes = [8, 16], strides = [1, 1]} : vector<8x48xf32> to vector<8x16xf32>
    %230 = arith.addf %228, %229 : vector<8x16xf32>
    %231 = arith.negf %230 : vector<8x16xf32>
    %232 = math.exp %231 : vector<8x16xf32>
    %cst_64 = arith.constant 1.000000e+00 : f32
    %233 = vector.broadcast %cst_64 : f32 to vector<8x16xf32>
    %234 = arith.addf %233, %232 : vector<8x16xf32>
    %235 = arith.divf %233, %234 : vector<8x16xf32>
    %236 = vector.extract_strided_slice %226 {offsets = [0, 16], sizes = [8, 16], strides = [1, 1]} : vector<8x48xf32> to vector<8x16xf32>
    %237 = vector.extract_strided_slice %227 {offsets = [0, 16], sizes = [8, 16], strides = [1, 1]} : vector<8x48xf32> to vector<8x16xf32>
    %238 = arith.addf %236, %237 : vector<8x16xf32>
    %239 = arith.negf %238 : vector<8x16xf32>
    %240 = math.exp %239 : vector<8x16xf32>
    %cst_65 = arith.constant 1.000000e+00 : f32
    %241 = vector.broadcast %cst_65 : f32 to vector<8x16xf32>
    %242 = arith.addf %241, %240 : vector<8x16xf32>
    %243 = arith.divf %241, %242 : vector<8x16xf32>
    %244 = vector.extract_strided_slice %226 {offsets = [0, 32], sizes = [8, 16], strides = [1, 1]} : vector<8x48xf32> to vector<8x16xf32>
    %245 = vector.extract_strided_slice %227 {offsets = [0, 32], sizes = [8, 16], strides = [1, 1]} : vector<8x48xf32> to vector<8x16xf32>
    %246 = vector.broadcast %13 : vector<1x16xf32> to vector<8x16xf32>
    %247 = arith.addf %245, %246 : vector<8x16xf32>
    %248 = arith.mulf %235, %247 : vector<8x16xf32>
    %249 = arith.addf %244, %248 : vector<8x16xf32>
    %250 = math.tanh %249 : vector<8x16xf32>
    %251 = arith.subf %176, %250 : vector<8x16xf32>
    %252 = arith.mulf %243, %251 : vector<8x16xf32>
    %253 = arith.addf %250, %252 : vector<8x16xf32>
    %254 = vector.broadcast %181 : i32 to vector<8x1xi32>
    %255 = arith.cmpi sgt, %0, %254 : vector<8x1xi32>
    %cst_66 = arith.constant 0.000000e+00 : f32
    %256 = vector.shape_cast %255 : vector<8x1xi1> to vector<8x1xi1>
    %257 = vector.broadcast %256 : vector<8x1xi1> to vector<8x16xi1>
    %258 = vector.broadcast %cst_66 : f32 to vector<8x16xf32>
    %259 = arith.select %257, %253, %258 : vector<8x16xi1>, vector<8x16xf32>
    %260 = arith.index_cast %181 : i32 to index
    %c0_67 = arith.constant 0 : index
    %c16_68 = arith.constant 16 : index
    %261 = vector.load %arg14[%260, %c0_67, %c16_68] : memref<8x8x32xf32, #tpu.memory_space<vmem>>, vector<1x8x16xf32>
    %262 = vector.shape_cast %261 : vector<1x8x16xf32> to vector<8x16xf32>
    %263 = vector.shape_cast %259 : vector<8x16xf32> to vector<1x8x16xf32>
    tpu.vector_store %arg14[%260, %c0_67, %c16_68], %263 {strides = array<i32>} : memref<8x8x32xf32, #tpu.memory_space<vmem>>, vector<1x8x16xf32>,
    %c3_i32 = arith.constant 3 : i32
    %c7_i32_69 = arith.constant 7 : i32
    %264 = arith.subi %c7_i32_69, %c3_i32 : i32
    %265 = arith.index_cast %c3_i32 : i32 to index
    %c0_70 = arith.constant 0 : index
    %c0_71 = arith.constant 0 : index
    %266 = vector.load %arg13[%265, %c0_70, %c0_71] : memref<8x8x96xf32, #tpu.memory_space<vmem>>, vector<1x8x96xf32>
    %267 = vector.shape_cast %266 : vector<1x8x96xf32> to vector<8x96xf32>
    %268 = arith.index_cast %264 : i32 to index
    %c0_72 = arith.constant 0 : index
    %c0_73 = arith.constant 0 : index
    %269 = vector.load %arg13[%268, %c0_72, %c0_73] : memref<8x8x96xf32, #tpu.memory_space<vmem>>, vector<1x8x96xf32>
    %270 = vector.shape_cast %269 : vector<1x8x96xf32> to vector<8x96xf32>
    %271 = vector.extract_strided_slice %267 {offsets = [0, 0], sizes = [8, 48], strides = [1, 1]} : vector<8x96xf32> to vector<8x48xf32>
    %cst_74 = arith.constant dense<0.000000e+00> : vector<8x48xf32>
    %272 = tpu.matmul %215, %10, %cst_74 {dimension_numbers = #tpu.dot_dimension_numbers<[1], [0], [0], [1], [0, 0, 1, 1], [], []>, precision = #tpu.contract_precision<fp32>} : vector<8x16xf32>, vector<16x48xf32>, vector<8x48xf32> -> vector<8x48xf32>
    %273 = vector.extract_strided_slice %271 {offsets = [0, 0], sizes = [8, 16], strides = [1, 1]} : vector<8x48xf32> to vector<8x16xf32>
    %274 = vector.extract_strided_slice %272 {offsets = [0, 0], sizes = [8, 16], strides = [1, 1]} : vector<8x48xf32> to vector<8x16xf32>
    %275 = arith.addf %273, %274 : vector<8x16xf32>
    %276 = arith.negf %275 : vector<8x16xf32>
    %277 = math.exp %276 : vector<8x16xf32>
    %cst_75 = arith.constant 1.000000e+00 : f32
    %278 = vector.broadcast %cst_75 : f32 to vector<8x16xf32>
    %279 = arith.addf %278, %277 : vector<8x16xf32>
    %280 = arith.divf %278, %279 : vector<8x16xf32>
    %281 = vector.extract_strided_slice %271 {offsets = [0, 16], sizes = [8, 16], strides = [1, 1]} : vector<8x48xf32> to vector<8x16xf32>
    %282 = vector.extract_strided_slice %272 {offsets = [0, 16], sizes = [8, 16], strides = [1, 1]} : vector<8x48xf32> to vector<8x16xf32>
    %283 = arith.addf %281, %282 : vector<8x16xf32>
    %284 = arith.negf %283 : vector<8x16xf32>
    %285 = math.exp %284 : vector<8x16xf32>
    %cst_76 = arith.constant 1.000000e+00 : f32
    %286 = vector.broadcast %cst_76 : f32 to vector<8x16xf32>
    %287 = arith.addf %286, %285 : vector<8x16xf32>
    %288 = arith.divf %286, %287 : vector<8x16xf32>
    %289 = vector.extract_strided_slice %271 {offsets = [0, 32], sizes = [8, 16], strides = [1, 1]} : vector<8x48xf32> to vector<8x16xf32>
    %290 = vector.extract_strided_slice %272 {offsets = [0, 32], sizes = [8, 16], strides = [1, 1]} : vector<8x48xf32> to vector<8x16xf32>
    %291 = vector.broadcast %12 : vector<1x16xf32> to vector<8x16xf32>
    %292 = arith.addf %290, %291 : vector<8x16xf32>
    %293 = arith.mulf %280, %292 : vector<8x16xf32>
    %294 = arith.addf %289, %293 : vector<8x16xf32>
    %295 = math.tanh %294 : vector<8x16xf32>
    %296 = arith.subf %215, %295 : vector<8x16xf32>
    %297 = arith.mulf %288, %296 : vector<8x16xf32>
    %298 = arith.addf %295, %297 : vector<8x16xf32>
    %299 = vector.broadcast %c3_i32 : i32 to vector<8x1xi32>
    %300 = arith.cmpi sgt, %0, %299 : vector<8x1xi32>
    %cst_77 = arith.constant 0.000000e+00 : f32
    %301 = vector.shape_cast %300 : vector<8x1xi1> to vector<8x1xi1>
    %302 = vector.broadcast %301 : vector<8x1xi1> to vector<8x16xi1>
    %303 = vector.broadcast %cst_77 : f32 to vector<8x16xf32>
    %304 = arith.select %302, %298, %303 : vector<8x16xi1>, vector<8x16xf32>
    %305 = arith.index_cast %c3_i32 : i32 to index
    %c0_78 = arith.constant 0 : index
    %c0_79 = arith.constant 0 : index
    %306 = vector.load %arg14[%305, %c0_78, %c0_79] : memref<8x8x32xf32, #tpu.memory_space<vmem>>, vector<1x8x16xf32>
    %307 = vector.shape_cast %306 : vector<1x8x16xf32> to vector<8x16xf32>
    %308 = vector.shape_cast %304 : vector<8x16xf32> to vector<1x8x16xf32>
    tpu.vector_store %arg14[%305, %c0_78, %c0_79], %308 {strides = array<i32>} : memref<8x8x32xf32, #tpu.memory_space<vmem>>, vector<1x8x16xf32>,
    %309 = vector.extract_strided_slice %270 {offsets = [0, 48], sizes = [8, 48], strides = [1, 1]} : vector<8x96xf32> to vector<8x48xf32>
    %cst_80 = arith.constant dense<0.000000e+00> : vector<8x48xf32>
    %310 = tpu.matmul %259, %11, %cst_80 {dimension_numbers = #tpu.dot_dimension_numbers<[1], [0], [0], [1], [0, 0, 1, 1], [], []>, precision = #tpu.contract_precision<fp32>} : vector<8x16xf32>, vector<16x48xf32>, vector<8x48xf32> -> vector<8x48xf32>
    %311 = vector.extract_strided_slice %309 {offsets = [0, 0], sizes = [8, 16], strides = [1, 1]} : vector<8x48xf32> to vector<8x16xf32>
    %312 = vector.extract_strided_slice %310 {offsets = [0, 0], sizes = [8, 16], strides = [1, 1]} : vector<8x48xf32> to vector<8x16xf32>
    %313 = arith.addf %311, %312 : vector<8x16xf32>
    %314 = arith.negf %313 : vector<8x16xf32>
    %315 = math.exp %314 : vector<8x16xf32>
    %cst_81 = arith.constant 1.000000e+00 : f32
    %316 = vector.broadcast %cst_81 : f32 to vector<8x16xf32>
    %317 = arith.addf %316, %315 : vector<8x16xf32>
    %318 = arith.divf %316, %317 : vector<8x16xf32>
    %319 = vector.extract_strided_slice %309 {offsets = [0, 16], sizes = [8, 16], strides = [1, 1]} : vector<8x48xf32> to vector<8x16xf32>
    %320 = vector.extract_strided_slice %310 {offsets = [0, 16], sizes = [8, 16], strides = [1, 1]} : vector<8x48xf32> to vector<8x16xf32>
    %321 = arith.addf %319, %320 : vector<8x16xf32>
    %322 = arith.negf %321 : vector<8x16xf32>
    %323 = math.exp %322 : vector<8x16xf32>
    %cst_82 = arith.constant 1.000000e+00 : f32
    %324 = vector.broadcast %cst_82 : f32 to vector<8x16xf32>
    %325 = arith.addf %324, %323 : vector<8x16xf32>
    %326 = arith.divf %324, %325 : vector<8x16xf32>
    %327 = vector.extract_strided_slice %309 {offsets = [0, 32], sizes = [8, 16], strides = [1, 1]} : vector<8x48xf32> to vector<8x16xf32>
    %328 = vector.extract_strided_slice %310 {offsets = [0, 32], sizes = [8, 16], strides = [1, 1]} : vector<8x48xf32> to vector<8x16xf32>
    %329 = vector.broadcast %13 : vector<1x16xf32> to vector<8x16xf32>
    %330 = arith.addf %328, %329 : vector<8x16xf32>
    %331 = arith.mulf %318, %330 : vector<8x16xf32>
    %332 = arith.addf %327, %331 : vector<8x16xf32>
    %333 = math.tanh %332 : vector<8x16xf32>
    %334 = arith.subf %259, %333 : vector<8x16xf32>
    %335 = arith.mulf %326, %334 : vector<8x16xf32>
    %336 = arith.addf %333, %335 : vector<8x16xf32>
    %337 = vector.broadcast %264 : i32 to vector<8x1xi32>
    %338 = arith.cmpi sgt, %0, %337 : vector<8x1xi32>
    %cst_83 = arith.constant 0.000000e+00 : f32
    %339 = vector.shape_cast %338 : vector<8x1xi1> to vector<8x1xi1>
    %340 = vector.broadcast %339 : vector<8x1xi1> to vector<8x16xi1>
    %341 = vector.broadcast %cst_83 : f32 to vector<8x16xf32>
    %342 = arith.select %340, %336, %341 : vector<8x16xi1>, vector<8x16xf32>
    %343 = arith.index_cast %264 : i32 to index
    %c0_84 = arith.constant 0 : index
    %c16_85 = arith.constant 16 : index
    %344 = vector.load %arg14[%343, %c0_84, %c16_85] : memref<8x8x32xf32, #tpu.memory_space<vmem>>, vector<1x8x16xf32>
    %345 = vector.shape_cast %344 : vector<1x8x16xf32> to vector<8x16xf32>
    %346 = vector.shape_cast %342 : vector<8x16xf32> to vector<1x8x16xf32>
    tpu.vector_store %arg14[%343, %c0_84, %c16_85], %346 {strides = array<i32>} : memref<8x8x32xf32, #tpu.memory_space<vmem>>, vector<1x8x16xf32>,
    %c4_i32 = arith.constant 4 : i32
    %c7_i32_86 = arith.constant 7 : i32
    %347 = arith.subi %c7_i32_86, %c4_i32 : i32
    %348 = arith.index_cast %c4_i32 : i32 to index
    %c0_87 = arith.constant 0 : index
    %c0_88 = arith.constant 0 : index
    %349 = vector.load %arg13[%348, %c0_87, %c0_88] : memref<8x8x96xf32, #tpu.memory_space<vmem>>, vector<1x8x96xf32>
    %350 = vector.shape_cast %349 : vector<1x8x96xf32> to vector<8x96xf32>
    %351 = arith.index_cast %347 : i32 to index
    %c0_89 = arith.constant 0 : index
    %c0_90 = arith.constant 0 : index
    %352 = vector.load %arg13[%351, %c0_89, %c0_90] : memref<8x8x96xf32, #tpu.memory_space<vmem>>, vector<1x8x96xf32>
    %353 = vector.shape_cast %352 : vector<1x8x96xf32> to vector<8x96xf32>
    %354 = vector.extract_strided_slice %350 {offsets = [0, 0], sizes = [8, 48], strides = [1, 1]} : vector<8x96xf32> to vector<8x48xf32>
    %cst_91 = arith.constant dense<0.000000e+00> : vector<8x48xf32>
    %355 = tpu.matmul %298, %10, %cst_91 {dimension_numbers = #tpu.dot_dimension_numbers<[1], [0], [0], [1], [0, 0, 1, 1], [], []>, precision = #tpu.contract_precision<fp32>} : vector<8x16xf32>, vector<16x48xf32>, vector<8x48xf32> -> vector<8x48xf32>
    %356 = vector.extract_strided_slice %354 {offsets = [0, 0], sizes = [8, 16], strides = [1, 1]} : vector<8x48xf32> to vector<8x16xf32>
    %357 = vector.extract_strided_slice %355 {offsets = [0, 0], sizes = [8, 16], strides = [1, 1]} : vector<8x48xf32> to vector<8x16xf32>
    %358 = arith.addf %356, %357 : vector<8x16xf32>
    %359 = arith.negf %358 : vector<8x16xf32>
    %360 = math.exp %359 : vector<8x16xf32>
    %cst_92 = arith.constant 1.000000e+00 : f32
    %361 = vector.broadcast %cst_92 : f32 to vector<8x16xf32>
    %362 = arith.addf %361, %360 : vector<8x16xf32>
    %363 = arith.divf %361, %362 : vector<8x16xf32>
    %364 = vector.extract_strided_slice %354 {offsets = [0, 16], sizes = [8, 16], strides = [1, 1]} : vector<8x48xf32> to vector<8x16xf32>
    %365 = vector.extract_strided_slice %355 {offsets = [0, 16], sizes = [8, 16], strides = [1, 1]} : vector<8x48xf32> to vector<8x16xf32>
    %366 = arith.addf %364, %365 : vector<8x16xf32>
    %367 = arith.negf %366 : vector<8x16xf32>
    %368 = math.exp %367 : vector<8x16xf32>
    %cst_93 = arith.constant 1.000000e+00 : f32
    %369 = vector.broadcast %cst_93 : f32 to vector<8x16xf32>
    %370 = arith.addf %369, %368 : vector<8x16xf32>
    %371 = arith.divf %369, %370 : vector<8x16xf32>
    %372 = vector.extract_strided_slice %354 {offsets = [0, 32], sizes = [8, 16], strides = [1, 1]} : vector<8x48xf32> to vector<8x16xf32>
    %373 = vector.extract_strided_slice %355 {offsets = [0, 32], sizes = [8, 16], strides = [1, 1]} : vector<8x48xf32> to vector<8x16xf32>
    %374 = vector.broadcast %12 : vector<1x16xf32> to vector<8x16xf32>
    %375 = arith.addf %373, %374 : vector<8x16xf32>
    %376 = arith.mulf %363, %375 : vector<8x16xf32>
    %377 = arith.addf %372, %376 : vector<8x16xf32>
    %378 = math.tanh %377 : vector<8x16xf32>
    %379 = arith.subf %298, %378 : vector<8x16xf32>
    %380 = arith.mulf %371, %379 : vector<8x16xf32>
    %381 = arith.addf %378, %380 : vector<8x16xf32>
    %382 = vector.broadcast %c4_i32 : i32 to vector<8x1xi32>
    %383 = arith.cmpi sgt, %0, %382 : vector<8x1xi32>
    %cst_94 = arith.constant 0.000000e+00 : f32
    %384 = vector.shape_cast %383 : vector<8x1xi1> to vector<8x1xi1>
    %385 = vector.broadcast %384 : vector<8x1xi1> to vector<8x16xi1>
    %386 = vector.broadcast %cst_94 : f32 to vector<8x16xf32>
    %387 = arith.select %385, %381, %386 : vector<8x16xi1>, vector<8x16xf32>
    %388 = arith.index_cast %c4_i32 : i32 to index
    %c0_95 = arith.constant 0 : index
    %c0_96 = arith.constant 0 : index
    %389 = vector.load %arg14[%388, %c0_95, %c0_96] : memref<8x8x32xf32, #tpu.memory_space<vmem>>, vector<1x8x16xf32>
    %390 = vector.shape_cast %389 : vector<1x8x16xf32> to vector<8x16xf32>
    %391 = vector.shape_cast %387 : vector<8x16xf32> to vector<1x8x16xf32>
    tpu.vector_store %arg14[%388, %c0_95, %c0_96], %391 {strides = array<i32>} : memref<8x8x32xf32, #tpu.memory_space<vmem>>, vector<1x8x16xf32>,
    %392 = vector.extract_strided_slice %353 {offsets = [0, 48], sizes = [8, 48], strides = [1, 1]} : vector<8x96xf32> to vector<8x48xf32>
    %cst_97 = arith.constant dense<0.000000e+00> : vector<8x48xf32>
    %393 = tpu.matmul %342, %11, %cst_97 {dimension_numbers = #tpu.dot_dimension_numbers<[1], [0], [0], [1], [0, 0, 1, 1], [], []>, precision = #tpu.contract_precision<fp32>} : vector<8x16xf32>, vector<16x48xf32>, vector<8x48xf32> -> vector<8x48xf32>
    %394 = vector.extract_strided_slice %392 {offsets = [0, 0], sizes = [8, 16], strides = [1, 1]} : vector<8x48xf32> to vector<8x16xf32>
    %395 = vector.extract_strided_slice %393 {offsets = [0, 0], sizes = [8, 16], strides = [1, 1]} : vector<8x48xf32> to vector<8x16xf32>
    %396 = arith.addf %394, %395 : vector<8x16xf32>
    %397 = arith.negf %396 : vector<8x16xf32>
    %398 = math.exp %397 : vector<8x16xf32>
    %cst_98 = arith.constant 1.000000e+00 : f32
    %399 = vector.broadcast %cst_98 : f32 to vector<8x16xf32>
    %400 = arith.addf %399, %398 : vector<8x16xf32>
    %401 = arith.divf %399, %400 : vector<8x16xf32>
    %402 = vector.extract_strided_slice %392 {offsets = [0, 16], sizes = [8, 16], strides = [1, 1]} : vector<8x48xf32> to vector<8x16xf32>
    %403 = vector.extract_strided_slice %393 {offsets = [0, 16], sizes = [8, 16], strides = [1, 1]} : vector<8x48xf32> to vector<8x16xf32>
    %404 = arith.addf %402, %403 : vector<8x16xf32>
    %405 = arith.negf %404 : vector<8x16xf32>
    %406 = math.exp %405 : vector<8x16xf32>
    %cst_99 = arith.constant 1.000000e+00 : f32
    %407 = vector.broadcast %cst_99 : f32 to vector<8x16xf32>
    %408 = arith.addf %407, %406 : vector<8x16xf32>
    %409 = arith.divf %407, %408 : vector<8x16xf32>
    %410 = vector.extract_strided_slice %392 {offsets = [0, 32], sizes = [8, 16], strides = [1, 1]} : vector<8x48xf32> to vector<8x16xf32>
    %411 = vector.extract_strided_slice %393 {offsets = [0, 32], sizes = [8, 16], strides = [1, 1]} : vector<8x48xf32> to vector<8x16xf32>
    %412 = vector.broadcast %13 : vector<1x16xf32> to vector<8x16xf32>
    %413 = arith.addf %411, %412 : vector<8x16xf32>
    %414 = arith.mulf %401, %413 : vector<8x16xf32>
    %415 = arith.addf %410, %414 : vector<8x16xf32>
    %416 = math.tanh %415 : vector<8x16xf32>
    %417 = arith.subf %342, %416 : vector<8x16xf32>
    %418 = arith.mulf %409, %417 : vector<8x16xf32>
    %419 = arith.addf %416, %418 : vector<8x16xf32>
    %420 = vector.broadcast %347 : i32 to vector<8x1xi32>
    %421 = arith.cmpi sgt, %0, %420 : vector<8x1xi32>
    %cst_100 = arith.constant 0.000000e+00 : f32
    %422 = vector.shape_cast %421 : vector<8x1xi1> to vector<8x1xi1>
    %423 = vector.broadcast %422 : vector<8x1xi1> to vector<8x16xi1>
    %424 = vector.broadcast %cst_100 : f32 to vector<8x16xf32>
    %425 = arith.select %423, %419, %424 : vector<8x16xi1>, vector<8x16xf32>
    %426 = arith.index_cast %347 : i32 to index
    %c0_101 = arith.constant 0 : index
    %c16_102 = arith.constant 16 : index
    %427 = vector.load %arg14[%426, %c0_101, %c16_102] : memref<8x8x32xf32, #tpu.memory_space<vmem>>, vector<1x8x16xf32>
    %428 = vector.shape_cast %427 : vector<1x8x16xf32> to vector<8x16xf32>
    %429 = vector.shape_cast %425 : vector<8x16xf32> to vector<1x8x16xf32>
    tpu.vector_store %arg14[%426, %c0_101, %c16_102], %429 {strides = array<i32>} : memref<8x8x32xf32, #tpu.memory_space<vmem>>, vector<1x8x16xf32>,
    %c5_i32 = arith.constant 5 : i32
    %c7_i32_103 = arith.constant 7 : i32
    %430 = arith.subi %c7_i32_103, %c5_i32 : i32
    %431 = arith.index_cast %c5_i32 : i32 to index
    %c0_104 = arith.constant 0 : index
    %c0_105 = arith.constant 0 : index
    %432 = vector.load %arg13[%431, %c0_104, %c0_105] : memref<8x8x96xf32, #tpu.memory_space<vmem>>, vector<1x8x96xf32>
    %433 = vector.shape_cast %432 : vector<1x8x96xf32> to vector<8x96xf32>
    %434 = arith.index_cast %430 : i32 to index
    %c0_106 = arith.constant 0 : index
    %c0_107 = arith.constant 0 : index
    %435 = vector.load %arg13[%434, %c0_106, %c0_107] : memref<8x8x96xf32, #tpu.memory_space<vmem>>, vector<1x8x96xf32>
    %436 = vector.shape_cast %435 : vector<1x8x96xf32> to vector<8x96xf32>
    %437 = vector.extract_strided_slice %433 {offsets = [0, 0], sizes = [8, 48], strides = [1, 1]} : vector<8x96xf32> to vector<8x48xf32>
    %cst_108 = arith.constant dense<0.000000e+00> : vector<8x48xf32>
    %438 = tpu.matmul %381, %10, %cst_108 {dimension_numbers = #tpu.dot_dimension_numbers<[1], [0], [0], [1], [0, 0, 1, 1], [], []>, precision = #tpu.contract_precision<fp32>} : vector<8x16xf32>, vector<16x48xf32>, vector<8x48xf32> -> vector<8x48xf32>
    %439 = vector.extract_strided_slice %437 {offsets = [0, 0], sizes = [8, 16], strides = [1, 1]} : vector<8x48xf32> to vector<8x16xf32>
    %440 = vector.extract_strided_slice %438 {offsets = [0, 0], sizes = [8, 16], strides = [1, 1]} : vector<8x48xf32> to vector<8x16xf32>
    %441 = arith.addf %439, %440 : vector<8x16xf32>
    %442 = arith.negf %441 : vector<8x16xf32>
    %443 = math.exp %442 : vector<8x16xf32>
    %cst_109 = arith.constant 1.000000e+00 : f32
    %444 = vector.broadcast %cst_109 : f32 to vector<8x16xf32>
    %445 = arith.addf %444, %443 : vector<8x16xf32>
    %446 = arith.divf %444, %445 : vector<8x16xf32>
    %447 = vector.extract_strided_slice %437 {offsets = [0, 16], sizes = [8, 16], strides = [1, 1]} : vector<8x48xf32> to vector<8x16xf32>
    %448 = vector.extract_strided_slice %438 {offsets = [0, 16], sizes = [8, 16], strides = [1, 1]} : vector<8x48xf32> to vector<8x16xf32>
    %449 = arith.addf %447, %448 : vector<8x16xf32>
    %450 = arith.negf %449 : vector<8x16xf32>
    %451 = math.exp %450 : vector<8x16xf32>
    %cst_110 = arith.constant 1.000000e+00 : f32
    %452 = vector.broadcast %cst_110 : f32 to vector<8x16xf32>
    %453 = arith.addf %452, %451 : vector<8x16xf32>
    %454 = arith.divf %452, %453 : vector<8x16xf32>
    %455 = vector.extract_strided_slice %437 {offsets = [0, 32], sizes = [8, 16], strides = [1, 1]} : vector<8x48xf32> to vector<8x16xf32>
    %456 = vector.extract_strided_slice %438 {offsets = [0, 32], sizes = [8, 16], strides = [1, 1]} : vector<8x48xf32> to vector<8x16xf32>
    %457 = vector.broadcast %12 : vector<1x16xf32> to vector<8x16xf32>
    %458 = arith.addf %456, %457 : vector<8x16xf32>
    %459 = arith.mulf %446, %458 : vector<8x16xf32>
    %460 = arith.addf %455, %459 : vector<8x16xf32>
    %461 = math.tanh %460 : vector<8x16xf32>
    %462 = arith.subf %381, %461 : vector<8x16xf32>
    %463 = arith.mulf %454, %462 : vector<8x16xf32>
    %464 = arith.addf %461, %463 : vector<8x16xf32>
    %465 = vector.broadcast %c5_i32 : i32 to vector<8x1xi32>
    %466 = arith.cmpi sgt, %0, %465 : vector<8x1xi32>
    %cst_111 = arith.constant 0.000000e+00 : f32
    %467 = vector.shape_cast %466 : vector<8x1xi1> to vector<8x1xi1>
    %468 = vector.broadcast %467 : vector<8x1xi1> to vector<8x16xi1>
    %469 = vector.broadcast %cst_111 : f32 to vector<8x16xf32>
    %470 = arith.select %468, %464, %469 : vector<8x16xi1>, vector<8x16xf32>
    %471 = arith.index_cast %c5_i32 : i32 to index
    %c0_112 = arith.constant 0 : index
    %c0_113 = arith.constant 0 : index
    %472 = vector.load %arg14[%471, %c0_112, %c0_113] : memref<8x8x32xf32, #tpu.memory_space<vmem>>, vector<1x8x16xf32>
    %473 = vector.shape_cast %472 : vector<1x8x16xf32> to vector<8x16xf32>
    %474 = vector.shape_cast %470 : vector<8x16xf32> to vector<1x8x16xf32>
    tpu.vector_store %arg14[%471, %c0_112, %c0_113], %474 {strides = array<i32>} : memref<8x8x32xf32, #tpu.memory_space<vmem>>, vector<1x8x16xf32>,
    %475 = vector.extract_strided_slice %436 {offsets = [0, 48], sizes = [8, 48], strides = [1, 1]} : vector<8x96xf32> to vector<8x48xf32>
    %cst_114 = arith.constant dense<0.000000e+00> : vector<8x48xf32>
    %476 = tpu.matmul %425, %11, %cst_114 {dimension_numbers = #tpu.dot_dimension_numbers<[1], [0], [0], [1], [0, 0, 1, 1], [], []>, precision = #tpu.contract_precision<fp32>} : vector<8x16xf32>, vector<16x48xf32>, vector<8x48xf32> -> vector<8x48xf32>
    %477 = vector.extract_strided_slice %475 {offsets = [0, 0], sizes = [8, 16], strides = [1, 1]} : vector<8x48xf32> to vector<8x16xf32>
    %478 = vector.extract_strided_slice %476 {offsets = [0, 0], sizes = [8, 16], strides = [1, 1]} : vector<8x48xf32> to vector<8x16xf32>
    %479 = arith.addf %477, %478 : vector<8x16xf32>
    %480 = arith.negf %479 : vector<8x16xf32>
    %481 = math.exp %480 : vector<8x16xf32>
    %cst_115 = arith.constant 1.000000e+00 : f32
    %482 = vector.broadcast %cst_115 : f32 to vector<8x16xf32>
    %483 = arith.addf %482, %481 : vector<8x16xf32>
    %484 = arith.divf %482, %483 : vector<8x16xf32>
    %485 = vector.extract_strided_slice %475 {offsets = [0, 16], sizes = [8, 16], strides = [1, 1]} : vector<8x48xf32> to vector<8x16xf32>
    %486 = vector.extract_strided_slice %476 {offsets = [0, 16], sizes = [8, 16], strides = [1, 1]} : vector<8x48xf32> to vector<8x16xf32>
    %487 = arith.addf %485, %486 : vector<8x16xf32>
    %488 = arith.negf %487 : vector<8x16xf32>
    %489 = math.exp %488 : vector<8x16xf32>
    %cst_116 = arith.constant 1.000000e+00 : f32
    %490 = vector.broadcast %cst_116 : f32 to vector<8x16xf32>
    %491 = arith.addf %490, %489 : vector<8x16xf32>
    %492 = arith.divf %490, %491 : vector<8x16xf32>
    %493 = vector.extract_strided_slice %475 {offsets = [0, 32], sizes = [8, 16], strides = [1, 1]} : vector<8x48xf32> to vector<8x16xf32>
    %494 = vector.extract_strided_slice %476 {offsets = [0, 32], sizes = [8, 16], strides = [1, 1]} : vector<8x48xf32> to vector<8x16xf32>
    %495 = vector.broadcast %13 : vector<1x16xf32> to vector<8x16xf32>
    %496 = arith.addf %494, %495 : vector<8x16xf32>
    %497 = arith.mulf %484, %496 : vector<8x16xf32>
    %498 = arith.addf %493, %497 : vector<8x16xf32>
    %499 = math.tanh %498 : vector<8x16xf32>
    %500 = arith.subf %425, %499 : vector<8x16xf32>
    %501 = arith.mulf %492, %500 : vector<8x16xf32>
    %502 = arith.addf %499, %501 : vector<8x16xf32>
    %503 = vector.broadcast %430 : i32 to vector<8x1xi32>
    %504 = arith.cmpi sgt, %0, %503 : vector<8x1xi32>
    %cst_117 = arith.constant 0.000000e+00 : f32
    %505 = vector.shape_cast %504 : vector<8x1xi1> to vector<8x1xi1>
    %506 = vector.broadcast %505 : vector<8x1xi1> to vector<8x16xi1>
    %507 = vector.broadcast %cst_117 : f32 to vector<8x16xf32>
    %508 = arith.select %506, %502, %507 : vector<8x16xi1>, vector<8x16xf32>
    %509 = arith.index_cast %430 : i32 to index
    %c0_118 = arith.constant 0 : index
    %c16_119 = arith.constant 16 : index
    %510 = vector.load %arg14[%509, %c0_118, %c16_119] : memref<8x8x32xf32, #tpu.memory_space<vmem>>, vector<1x8x16xf32>
    %511 = vector.shape_cast %510 : vector<1x8x16xf32> to vector<8x16xf32>
    %512 = vector.shape_cast %508 : vector<8x16xf32> to vector<1x8x16xf32>
    tpu.vector_store %arg14[%509, %c0_118, %c16_119], %512 {strides = array<i32>} : memref<8x8x32xf32, #tpu.memory_space<vmem>>, vector<1x8x16xf32>,
    %c6_i32 = arith.constant 6 : i32
    %c7_i32_120 = arith.constant 7 : i32
    %513 = arith.subi %c7_i32_120, %c6_i32 : i32
    %514 = arith.index_cast %c6_i32 : i32 to index
    %c0_121 = arith.constant 0 : index
    %c0_122 = arith.constant 0 : index
    %515 = vector.load %arg13[%514, %c0_121, %c0_122] : memref<8x8x96xf32, #tpu.memory_space<vmem>>, vector<1x8x96xf32>
    %516 = vector.shape_cast %515 : vector<1x8x96xf32> to vector<8x96xf32>
    %517 = arith.index_cast %513 : i32 to index
    %c0_123 = arith.constant 0 : index
    %c0_124 = arith.constant 0 : index
    %518 = vector.load %arg13[%517, %c0_123, %c0_124] : memref<8x8x96xf32, #tpu.memory_space<vmem>>, vector<1x8x96xf32>
    %519 = vector.shape_cast %518 : vector<1x8x96xf32> to vector<8x96xf32>
    %520 = vector.extract_strided_slice %516 {offsets = [0, 0], sizes = [8, 48], strides = [1, 1]} : vector<8x96xf32> to vector<8x48xf32>
    %cst_125 = arith.constant dense<0.000000e+00> : vector<8x48xf32>
    %521 = tpu.matmul %464, %10, %cst_125 {dimension_numbers = #tpu.dot_dimension_numbers<[1], [0], [0], [1], [0, 0, 1, 1], [], []>, precision = #tpu.contract_precision<fp32>} : vector<8x16xf32>, vector<16x48xf32>, vector<8x48xf32> -> vector<8x48xf32>
    %522 = vector.extract_strided_slice %520 {offsets = [0, 0], sizes = [8, 16], strides = [1, 1]} : vector<8x48xf32> to vector<8x16xf32>
    %523 = vector.extract_strided_slice %521 {offsets = [0, 0], sizes = [8, 16], strides = [1, 1]} : vector<8x48xf32> to vector<8x16xf32>
    %524 = arith.addf %522, %523 : vector<8x16xf32>
    %525 = arith.negf %524 : vector<8x16xf32>
    %526 = math.exp %525 : vector<8x16xf32>
    %cst_126 = arith.constant 1.000000e+00 : f32
    %527 = vector.broadcast %cst_126 : f32 to vector<8x16xf32>
    %528 = arith.addf %527, %526 : vector<8x16xf32>
    %529 = arith.divf %527, %528 : vector<8x16xf32>
    %530 = vector.extract_strided_slice %520 {offsets = [0, 16], sizes = [8, 16], strides = [1, 1]} : vector<8x48xf32> to vector<8x16xf32>
    %531 = vector.extract_strided_slice %521 {offsets = [0, 16], sizes = [8, 16], strides = [1, 1]} : vector<8x48xf32> to vector<8x16xf32>
    %532 = arith.addf %530, %531 : vector<8x16xf32>
    %533 = arith.negf %532 : vector<8x16xf32>
    %534 = math.exp %533 : vector<8x16xf32>
    %cst_127 = arith.constant 1.000000e+00 : f32
    %535 = vector.broadcast %cst_127 : f32 to vector<8x16xf32>
    %536 = arith.addf %535, %534 : vector<8x16xf32>
    %537 = arith.divf %535, %536 : vector<8x16xf32>
    %538 = vector.extract_strided_slice %520 {offsets = [0, 32], sizes = [8, 16], strides = [1, 1]} : vector<8x48xf32> to vector<8x16xf32>
    %539 = vector.extract_strided_slice %521 {offsets = [0, 32], sizes = [8, 16], strides = [1, 1]} : vector<8x48xf32> to vector<8x16xf32>
    %540 = vector.broadcast %12 : vector<1x16xf32> to vector<8x16xf32>
    %541 = arith.addf %539, %540 : vector<8x16xf32>
    %542 = arith.mulf %529, %541 : vector<8x16xf32>
    %543 = arith.addf %538, %542 : vector<8x16xf32>
    %544 = math.tanh %543 : vector<8x16xf32>
    %545 = arith.subf %464, %544 : vector<8x16xf32>
    %546 = arith.mulf %537, %545 : vector<8x16xf32>
    %547 = arith.addf %544, %546 : vector<8x16xf32>
    %548 = vector.broadcast %c6_i32 : i32 to vector<8x1xi32>
    %549 = arith.cmpi sgt, %0, %548 : vector<8x1xi32>
    %cst_128 = arith.constant 0.000000e+00 : f32
    %550 = vector.shape_cast %549 : vector<8x1xi1> to vector<8x1xi1>
    %551 = vector.broadcast %550 : vector<8x1xi1> to vector<8x16xi1>
    %552 = vector.broadcast %cst_128 : f32 to vector<8x16xf32>
    %553 = arith.select %551, %547, %552 : vector<8x16xi1>, vector<8x16xf32>
    %554 = arith.index_cast %c6_i32 : i32 to index
    %c0_129 = arith.constant 0 : index
    %c0_130 = arith.constant 0 : index
    %555 = vector.load %arg14[%554, %c0_129, %c0_130] : memref<8x8x32xf32, #tpu.memory_space<vmem>>, vector<1x8x16xf32>
    %556 = vector.shape_cast %555 : vector<1x8x16xf32> to vector<8x16xf32>
    %557 = vector.shape_cast %553 : vector<8x16xf32> to vector<1x8x16xf32>
    tpu.vector_store %arg14[%554, %c0_129, %c0_130], %557 {strides = array<i32>} : memref<8x8x32xf32, #tpu.memory_space<vmem>>, vector<1x8x16xf32>,
    %558 = vector.extract_strided_slice %519 {offsets = [0, 48], sizes = [8, 48], strides = [1, 1]} : vector<8x96xf32> to vector<8x48xf32>
    %cst_131 = arith.constant dense<0.000000e+00> : vector<8x48xf32>
    %559 = tpu.matmul %508, %11, %cst_131 {dimension_numbers = #tpu.dot_dimension_numbers<[1], [0], [0], [1], [0, 0, 1, 1], [], []>, precision = #tpu.contract_precision<fp32>} : vector<8x16xf32>, vector<16x48xf32>, vector<8x48xf32> -> vector<8x48xf32>
    %560 = vector.extract_strided_slice %558 {offsets = [0, 0], sizes = [8, 16], strides = [1, 1]} : vector<8x48xf32> to vector<8x16xf32>
    %561 = vector.extract_strided_slice %559 {offsets = [0, 0], sizes = [8, 16], strides = [1, 1]} : vector<8x48xf32> to vector<8x16xf32>
    %562 = arith.addf %560, %561 : vector<8x16xf32>
    %563 = arith.negf %562 : vector<8x16xf32>
    %564 = math.exp %563 : vector<8x16xf32>
    %cst_132 = arith.constant 1.000000e+00 : f32
    %565 = vector.broadcast %cst_132 : f32 to vector<8x16xf32>
    %566 = arith.addf %565, %564 : vector<8x16xf32>
    %567 = arith.divf %565, %566 : vector<8x16xf32>
    %568 = vector.extract_strided_slice %558 {offsets = [0, 16], sizes = [8, 16], strides = [1, 1]} : vector<8x48xf32> to vector<8x16xf32>
    %569 = vector.extract_strided_slice %559 {offsets = [0, 16], sizes = [8, 16], strides = [1, 1]} : vector<8x48xf32> to vector<8x16xf32>
    %570 = arith.addf %568, %569 : vector<8x16xf32>
    %571 = arith.negf %570 : vector<8x16xf32>
    %572 = math.exp %571 : vector<8x16xf32>
    %cst_133 = arith.constant 1.000000e+00 : f32
    %573 = vector.broadcast %cst_133 : f32 to vector<8x16xf32>
    %574 = arith.addf %573, %572 : vector<8x16xf32>
    %575 = arith.divf %573, %574 : vector<8x16xf32>
    %576 = vector.extract_strided_slice %558 {offsets = [0, 32], sizes = [8, 16], strides = [1, 1]} : vector<8x48xf32> to vector<8x16xf32>
    %577 = vector.extract_strided_slice %559 {offsets = [0, 32], sizes = [8, 16], strides = [1, 1]} : vector<8x48xf32> to vector<8x16xf32>
    %578 = vector.broadcast %13 : vector<1x16xf32> to vector<8x16xf32>
    %579 = arith.addf %577, %578 : vector<8x16xf32>
    %580 = arith.mulf %567, %579 : vector<8x16xf32>
    %581 = arith.addf %576, %580 : vector<8x16xf32>
    %582 = math.tanh %581 : vector<8x16xf32>
    %583 = arith.subf %508, %582 : vector<8x16xf32>
    %584 = arith.mulf %575, %583 : vector<8x16xf32>
    %585 = arith.addf %582, %584 : vector<8x16xf32>
    %586 = vector.broadcast %513 : i32 to vector<8x1xi32>
    %587 = arith.cmpi sgt, %0, %586 : vector<8x1xi32>
    %cst_134 = arith.constant 0.000000e+00 : f32
    %588 = vector.shape_cast %587 : vector<8x1xi1> to vector<8x1xi1>
    %589 = vector.broadcast %588 : vector<8x1xi1> to vector<8x16xi1>
    %590 = vector.broadcast %cst_134 : f32 to vector<8x16xf32>
    %591 = arith.select %589, %585, %590 : vector<8x16xi1>, vector<8x16xf32>
    %592 = arith.index_cast %513 : i32 to index
    %c0_135 = arith.constant 0 : index
    %c16_136 = arith.constant 16 : index
    %593 = vector.load %arg14[%592, %c0_135, %c16_136] : memref<8x8x32xf32, #tpu.memory_space<vmem>>, vector<1x8x16xf32>
    %594 = vector.shape_cast %593 : vector<1x8x16xf32> to vector<8x16xf32>
    %595 = vector.shape_cast %591 : vector<8x16xf32> to vector<1x8x16xf32>
    tpu.vector_store %arg14[%592, %c0_135, %c16_136], %595 {strides = array<i32>} : memref<8x8x32xf32, #tpu.memory_space<vmem>>, vector<1x8x16xf32>,
    %c7_i32_137 = arith.constant 7 : i32
    %c7_i32_138 = arith.constant 7 : i32
    %596 = arith.subi %c7_i32_138, %c7_i32_137 : i32
    %597 = arith.index_cast %c7_i32_137 : i32 to index
    %c0_139 = arith.constant 0 : index
    %c0_140 = arith.constant 0 : index
    %598 = vector.load %arg13[%597, %c0_139, %c0_140] : memref<8x8x96xf32, #tpu.memory_space<vmem>>, vector<1x8x96xf32>
    %599 = vector.shape_cast %598 : vector<1x8x96xf32> to vector<8x96xf32>
    %600 = arith.index_cast %596 : i32 to index
    %c0_141 = arith.constant 0 : index
    %c0_142 = arith.constant 0 : index
    %601 = vector.load %arg13[%600, %c0_141, %c0_142] : memref<8x8x96xf32, #tpu.memory_space<vmem>>, vector<1x8x96xf32>
    %602 = vector.shape_cast %601 : vector<1x8x96xf32> to vector<8x96xf32>
    %603 = vector.extract_strided_slice %599 {offsets = [0, 0], sizes = [8, 48], strides = [1, 1]} : vector<8x96xf32> to vector<8x48xf32>
    %cst_143 = arith.constant dense<0.000000e+00> : vector<8x48xf32>
    %604 = tpu.matmul %547, %10, %cst_143 {dimension_numbers = #tpu.dot_dimension_numbers<[1], [0], [0], [1], [0, 0, 1, 1], [], []>, precision = #tpu.contract_precision<fp32>} : vector<8x16xf32>, vector<16x48xf32>, vector<8x48xf32> -> vector<8x48xf32>
    %605 = vector.extract_strided_slice %603 {offsets = [0, 0], sizes = [8, 16], strides = [1, 1]} : vector<8x48xf32> to vector<8x16xf32>
    %606 = vector.extract_strided_slice %604 {offsets = [0, 0], sizes = [8, 16], strides = [1, 1]} : vector<8x48xf32> to vector<8x16xf32>
    %607 = arith.addf %605, %606 : vector<8x16xf32>
    %608 = arith.negf %607 : vector<8x16xf32>
    %609 = math.exp %608 : vector<8x16xf32>
    %cst_144 = arith.constant 1.000000e+00 : f32
    %610 = vector.broadcast %cst_144 : f32 to vector<8x16xf32>
    %611 = arith.addf %610, %609 : vector<8x16xf32>
    %612 = arith.divf %610, %611 : vector<8x16xf32>
    %613 = vector.extract_strided_slice %603 {offsets = [0, 16], sizes = [8, 16], strides = [1, 1]} : vector<8x48xf32> to vector<8x16xf32>
    %614 = vector.extract_strided_slice %604 {offsets = [0, 16], sizes = [8, 16], strides = [1, 1]} : vector<8x48xf32> to vector<8x16xf32>
    %615 = arith.addf %613, %614 : vector<8x16xf32>
    %616 = arith.negf %615 : vector<8x16xf32>
    %617 = math.exp %616 : vector<8x16xf32>
    %cst_145 = arith.constant 1.000000e+00 : f32
    %618 = vector.broadcast %cst_145 : f32 to vector<8x16xf32>
    %619 = arith.addf %618, %617 : vector<8x16xf32>
    %620 = arith.divf %618, %619 : vector<8x16xf32>
    %621 = vector.extract_strided_slice %603 {offsets = [0, 32], sizes = [8, 16], strides = [1, 1]} : vector<8x48xf32> to vector<8x16xf32>
    %622 = vector.extract_strided_slice %604 {offsets = [0, 32], sizes = [8, 16], strides = [1, 1]} : vector<8x48xf32> to vector<8x16xf32>
    %623 = vector.broadcast %12 : vector<1x16xf32> to vector<8x16xf32>
    %624 = arith.addf %622, %623 : vector<8x16xf32>
    %625 = arith.mulf %612, %624 : vector<8x16xf32>
    %626 = arith.addf %621, %625 : vector<8x16xf32>
    %627 = math.tanh %626 : vector<8x16xf32>
    %628 = arith.subf %547, %627 : vector<8x16xf32>
    %629 = arith.mulf %620, %628 : vector<8x16xf32>
    %630 = arith.addf %627, %629 : vector<8x16xf32>
    %631 = vector.broadcast %c7_i32_137 : i32 to vector<8x1xi32>
    %632 = arith.cmpi sgt, %0, %631 : vector<8x1xi32>
    %cst_146 = arith.constant 0.000000e+00 : f32
    %633 = vector.shape_cast %632 : vector<8x1xi1> to vector<8x1xi1>
    %634 = vector.broadcast %633 : vector<8x1xi1> to vector<8x16xi1>
    %635 = vector.broadcast %cst_146 : f32 to vector<8x16xf32>
    %636 = arith.select %634, %630, %635 : vector<8x16xi1>, vector<8x16xf32>
    %637 = arith.index_cast %c7_i32_137 : i32 to index
    %c0_147 = arith.constant 0 : index
    %c0_148 = arith.constant 0 : index
    %638 = vector.load %arg14[%637, %c0_147, %c0_148] : memref<8x8x32xf32, #tpu.memory_space<vmem>>, vector<1x8x16xf32>
    %639 = vector.shape_cast %638 : vector<1x8x16xf32> to vector<8x16xf32>
    %640 = vector.shape_cast %636 : vector<8x16xf32> to vector<1x8x16xf32>
    tpu.vector_store %arg14[%637, %c0_147, %c0_148], %640 {strides = array<i32>} : memref<8x8x32xf32, #tpu.memory_space<vmem>>, vector<1x8x16xf32>,
    %641 = vector.extract_strided_slice %602 {offsets = [0, 48], sizes = [8, 48], strides = [1, 1]} : vector<8x96xf32> to vector<8x48xf32>
    %cst_149 = arith.constant dense<0.000000e+00> : vector<8x48xf32>
    %642 = tpu.matmul %591, %11, %cst_149 {dimension_numbers = #tpu.dot_dimension_numbers<[1], [0], [0], [1], [0, 0, 1, 1], [], []>, precision = #tpu.contract_precision<fp32>} : vector<8x16xf32>, vector<16x48xf32>, vector<8x48xf32> -> vector<8x48xf32>
    %643 = vector.extract_strided_slice %641 {offsets = [0, 0], sizes = [8, 16], strides = [1, 1]} : vector<8x48xf32> to vector<8x16xf32>
    %644 = vector.extract_strided_slice %642 {offsets = [0, 0], sizes = [8, 16], strides = [1, 1]} : vector<8x48xf32> to vector<8x16xf32>
    %645 = arith.addf %643, %644 : vector<8x16xf32>
    %646 = arith.negf %645 : vector<8x16xf32>
    %647 = math.exp %646 : vector<8x16xf32>
    %cst_150 = arith.constant 1.000000e+00 : f32
    %648 = vector.broadcast %cst_150 : f32 to vector<8x16xf32>
    %649 = arith.addf %648, %647 : vector<8x16xf32>
    %650 = arith.divf %648, %649 : vector<8x16xf32>
    %651 = vector.extract_strided_slice %641 {offsets = [0, 16], sizes = [8, 16], strides = [1, 1]} : vector<8x48xf32> to vector<8x16xf32>
    %652 = vector.extract_strided_slice %642 {offsets = [0, 16], sizes = [8, 16], strides = [1, 1]} : vector<8x48xf32> to vector<8x16xf32>
    %653 = arith.addf %651, %652 : vector<8x16xf32>
    %654 = arith.negf %653 : vector<8x16xf32>
    %655 = math.exp %654 : vector<8x16xf32>
    %cst_151 = arith.constant 1.000000e+00 : f32
    %656 = vector.broadcast %cst_151 : f32 to vector<8x16xf32>
    %657 = arith.addf %656, %655 : vector<8x16xf32>
    %658 = arith.divf %656, %657 : vector<8x16xf32>
    %659 = vector.extract_strided_slice %641 {offsets = [0, 32], sizes = [8, 16], strides = [1, 1]} : vector<8x48xf32> to vector<8x16xf32>
    %660 = vector.extract_strided_slice %642 {offsets = [0, 32], sizes = [8, 16], strides = [1, 1]} : vector<8x48xf32> to vector<8x16xf32>
    %661 = vector.broadcast %13 : vector<1x16xf32> to vector<8x16xf32>
    %662 = arith.addf %660, %661 : vector<8x16xf32>
    %663 = arith.mulf %650, %662 : vector<8x16xf32>
    %664 = arith.addf %659, %663 : vector<8x16xf32>
    %665 = math.tanh %664 : vector<8x16xf32>
    %666 = arith.subf %591, %665 : vector<8x16xf32>
    %667 = arith.mulf %658, %666 : vector<8x16xf32>
    %668 = arith.addf %665, %667 : vector<8x16xf32>
    %669 = vector.broadcast %596 : i32 to vector<8x1xi32>
    %670 = arith.cmpi sgt, %0, %669 : vector<8x1xi32>
    %cst_152 = arith.constant 0.000000e+00 : f32
    %671 = vector.shape_cast %670 : vector<8x1xi1> to vector<8x1xi1>
    %672 = vector.broadcast %671 : vector<8x1xi1> to vector<8x16xi1>
    %673 = vector.broadcast %cst_152 : f32 to vector<8x16xf32>
    %674 = arith.select %672, %668, %673 : vector<8x16xi1>, vector<8x16xf32>
    %675 = arith.index_cast %596 : i32 to index
    %c0_153 = arith.constant 0 : index
    %c16_154 = arith.constant 16 : index
    %676 = vector.load %arg14[%675, %c0_153, %c16_154] : memref<8x8x32xf32, #tpu.memory_space<vmem>>, vector<1x8x16xf32>
    %677 = vector.shape_cast %676 : vector<1x8x16xf32> to vector<8x16xf32>
    %678 = vector.shape_cast %674 : vector<8x16xf32> to vector<1x8x16xf32>
    tpu.vector_store %arg14[%675, %c0_153, %c16_154], %678 {strides = array<i32>} : memref<8x8x32xf32, #tpu.memory_space<vmem>>, vector<1x8x16xf32>,
    %c8_i32 = arith.constant 8 : i32
    %c0_155 = arith.constant 0 : index
    %c0_156 = arith.constant 0 : index
    %c0_157 = arith.constant 0 : index
    %679 = vector.load %arg14[%c0_155, %c0_156, %c0_157] : memref<8x8x32xf32, #tpu.memory_space<vmem>>, vector<8x8x32xf32>
    %680 = vector.shape_cast %679 : vector<8x8x32xf32> to vector<64x32xf32>
    %c0_158 = arith.constant 0 : index
    %c0_159 = arith.constant 0 : index
    %681 = vector.load %arg9[%c0_158, %c0_159] : memref<32x32xf32, #tpu.memory_space<vmem>>, vector<32x32xf32>
    %cst_160 = arith.constant dense<0.000000e+00> : vector<64x32xf32>
    %682 = tpu.matmul %680, %681, %cst_160 {dimension_numbers = #tpu.dot_dimension_numbers<[1], [0], [0], [1], [0, 0, 1, 1], [], []>, precision = #tpu.contract_precision<fp32>} : vector<64x32xf32>, vector<32x32xf32>, vector<64x32xf32> -> vector<64x32xf32>
    %c0_161 = arith.constant 0 : index
    %c0_162 = arith.constant 0 : index
    %683 = vector.load %arg10[%c0_161, %c0_162] : memref<1x32xf32, #tpu.memory_space<vmem>>, vector<1x32xf32>
    %684 = vector.broadcast %683 : vector<1x32xf32> to vector<64x32xf32>
    %685 = arith.addf %682, %684 : vector<64x32xf32>
    %686 = math.tanh %685 : vector<64x32xf32>
    %687 = vector.shape_cast %686 : vector<64x32xf32> to vector<8x8x32xf32>
    %c0_163 = arith.constant 0 : index
    %c0_164 = arith.constant 0 : index
    %c0_165 = arith.constant 0 : index
    %688 = vector.load %arg11[%c0_163, %c0_164, %c0_165] : memref<1x1x32xf32, #tpu.memory_space<vmem>>, vector<1x1x32xf32>
    %689 = vector.broadcast %688 : vector<1x1x32xf32> to vector<8x8x32xf32>
    %690 = arith.mulf %687, %689 : vector<8x8x32xf32>
    %cst_166 = arith.constant dense<0.000000e+00> : vector<8x8xf32>
    %691 = vector.multi_reduction <add>, %690, %cst_166 [2] : vector<8x8x32xf32> to vector<8x8xf32>
    %692 = vector.shape_cast %691 : vector<8x8xf32> to vector<8x8x1xf32>
    %693 = tpu.iota {dimensions = array<i32: 0>} : vector<8x8x1xi32>
    %694 = vector.shape_cast %0 : vector<8x1xi32> to vector<1x8x1xi32>
    %695 = vector.broadcast %694 : vector<1x8x1xi32> to vector<8x8x1xi32>
    %696 = arith.cmpi slt, %693, %695 : vector<8x8x1xi32>
    %cst_167 = arith.constant -1.000000e+30 : f32
    %697 = vector.broadcast %cst_167 : f32 to vector<8x8x1xf32>
    %698 = arith.select %696, %692, %697 : vector<8x8x1xi1>, vector<8x8x1xf32>
    %cst_168 = arith.constant dense<0xFF800000> : vector<8x1xf32>
    %699 = vector.multi_reduction <maximumf>, %698, %cst_168 [0] : vector<8x8x1xf32> to vector<8x1xf32>
    %700 = vector.shape_cast %699 : vector<8x1xf32> to vector<1x8x1xf32>
    %701 = vector.broadcast %700 : vector<1x8x1xf32> to vector<8x8x1xf32>
    %702 = arith.subf %692, %701 : vector<8x8x1xf32>
    %703 = math.exp %702 : vector<8x8x1xf32>
    %cst_169 = arith.constant 0.000000e+00 : f32
    %704 = vector.broadcast %cst_169 : f32 to vector<8x8x1xf32>
    %705 = arith.select %696, %703, %704 : vector<8x8x1xi1>, vector<8x8x1xf32>
    %cst_170 = arith.constant dense<0.000000e+00> : vector<8x1xf32>
    %706 = vector.multi_reduction <add>, %705, %cst_170 [0] : vector<8x8x1xf32> to vector<8x1xf32>
    %707 = vector.shape_cast %706 : vector<8x1xf32> to vector<1x8x1xf32>
    %708 = vector.broadcast %707 : vector<1x8x1xf32> to vector<8x8x1xf32>
    %709 = arith.divf %705, %708 : vector<8x8x1xf32>
    %710 = vector.broadcast %709 : vector<8x8x1xf32> to vector<8x8x32xf32>
    %711 = arith.mulf %679, %710 : vector<8x8x32xf32>
    %cst_171 = arith.constant dense<0.000000e+00> : vector<8x32xf32>
    %712 = vector.multi_reduction <add>, %711, %cst_171 [0] : vector<8x8x32xf32> to vector<8x32xf32>
    %c0_172 = arith.constant 0 : index
    %c0_173 = arith.constant 0 : index
    %713 = vector.load %arg12[%c0_172, %c0_173] : memref<8x32xf32, #tpu.memory_space<vmem>>, vector<8x32xf32>
    tpu.vector_store %arg12[%c0_172, %c0_173], %712 {strides = array<i32>} : memref<8x32xf32, #tpu.memory_space<vmem>>, vector<8x32xf32>,
    return
  }
  func.func @transform_0(%arg0: i32) -> (i32, i32, i32) {
    %c0_i32 = arith.constant 0 : i32
    %c0_i32_0 = arith.constant 0 : i32
    %c0_i32_1 = arith.constant 0 : i32
    return %c0_i32, %arg0, %c0_i32_0 : i32, i32, i32
  }
  func.func @transform_1(%arg0: i32) -> (i32, i32) {
    %c0_i32 = arith.constant 0 : i32
    %c0_i32_0 = arith.constant 0 : i32
    return %arg0, %c0_i32 : i32, i32
  }
  func.func @transform_2(%arg0: i32) -> (i32, i32) {
    %c0_i32 = arith.constant 0 : i32
    %c0_i32_0 = arith.constant 0 : i32
    %c0_i32_1 = arith.constant 0 : i32
    return %c0_i32, %c0_i32_0 : i32, i32
  }
  func.func @transform_3(%arg0: i32) -> (i32, i32) {
    %c0_i32 = arith.constant 0 : i32
    %c0_i32_0 = arith.constant 0 : i32
    %c0_i32_1 = arith.constant 0 : i32
    return %c0_i32, %c0_i32_0 : i32, i32
  }
  func.func @transform_4(%arg0: i32) -> (i32, i32) {
    %c0_i32 = arith.constant 0 : i32
    %c0_i32_0 = arith.constant 0 : i32
    %c0_i32_1 = arith.constant 0 : i32
    return %c0_i32, %c0_i32_0 : i32, i32
  }
  func.func @transform_5(%arg0: i32) -> (i32, i32) {
    %c0_i32 = arith.constant 0 : i32
    %c0_i32_0 = arith.constant 0 : i32
    %c0_i32_1 = arith.constant 0 : i32
    return %c0_i32, %c0_i32_0 : i32, i32
  }
  func.func @transform_6(%arg0: i32) -> (i32, i32) {
    %c0_i32 = arith.constant 0 : i32
    %c0_i32_0 = arith.constant 0 : i32
    %c0_i32_1 = arith.constant 0 : i32
    return %c0_i32, %c0_i32_0 : i32, i32
  }
  func.func @transform_7(%arg0: i32) -> (i32, i32) {
    %c0_i32 = arith.constant 0 : i32
    %c0_i32_0 = arith.constant 0 : i32
    %c0_i32_1 = arith.constant 0 : i32
    return %c0_i32, %c0_i32_0 : i32, i32
  }
  func.func @transform_8(%arg0: i32) -> (i32, i32) {
    %c0_i32 = arith.constant 0 : i32
    %c0_i32_0 = arith.constant 0 : i32
    %c0_i32_1 = arith.constant 0 : i32
    return %c0_i32, %c0_i32_0 : i32, i32
  }
  func.func @transform_9(%arg0: i32) -> (i32, i32) {
    %c0_i32 = arith.constant 0 : i32
    %c0_i32_0 = arith.constant 0 : i32
    %c0_i32_1 = arith.constant 0 : i32
    return %c0_i32, %c0_i32_0 : i32, i32
  }
  func.func @transform_10(%arg0: i32) -> (i32, i32, i32) {
    %c0_i32 = arith.constant 0 : i32
    %c0_i32_0 = arith.constant 0 : i32
    %c0_i32_1 = arith.constant 0 : i32
    %c0_i32_2 = arith.constant 0 : i32
    return %c0_i32, %c0_i32_0, %c0_i32_1 : i32, i32, i32
  }
  func.func @transform_11(%arg0: i32) -> (i32, i32) {
    %c0_i32 = arith.constant 0 : i32
    %c0_i32_0 = arith.constant 0 : i32
    return %arg0, %c0_i32 : i32, i32
  }
}

</mosaic_0001>

<llo_original>
// kernel: tpu_custom_call.1
$region0: #{tpu_custom_call.1}
  #allocation0 [shape = 'u32[]', space=smem, size = 0x4, offset = 0x4, fixed_abs, tag = 'smem constant byte address 0x4 - core index']
  #allocation1 [shape = 'u32[72,128]{1,0:T(1,128)}', space=vmem, size = 0x9000, scoped, tag = 'internal scratch']
  #allocation2 [shape = 'f32[8,8,96]{2,1,0:T(8,128)}', space=vmem, size = 0x8000, scoped, tag = 'scratch operand']
  #allocation3 [shape = 'f32[8,8,32]{2,1,0:T(8,128)}', space=vmem, size = 0x8000, scoped, tag = 'scratch operand']
  %s0 = inlined_call_operand.hbm [shape: f32[8,8,32], index: 0, kind: input, shape index: {}]
  %s1 = inlined_call_operand.vmem [shape: s32[8,1], index: 1, kind: input, shape index: {}]
  %s2 = inlined_call_operand.hbm [shape: f32[32,96], index: 2, kind: input, shape index: {}]
  %s3 = inlined_call_operand.hbm [shape: f32[16,48], index: 3, kind: input, shape index: {}]
  %s4 = inlined_call_operand.hbm [shape: f32[16,48], index: 4, kind: input, shape index: {}]
  %s5 = inlined_call_operand.vmem [shape: f32[1,96], index: 5, kind: input, shape index: {}]
  %s6 = inlined_call_operand.vmem [shape: f32[1,16], index: 6, kind: input, shape index: {}]
  %s7 = inlined_call_operand.vmem [shape: f32[1,16], index: 7, kind: input, shape index: {}]
  %s8 = inlined_call_operand.hbm [shape: f32[32,32], index: 8, kind: input, shape index: {}]
  %s9 = inlined_call_operand.vmem [shape: f32[1,32], index: 9, kind: input, shape index: {}]
  %s10 = inlined_call_operand.vmem [shape: f32[1,1,32], index: 10, kind: input, shape index: {}]
  %s11 = inlined_call_operand.hbm [shape: f32[8,32], index: 11, kind: output, shape index: {}]
  %s12 = sld [smem:[#allocation0]]
  $region74: #{tpu_custom_call.1} parent=0
    _
  %s14 = ssub.s32 1, %s12
  %s15 = scalar_select 0, %s14, %s12
  $region1: #{tpu_custom_call.1} parent=0
    #allocation4 [shape = 'u8[32768]{0}', space=vmem, size = 0x8000, scoped, tag = 'input window, operand 0, single buffered']
    #allocation5 [shape = 's32[1]{0}', space=sflag, size = 0x4, scoped, tag = 'scoped memory for tpu_custom_call.1']
    #allocation6 [shape = 's32[1]{0}', space=sflag, size = 0x4, scoped, tag = 'scoped memory for tpu_custom_call.1']
    #allocation7 [shape = 'u8[16384]{0}', space=vmem, size = 0x4000, scoped, tag = 'input window, operand 2, single buffered']
    #allocation8 [shape = 's32[1]{0}', space=sflag, size = 0x4, scoped, tag = 'scoped memory for tpu_custom_call.1']
    #allocation9 [shape = 'u8[8192]{0}', space=vmem, size = 0x2000, scoped, tag = 'input window, operand 3, single buffered']
    #allocation10 [shape = 'u8[8192]{0}', space=vmem, size = 0x2000, scoped, tag = 'input window, operand 4, single buffered']
    #allocation11 [shape = 's32[1]{0}', space=sflag, size = 0x4, scoped, tag = 'scoped memory for tpu_custom_call.1']
    #allocation12 [shape = 'u8[16384]{0}', space=vmem, size = 0x4000, scoped, tag = 'input window, operand 8, single buffered']
    #allocation13 [shape = 'u8[4096]{0}', space=vmem, size = 0x1000, scoped, tag = 'output window, operand 0, single buffered']
    %16 = vsyncpa [#allocation5], 0
    %17 = vsyncpa [#allocation8], 0
    %18 = vsyncpa [#allocation11], 0
    %19 = vsyncpa [#allocation6], 0
    // Predicated region
    $region2: #{tpu_custom_call.1} parent=1 // pred_check
      _
    $region3: #{tpu_custom_call.1} parent=1 // pred_check_branch
      %21 = sbr.rel (0) target = $region5
    $region4: #{tpu_custom_call.1} parent=1 // pred_region
      %23 = vsyncadd [#allocation5], 0
      %s24 = sshll.u32 %s0, 4
      %s25 = int_to_ptr.hbm [resolvable:$true] %s24
      %s26 = sshll.u32 [#allocation4], 4
      %s27 = int_to_ptr.vmem [resolvable:$true] %s26
      %32 = dma.hbm_to_vmem [thread:$0]  %s25, 1024, %s27, [#allocation5], 128, 128, 8
    $region5: #{tpu_custom_call.1} parent=1 // pred_fallthru
      _
    // Predicated region
    $region6: #{tpu_custom_call.1} parent=1 // pred_check
      _
    $region7: #{tpu_custom_call.1} parent=1 // pred_check_branch
      %34 = sbr.rel (0) target = $region9
    $region8: #{tpu_custom_call.1} parent=1 // pred_region
      _
    $region9: #{tpu_custom_call.1} parent=1 // pred_fallthru
      _
    // Predicated region
    $region10: #{tpu_custom_call.1} parent=1 // pred_check
      _
    $region11: #{tpu_custom_call.1} parent=1 // pred_check_branch
      %36 = sbr.rel (0) target = $region13
    $region12: #{tpu_custom_call.1} parent=1 // pred_region
      %38 = vsyncadd [#allocation8], 0
      %s39 = sshll.u32 %s2, 4
      %s40 = int_to_ptr.hbm [resolvable:$true] %s39
      %s41 = sshll.u32 [#allocation7], 4
      %s42 = int_to_ptr.vmem [resolvable:$true] %s41
      %47 = dma.hbm_to_vmem [thread:$0]  %s40, 512, %s42, [#allocation8], 128, 128, 8
    $region13: #{tpu_custom_call.1} parent=1 // pred_fallthru
      _
    // Predicated region
    $region14: #{tpu_custom_call.1} parent=1 // pred_check
      _
    $region15: #{tpu_custom_call.1} parent=1 // pred_check_branch
      %49 = sbr.rel (0) target = $region17
    $region16: #{tpu_custom_call.1} parent=1 // pred_region
      %51 = vsyncadd [#allocation8], 0
      %s52 = sshll.u32 %s3, 4
      %s53 = int_to_ptr.hbm [resolvable:$true] %s52
      %s54 = sshll.u32 [#allocation9], 4
      %s55 = int_to_ptr.vmem [resolvable:$true] %s54
      %60 = dma.hbm_to_vmem [thread:$0]  %s53, 256, %s55, [#allocation8], 128, 128, 8
    $region17: #{tpu_custom_call.1} parent=1 // pred_fallthru
      _
    // Predicated region
    $region18: #{tpu_custom_call.1} parent=1 // pred_check
      _
    $region19: #{tpu_custom_call.1} parent=1 // pred_check_branch
      %62 = sbr.rel (0) target = $region21
    $region20: #{tpu_custom_call.1} parent=1 // pred_region
      %64 = vsyncadd [#allocation11], 0
      %s65 = sshll.u32 %s4, 4
      %s66 = int_to_ptr.hbm [resolvable:$true] %s65
      %s67 = sshll.u32 [#allocation10], 4
      %s68 = int_to_ptr.vmem [resolvable:$true] %s67
      %73 = dma.hbm_to_vmem [thread:$0]  %s66, 256, %s68, [#allocation11], 128, 128, 8
    $region21: #{tpu_custom_call.1} parent=1 // pred_fallthru
      _
    // Predicated region
    $region22: #{tpu_custom_call.1} parent=1 // pred_check
      _
    $region23: #{tpu_custom_call.1} parent=1 // pred_check_branch
      %75 = sbr.rel (0) target = $region25
    $region24: #{tpu_custom_call.1} parent=1 // pred_region
      _
    $region25: #{tpu_custom_call.1} parent=1 // pred_fallthru
      _
    // Predicated region
    $region26: #{tpu_custom_call.1} parent=1 // pred_check
      _
    $region27: #{tpu_custom_call.1} parent=1 // pred_check_branch
      %77 = sbr.rel (0) target = $region29
    $region28: #{tpu_custom_call.1} parent=1 // pred_region
      _
    $region29: #{tpu_custom_call.1} parent=1 // pred_fallthru
      _
    // Predicated region
    $region30: #{tpu_custom_call.1} parent=1 // pred_check
      _
    $region31: #{tpu_custom_call.1} parent=1 // pred_check_branch
      %79 = sbr.rel (0) target = $region33
    $region32: #{tpu_custom_call.1} parent=1 // pred_region
      _
    $region33: #{tpu_custom_call.1} parent=1 // pred_fallthru
      _
    // Predicated region
    $region34: #{tpu_custom_call.1} parent=1 // pred_check
      _
    $region35: #{tpu_custom_call.1} parent=1 // pred_check_branch
      %81 = sbr.rel (0) target = $region37
    $region36: #{tpu_custom_call.1} parent=1 // pred_region
      %83 = vsyncadd [#allocation11], 0
      %s84 = sshll.u32 %s8, 4
      %s85 = int_to_ptr.hbm [resolvable:$true] %s84
      %s86 = sshll.u32 [#allocation12], 4
      %s87 = int_to_ptr.vmem [resolvable:$true] %s86
      %92 = dma.hbm_to_vmem [thread:$0]  %s85, 512, %s87, [#allocation11], 128, 128, 8
    $region37: #{tpu_custom_call.1} parent=1 // pred_fallthru
      _
    // Predicated region
    $region38: #{tpu_custom_call.1} parent=1 // pred_check
      _
    $region39: #{tpu_custom_call.1} parent=1 // pred_check_branch
      %94 = sbr.rel (0) target = $region41
    $region40: #{tpu_custom_call.1} parent=1 // pred_region
      _
    $region41: #{tpu_custom_call.1} parent=1 // pred_fallthru
      _
    // Predicated region
    $region42: #{tpu_custom_call.1} parent=1 // pred_check
      _
    $region43: #{tpu_custom_call.1} parent=1 // pred_check_branch
      %96 = sbr.rel (0) target = $region45
    $region44: #{tpu_custom_call.1} parent=1 // pred_region
      _
    $region45: #{tpu_custom_call.1} parent=1 // pred_fallthru
      _
    // Predicated region
    $region46: #{tpu_custom_call.1} parent=1 // pred_check
      _
    $region47: #{tpu_custom_call.1} parent=1 // pred_check_branch
      %98 = sbr.rel (0) target = $region49
    $region48: #{tpu_custom_call.1} parent=1 // pred_region
      %100 = dma.done [#allocation5], 1024
    $region49: #{tpu_custom_call.1} parent=1 // pred_fallthru
      _
    // Predicated region
    $region50: #{tpu_custom_call.1} parent=1 // pred_check
      _
    $region51: #{tpu_custom_call.1} parent=1 // pred_check_branch
      %102 = sbr.rel (0) target = $region53
    $region52: #{tpu_custom_call.1} parent=1 // pred_region
      %104 = dma.done [#allocation8], 512
    $region53: #{tpu_custom_call.1} parent=1 // pred_fallthru
      _
    // Predicated region
    $region54: #{tpu_custom_call.1} parent=1 // pred_check
      _
    $region55: #{tpu_custom_call.1} parent=1 // pred_check_branch
      %106 = sbr.rel (0) target = $region57
    $region56: #{tpu_custom_call.1} parent=1 // pred_region
      %108 = dma.done [#allocation8], 256
    $region57: #{tpu_custom_call.1} parent=1 // pred_fallthru
      _
    // Predicated region
    $region58: #{tpu_custom_call.1} parent=1 // pred_check
      _
    $region59: #{tpu_custom_call.1} parent=1 // pred_check_branch
      %110 = sbr.rel (0) target = $region61
    $region60: #{tpu_custom_call.1} parent=1 // pred_region
      %112 = dma.done [#allocation11], 256
    $region61: #{tpu_custom_call.1} parent=1 // pred_fallthru
      _
    // Predicated region
    $region62: #{tpu_custom_call.1} parent=1 // pred_check
      _
    $region63: #{tpu_custom_call.1} parent=1 // pred_check_branch
      %114 = sbr.rel (0) target = $region65
    $region64: #{tpu_custom_call.1} parent=1 // pred_region
      %116 = dma.done [#allocation11], 512
    $region65: #{tpu_custom_call.1} parent=1 // pred_fallthru
      _
    %v117 = vld [vmem:[%s1] sm:$0xff]
    %v118 = vld [vmem:[#allocation4] sm:$0xff]
    %v119 = vld [vmem:[#allocation4 + $0x8] sm:$0xff]
    %v120 = vld [vmem:[#allocation4 + $0x10] sm:$0xff]
    %v121 = vld [vmem:[#allocation4 + $0x18] sm:$0xff]
    %v122 = vld [vmem:[#allocation4 + $0x20] sm:$0xff]
    %v123 = vld [vmem:[#allocation4 + $0x28] sm:$0xff]
    %v124 = vld [vmem:[#allocation4 + $0x30] sm:$0xff]
    %v125 = vld [vmem:[#allocation4 + $0x38] sm:$0xff]
    %v126 = vld [vmem:[#allocation7] sm:$0xff]
    %v127 = vld [vmem:[#allocation7 + $0x8] sm:$0xff]
    %v128 = vld [vmem:[#allocation7 + $0x10] sm:$0xff]
    %v129 = vld [vmem:[#allocation7 + $0x18] sm:$0xff]
    %v130 = vld [vmem:[%s5] sm:$0x1]
    %v132 = vperm.slane %v130, 0
    %vm134 = vcmask 261120
    %v136 = vsel %vm134, %v118, 0
    %v139 = vsel %vm134, %v119, 0
    %v142 = vsel %vm134, %v120, 0
    %v145 = vsel %vm134, %v121, 0
    %v148 = vsel %vm134, %v122, 0
    %v151 = vsel %vm134, %v123, 0
    %v154 = vsel %vm134, %v124, 0
    %v157 = vsel %vm134, %v125, 0
    %159 = vmatpush.msra.mxu0 0.0
    %160 = vmatpush.msra.mxu0 0.0
    %161 = vmatpush.msra.mxu0 0.0
    %162 = vmatpush.msra.mxu0 0.0
    %163 = vmatpush.msra.mxu0 0.0
    %164 = vmatpush.msra.mxu0 0.0
    %165 = vmatpush.msra.mxu0 0.0
    %166 = vmatpush.msra.mxu0 0.0
    %167 = vmatpush.msra.mxu0 0.0
    %168 = vmatpush.msra.mxu0 0.0
    %169 = vmatpush.msra.mxu0 0.0
    %170 = vmatpush.msra.mxu0 0.0
    %v171 = vand.u32 %v129, 4294901760
    %172 = vmatpush.msra.mxu0 %v171
    %v173 = vand.u32 %v128, 4294901760
    %174 = vmatpush.msra.mxu0 %v173
    %v175 = vand.u32 %v127, 4294901760
    %176 = vmatpush.msra.mxu0 %v175
    %v177 = vand.u32 %v126, 4294901760
    %178 = vmatpush.msra.mxu0 %v177
    %v179 = vand.u32 %v136, 4294901760
    %v180 = vsub.f32 %v136, %v179
    %v181 = vand.u32 %v180, 4294901760
    %v182 = vsub.f32 %v180, %v181
    %v183 = vand.u32 %v182, 4294901760
    %184 = vmatmul.f32.gmra.mxu0 %v183
    %v185 = vpop.f32.mrf.mxu0
    %v186 = vadd.f32 %v132, %v185
    %v187 = vand.u32 %v139, 4294901760
    %v188 = vsub.f32 %v139, %v187
    %v189 = vand.u32 %v188, 4294901760
    %v190 = vsub.f32 %v188, %v189
    %v191 = vand.u32 %v190, 4294901760
    %192 = vmatmul.f32.gmra.mxu0 %v191
    %v193 = vpop.f32.mrf.mxu0
    %v194 = vadd.f32 %v132, %v193
    %v195 = vand.u32 %v142, 4294901760
    %v196 = vsub.f32 %v142, %v195
    %v197 = vand.u32 %v196, 4294901760
    %v198 = vsub.f32 %v196, %v197
    %v199 = vand.u32 %v198, 4294901760
    %200 = vmatmul.f32.gmra.mxu0 %v199
    %v201 = vpop.f32.mrf.mxu0
    %v202 = vadd.f32 %v132, %v201
    %v203 = vand.u32 %v145, 4294901760
    %v204 = vsub.f32 %v145, %v203
    %v205 = vand.u32 %v204, 4294901760
    %v206 = vsub.f32 %v204, %v205
    %v207 = vand.u32 %v206, 4294901760
    %208 = vmatmul.f32.gmra.mxu0 %v207
    %v209 = vpop.f32.mrf.mxu0
    %v210 = vadd.f32 %v132, %v209
    %v211 = vand.u32 %v148, 4294901760
    %v212 = vsub.f32 %v148, %v211
    %v213 = vand.u32 %v212, 4294901760
    %v214 = vsub.f32 %v212, %v213
    %v215 = vand.u32 %v214, 4294901760
    %216 = vmatmul.f32.gmra.mxu0 %v215
    %v217 = vpop.f32.mrf.mxu0
    %v218 = vadd.f32 %v132, %v217
    %v219 = vand.u32 %v151, 4294901760
    %v220 = vsub.f32 %v151, %v219
    %v221 = vand.u32 %v220, 4294901760
    %v222 = vsub.f32 %v220, %v221
    %v223 = vand.u32 %v222, 4294901760
    %224 = vmatmul.f32.gmra.mxu0 %v223
    %v225 = vpop.f32.mrf.mxu0
    %v226 = vadd.f32 %v132, %v225
    %v227 = vand.u32 %v154, 4294901760
    %v228 = vsub.f32 %v154, %v227
    %v229 = vand.u32 %v228, 4294901760
    %v230 = vsub.f32 %v228, %v229
    %v231 = vand.u32 %v230, 4294901760
    %232 = vmatmul.f32.gmra.mxu0 %v231
    %v233 = vpop.f32.mrf.mxu0
    %v234 = vadd.f32 %v132, %v233
    %v235 = vand.u32 %v157, 4294901760
    %v236 = vsub.f32 %v157, %v235
    %v237 = vand.u32 %v236, 4294901760
    %v238 = vsub.f32 %v236, %v237
    %v239 = vand.u32 %v238, 4294901760
    %240 = vmatmul.f32.gmra.mxu0 %v239
    %v241 = vpop.f32.mrf.mxu0
    %v242 = vadd.f32 %v132, %v241
    %243 = vdwg.mxu0
    %244 = vmatpush.msra.mxu0 0.0
    %245 = vmatpush.msra.mxu0 0.0
    %246 = vmatpush.msra.mxu0 0.0
    %247 = vmatpush.msra.mxu0 0.0
    %248 = vmatpush.msra.mxu0 0.0
    %249 = vmatpush.msra.mxu0 0.0
    %250 = vmatpush.msra.mxu0 0.0
    %251 = vmatpush.msra.mxu0 0.0
    %252 = vmatpush.msra.mxu0 0.0
    %253 = vmatpush.msra.mxu0 0.0
    %254 = vmatpush.msra.mxu0 0.0
    %255 = vmatpush.msra.mxu0 0.0
    %v256 = vand.u32 %v129, 4294901760
    %v257 = vsub.f32 %v129, %v256
    %v258 = vand.u32 %v257, 4294901760
    %v259 = vsub.f32 %v257, %v258
    %v260 = vand.u32 %v259, 4294901760
    %261 = vmatpush.msra.mxu0 %v260
    %v262 = vand.u32 %v128, 4294901760
    %v263 = vsub.f32 %v128, %v262
    %v264 = vand.u32 %v263, 4294901760
    %v265 = vsub.f32 %v263, %v264
    %v266 = vand.u32 %v265, 4294901760
    %267 = vmatpush.msra.mxu0 %v266
    %v268 = vand.u32 %v127, 4294901760
    %v269 = vsub.f32 %v127, %v268
    %v270 = vand.u32 %v269, 4294901760
    %v271 = vsub.f32 %v269, %v270
    %v272 = vand.u32 %v271, 4294901760
    %273 = vmatpush.msra.mxu0 %v272
    %v274 = vand.u32 %v126, 4294901760
    %v275 = vsub.f32 %v126, %v274
    %v276 = vand.u32 %v275, 4294901760
    %v277 = vsub.f32 %v275, %v276
    %v278 = vand.u32 %v277, 4294901760
    %279 = vmatpush.msra.mxu0 %v278
    %v280 = vand.u32 %v136, 4294901760
    %281 = vmatmul.f32.gmra.mxu0 %v280
    %v282 = vpop.f32.mrf.mxu0
    %v283 = vadd.f32 %v186, %v282
    %v284 = vand.u32 %v139, 4294901760
    %285 = vmatmul.f32.gmra.mxu0 %v284
    %v286 = vpop.f32.mrf.mxu0
    %v287 = vadd.f32 %v194, %v286
    %v288 = vand.u32 %v142, 4294901760
    %289 = vmatmul.f32.gmra.mxu0 %v288
    %v290 = vpop.f32.mrf.mxu0
    %v291 = vadd.f32 %v202, %v290
    %v292 = vand.u32 %v145, 4294901760
    %293 = vmatmul.f32.gmra.mxu0 %v292
    %v294 = vpop.f32.mrf.mxu0
    %v295 = vadd.f32 %v210, %v294
    %v296 = vand.u32 %v148, 4294901760
    %297 = vmatmul.f32.gmra.mxu0 %v296
    %v298 = vpop.f32.mrf.mxu0
    %v299 = vadd.f32 %v218, %v298
    %v300 = vand.u32 %v151, 4294901760
    %301 = vmatmul.f32.gmra.mxu0 %v300
    %v302 = vpop.f32.mrf.mxu0
    %v303 = vadd.f32 %v226, %v302
    %v304 = vand.u32 %v154, 4294901760
    %305 = vmatmul.f32.gmra.mxu0 %v304
    %v306 = vpop.f32.mrf.mxu0
    %v307 = vadd.f32 %v234, %v306
    %v308 = vand.u32 %v157, 4294901760
    %309 = vmatmul.f32.gmra.mxu0 %v308
    %v310 = vpop.f32.mrf.mxu0
    %v311 = vadd.f32 %v242, %v310
    %312 = vdwg.mxu0
    %313 = vmatpush.msra.mxu0 0.0
    %314 = vmatpush.msra.mxu0 0.0
    %315 = vmatpush.msra.mxu0 0.0
    %316 = vmatpush.msra.mxu0 0.0
    %317 = vmatpush.msra.mxu0 0.0
    %318 = vmatpush.msra.mxu0 0.0
    %319 = vmatpush.msra.mxu0 0.0
    %320 = vmatpush.msra.mxu0 0.0
    %321 = vmatpush.msra.mxu0 0.0
    %322 = vmatpush.msra.mxu0 0.0
    %323 = vmatpush.msra.mxu0 0.0
    %324 = vmatpush.msra.mxu0 0.0
    %v325 = vand.u32 %v129, 4294901760
    %v326 = vsub.f32 %v129, %v325
    %327 = vmatpush.msra.mxu0 %v326
    %v328 = vand.u32 %v128, 4294901760
    %v329 = vsub.f32 %v128, %v328
    %330 = vmatpush.msra.mxu0 %v329
    %v331 = vand.u32 %v127, 4294901760
    %v332 = vsub.f32 %v127, %v331
    %333 = vmatpush.msra.mxu0 %v332
    %v334 = vand.u32 %v126, 4294901760
    %v335 = vsub.f32 %v126, %v334
    %336 = vmatpush.msra.mxu0 %v335
    %v337 = vand.u32 %v136, 4294901760
    %v338 = vsub.f32 %v136, %v337
    %339 = vmatmul.f32.gmra.mxu0 %v338
    %v340 = vpop.f32.mrf.mxu0
    %v341 = vadd.f32 %v283, %v340
    %v342 = vand.u32 %v139, 4294901760
    %v343 = vsub.f32 %v139, %v342
    %344 = vmatmul.f32.gmra.mxu0 %v343
    %v345 = vpop.f32.mrf.mxu0
    %v346 = vadd.f32 %v287, %v345
    %v347 = vand.u32 %v142, 4294901760
    %v348 = vsub.f32 %v142, %v347
    %349 = vmatmul.f32.gmra.mxu0 %v348
    %v350 = vpop.f32.mrf.mxu0
    %v351 = vadd.f32 %v291, %v350
    %v352 = vand.u32 %v145, 4294901760
    %v353 = vsub.f32 %v145, %v352
    %354 = vmatmul.f32.gmra.mxu0 %v353
    %v355 = vpop.f32.mrf.mxu0
    %v356 = vadd.f32 %v295, %v355
    %v357 = vand.u32 %v148, 4294901760
    %v358 = vsub.f32 %v148, %v357
    %359 = vmatmul.f32.gmra.mxu0 %v358
    %v360 = vpop.f32.mrf.mxu0
    %v361 = vadd.f32 %v299, %v360
    %v362 = vand.u32 %v151, 4294901760
    %v363 = vsub.f32 %v151, %v362
    %364 = vmatmul.f32.gmra.mxu0 %v363
    %v365 = vpop.f32.mrf.mxu0
    %v366 = vadd.f32 %v303, %v365
    %v367 = vand.u32 %v154, 4294901760
    %v368 = vsub.f32 %v154, %v367
    %369 = vmatmul.f32.gmra.mxu0 %v368
    %v370 = vpop.f32.mrf.mxu0
    %v371 = vadd.f32 %v307, %v370
    %v372 = vand.u32 %v157, 4294901760
    %v373 = vsub.f32 %v157, %v372
    %374 = vmatmul.f32.gmra.mxu0 %v373
    %v375 = vpop.f32.mrf.mxu0
    %v376 = vadd.f32 %v311, %v375
    %377 = vdwg.mxu0
    %378 = vmatpush.msra.mxu0 0.0
    %379 = vmatpush.msra.mxu0 0.0
    %380 = vmatpush.msra.mxu0 0.0
    %381 = vmatpush.msra.mxu0 0.0
    %382 = vmatpush.msra.mxu0 0.0
    %383 = vmatpush.msra.mxu0 0.0
    %384 = vmatpush.msra.mxu0 0.0
    %385 = vmatpush.msra.mxu0 0.0
    %386 = vmatpush.msra.mxu0 0.0
    %387 = vmatpush.msra.mxu0 0.0
    %388 = vmatpush.msra.mxu0 0.0
    %389 = vmatpush.msra.mxu0 0.0
    %v390 = vand.u32 %v129, 4294901760
    %391 = vmatpush.msra.mxu0 %v390
    %v392 = vand.u32 %v128, 4294901760
    %393 = vmatpush.msra.mxu0 %v392
    %v394 = vand.u32 %v127, 4294901760
    %395 = vmatpush.msra.mxu0 %v394
    %v396 = vand.u32 %v126, 4294901760
    %397 = vmatpush.msra.mxu0 %v396
    %v398 = vand.u32 %v136, 4294901760
    %v399 = vsub.f32 %v136, %v398
    %v400 = vand.u32 %v399, 4294901760
    %401 = vmatmul.f32.gmra.mxu0 %v400
    %v402 = vpop.f32.mrf.mxu0
    %v403 = vadd.f32 %v341, %v402
    %v404 = vand.u32 %v139, 4294901760
    %v405 = vsub.f32 %v139, %v404
    %v406 = vand.u32 %v405, 4294901760
    %407 = vmatmul.f32.gmra.mxu0 %v406
    %v408 = vpop.f32.mrf.mxu0
    %v409 = vadd.f32 %v346, %v408
    %v410 = vand.u32 %v142, 4294901760
    %v411 = vsub.f32 %v142, %v410
    %v412 = vand.u32 %v411, 4294901760
    %413 = vmatmul.f32.gmra.mxu0 %v412
    %v414 = vpop.f32.mrf.mxu0
    %v415 = vadd.f32 %v351, %v414
    %v416 = vand.u32 %v145, 4294901760
    %v417 = vsub.f32 %v145, %v416
    %v418 = vand.u32 %v417, 4294901760
    %419 = vmatmul.f32.gmra.mxu0 %v418
    %v420 = vpop.f32.mrf.mxu0
    %v421 = vadd.f32 %v356, %v420
    %v422 = vand.u32 %v148, 4294901760
    %v423 = vsub.f32 %v148, %v422
    %v424 = vand.u32 %v423, 4294901760
    %425 = vmatmul.f32.gmra.mxu0 %v424
    %v426 = vpop.f32.mrf.mxu0
    %v427 = vadd.f32 %v361, %v426
    %v428 = vand.u32 %v151, 4294901760
    %v429 = vsub.f32 %v151, %v428
    %v430 = vand.u32 %v429, 4294901760
    %431 = vmatmul.f32.gmra.mxu0 %v430
    %v432 = vpop.f32.mrf.mxu0
    %v433 = vadd.f32 %v366, %v432
    %v434 = vand.u32 %v154, 4294901760
    %v435 = vsub.f32 %v154, %v434
    %v436 = vand.u32 %v435, 4294901760
    %437 = vmatmul.f32.gmra.mxu0 %v436
    %v438 = vpop.f32.mrf.mxu0
    %v439 = vadd.f32 %v371, %v438
    %v440 = vand.u32 %v157, 4294901760
    %v441 = vsub.f32 %v157, %v440
    %v442 = vand.u32 %v441, 4294901760
    %443 = vmatmul.f32.gmra.mxu0 %v442
    %v444 = vpop.f32.mrf.mxu0
    %v445 = vadd.f32 %v376, %v444
    %446 = vdwg.mxu0
    %447 = vmatpush.msra.mxu0 0.0
    %448 = vmatpush.msra.mxu0 0.0
    %449 = vmatpush.msra.mxu0 0.0
    %450 = vmatpush.msra.mxu0 0.0
    %451 = vmatpush.msra.mxu0 0.0
    %452 = vmatpush.msra.mxu0 0.0
    %453 = vmatpush.msra.mxu0 0.0
    %454 = vmatpush.msra.mxu0 0.0
    %455 = vmatpush.msra.mxu0 0.0
    %456 = vmatpush.msra.mxu0 0.0
    %457 = vmatpush.msra.mxu0 0.0
    %458 = vmatpush.msra.mxu0 0.0
    %v459 = vand.u32 %v129, 4294901760
    %v460 = vsub.f32 %v129, %v459
    %v461 = vand.u32 %v460, 4294901760
    %462 = vmatpush.msra.mxu0 %v461
    %v463 = vand.u32 %v128, 4294901760
    %v464 = vsub.f32 %v128, %v463
    %v465 = vand.u32 %v464, 4294901760
    %466 = vmatpush.msra.mxu0 %v465
    %v467 = vand.u32 %v127, 4294901760
    %v468 = vsub.f32 %v127, %v467
    %v469 = vand.u32 %v468, 4294901760
    %470 = vmatpush.msra.mxu0 %v469
    %v471 = vand.u32 %v126, 4294901760
    %v472 = vsub.f32 %v126, %v471
    %v473 = vand.u32 %v472, 4294901760
    %474 = vmatpush.msra.mxu0 %v473
    %v475 = vand.u32 %v136, 4294901760
    %476 = vmatmul.f32.gmra.mxu0 %v475
    %v477 = vpop.f32.mrf.mxu0
    %v478 = vadd.f32 %v403, %v477
    %v479 = vand.u32 %v139, 4294901760
    %480 = vmatmul.f32.gmra.mxu0 %v479
    %v481 = vpop.f32.mrf.mxu0
    %v482 = vadd.f32 %v409, %v481
    %v483 = vand.u32 %v142, 4294901760
    %484 = vmatmul.f32.gmra.mxu0 %v483
    %v485 = vpop.f32.mrf.mxu0
    %v486 = vadd.f32 %v415, %v485
    %v487 = vand.u32 %v145, 4294901760
    %488 = vmatmul.f32.gmra.mxu0 %v487
    %v489 = vpop.f32.mrf.mxu0
    %v490 = vadd.f32 %v421, %v489
    %v491 = vand.u32 %v148, 4294901760
    %492 = vmatmul.f32.gmra.mxu0 %v491
    %v493 = vpop.f32.mrf.mxu0
    %v494 = vadd.f32 %v427, %v493
    %v495 = vand.u32 %v151, 4294901760
    %496 = vmatmul.f32.gmra.mxu0 %v495
    %v497 = vpop.f32.mrf.mxu0
    %v498 = vadd.f32 %v433, %v497
    %v499 = vand.u32 %v154, 4294901760
    %500 = vmatmul.f32.gmra.mxu0 %v499
    %v501 = vpop.f32.mrf.mxu0
    %v502 = vadd.f32 %v439, %v501
    %v503 = vand.u32 %v157, 4294901760
    %504 = vmatmul.f32.gmra.mxu0 %v503
    %v505 = vpop.f32.mrf.mxu0
    %v506 = vadd.f32 %v445, %v505
    %507 = vdwg.mxu0
    %508 = vmatpush.msra.mxu0 0.0
    %509 = vmatpush.msra.mxu0 0.0
    %510 = vmatpush.msra.mxu0 0.0
    %511 = vmatpush.msra.mxu0 0.0
    %512 = vmatpush.msra.mxu0 0.0
    %513 = vmatpush.msra.mxu0 0.0
    %514 = vmatpush.msra.mxu0 0.0
    %515 = vmatpush.msra.mxu0 0.0
    %516 = vmatpush.msra.mxu0 0.0
    %517 = vmatpush.msra.mxu0 0.0
    %518 = vmatpush.msra.mxu0 0.0
    %519 = vmatpush.msra.mxu0 0.0
    %v520 = vand.u32 %v129, 4294901760
    %521 = vmatpush.msra.mxu0 %v520
    %v522 = vand.u32 %v128, 4294901760
    %523 = vmatpush.msra.mxu0 %v522
    %v524 = vand.u32 %v127, 4294901760
    %525 = vmatpush.msra.mxu0 %v524
    %v526 = vand.u32 %v126, 4294901760
    %527 = vmatpush.msra.mxu0 %v526
    %v528 = vand.u32 %v136, 4294901760
    %529 = vmatmul.f32.gmra.mxu0 %v528
    %v530 = vpop.f32.mrf.mxu0
    %v531 = vadd.f32 %v478, %v530
    %v532 = vand.u32 %v139, 4294901760
    %533 = vmatmul.f32.gmra.mxu0 %v532
    %v534 = vpop.f32.mrf.mxu0
    %v535 = vadd.f32 %v482, %v534
    %v536 = vand.u32 %v142, 4294901760
    %537 = vmatmul.f32.gmra.mxu0 %v536
    %v538 = vpop.f32.mrf.mxu0
    %v539 = vadd.f32 %v486, %v538
    %v540 = vand.u32 %v145, 4294901760
    %541 = vmatmul.f32.gmra.mxu0 %v540
    %v542 = vpop.f32.mrf.mxu0
    %v543 = vadd.f32 %v490, %v542
    %v544 = vand.u32 %v148, 4294901760
    %545 = vmatmul.f32.gmra.mxu0 %v544
    %v546 = vpop.f32.mrf.mxu0
    %v547 = vadd.f32 %v494, %v546
    %v548 = vand.u32 %v151, 4294901760
    %549 = vmatmul.f32.gmra.mxu0 %v548
    %v550 = vpop.f32.mrf.mxu0
    %v551 = vadd.f32 %v498, %v550
    %v552 = vand.u32 %v154, 4294901760
    %553 = vmatmul.f32.gmra.mxu0 %v552
    %v554 = vpop.f32.mrf.mxu0
    %v555 = vadd.f32 %v502, %v554
    %v556 = vand.u32 %v157, 4294901760
    %557 = vmatmul.f32.gmra.mxu0 %v556
    %v558 = vpop.f32.mrf.mxu0
    %v559 = vadd.f32 %v506, %v558
    %560 = vdwg.mxu0
    %vm561 = vcmask 785408
    %562 = vst.msk [vmem:[#allocation2] sm:$0xff] %vm561, %v531
    %563 = vst.msk [vmem:[#allocation2 + $0x8] sm:$0xff] %vm561, %v535
    %564 = vst.msk [vmem:[#allocation2 + $0x10] sm:$0xff] %vm561, %v539
    %565 = vst.msk [vmem:[#allocation2 + $0x18] sm:$0xff] %vm561, %v543
    %566 = vst.msk [vmem:[#allocation2 + $0x20] sm:$0xff] %vm561, %v547
    %567 = vst.msk [vmem:[#allocation2 + $0x28] sm:$0xff] %vm561, %v551
    %568 = vst.msk [vmem:[#allocation2 + $0x30] sm:$0xff] %vm561, %v555
    %569 = vst.msk [vmem:[#allocation2 + $0x38] sm:$0xff] %vm561, %v559
    %v570 = vld [vmem:[#allocation9] sm:$0xff]
    %v571 = vld [vmem:[#allocation9 + $0x8] sm:$0xff]
    %v572 = vld [vmem:[#allocation10] sm:$0xff]
    %v573 = vld [vmem:[#allocation10 + $0x8] sm:$0xff]
    %v574 = vld [vmem:[%s6] sm:$0x1]
    %v575 = vld [vmem:[%s7] sm:$0x1]
    %v576 = vld [vmem:[#allocation2] sm:$0xff]
    %s577 = scalar_lea.vmem [#allocation2], 56
    %v578 = vld [vmem:[%s577] sm:$0xff]
    %vm579 = vcmask 130048
    %v581 = vsel %vm579, 0.0, 0
    %583 = vmatpush.msra.mxu0 0.0
    %584 = vmatpush.msra.mxu0 0.0
    %585 = vmatpush.msra.mxu0 0.0
    %586 = vmatpush.msra.mxu0 0.0
    %587 = vmatpush.msra.mxu0 0.0
    %588 = vmatpush.msra.mxu0 0.0
    %589 = vmatpush.msra.mxu0 0.0
    %590 = vmatpush.msra.mxu0 0.0
    %591 = vmatpush.msra.mxu0 0.0
    %592 = vmatpush.msra.mxu0 0.0
    %593 = vmatpush.msra.mxu0 0.0
    %594 = vmatpush.msra.mxu0 0.0
    %595 = vmatpush.msra.mxu0 0.0
    %596 = vmatpush.msra.mxu0 0.0
    %v597 = vand.u32 %v571, 4294901760
    %598 = vmatpush.msra.mxu0 %v597
    %v599 = vand.u32 %v570, 4294901760
    %600 = vmatpush.msra.mxu0 %v599
    %v601 = vand.u32 %v581, 4294901760
    %v602 = vsub.f32 %v581, %v601
    %v603 = vand.u32 %v602, 4294901760
    %v604 = vsub.f32 %v602, %v603
    %v605 = vand.u32 %v604, 4294901760
    %606 = vmatmul.f32.gmra.mxu0 %v605
    %v607 = vpop.f32.mrf.mxu0
    %v608 = vadd.f32 0.0, %v607
    %609 = vdwg.mxu0
    %610 = vmatpush.msra.mxu0 0.0
    %611 = vmatpush.msra.mxu0 0.0
    %612 = vmatpush.msra.mxu0 0.0
    %613 = vmatpush.msra.mxu0 0.0
    %614 = vmatpush.msra.mxu0 0.0
    %615 = vmatpush.msra.mxu0 0.0
    %616 = vmatpush.msra.mxu0 0.0
    %617 = vmatpush.msra.mxu0 0.0
    %618 = vmatpush.msra.mxu0 0.0
    %619 = vmatpush.msra.mxu0 0.0
    %620 = vmatpush.msra.mxu0 0.0
    %621 = vmatpush.msra.mxu0 0.0
    %622 = vmatpush.msra.mxu0 0.0
    %623 = vmatpush.msra.mxu0 0.0
    %v624 = vand.u32 %v571, 4294901760
    %v625 = vsub.f32 %v571, %v624
    %v626 = vand.u32 %v625, 4294901760
    %v627 = vsub.f32 %v625, %v626
    %v628 = vand.u32 %v627, 4294901760
    %629 = vmatpush.msra.mxu0 %v628
    %v630 = vand.u32 %v570, 4294901760
    %v631 = vsub.f32 %v570, %v630
    %v632 = vand.u32 %v631, 4294901760
    %v633 = vsub.f32 %v631, %v632
    %v634 = vand.u32 %v633, 4294901760
    %635 = vmatpush.msra.mxu0 %v634
    %v636 = vand.u32 %v581, 4294901760
    %637 = vmatmul.f32.gmra.mxu0 %v636
    %v638 = vpop.f32.mrf.mxu0
    %v639 = vadd.f32 %v608, %v638
    %640 = vdwg.mxu0
    %641 = vmatpush.msra.mxu0 0.0
    %642 = vmatpush.msra.mxu0 0.0
    %643 = vmatpush.msra.mxu0 0.0
    %644 = vmatpush.msra.mxu0 0.0
    %645 = vmatpush.msra.mxu0 0.0
    %646 = vmatpush.msra.mxu0 0.0
    %647 = vmatpush.msra.mxu0 0.0
    %648 = vmatpush.msra.mxu0 0.0
    %649 = vmatpush.msra.mxu0 0.0
    %650 = vmatpush.msra.mxu0 0.0
    %651 = vmatpush.msra.mxu0 0.0
    %652 = vmatpush.msra.mxu0 0.0
    %653 = vmatpush.msra.mxu0 0.0
    %654 = vmatpush.msra.mxu0 0.0
    %v655 = vand.u32 %v571, 4294901760
    %v656 = vsub.f32 %v571, %v655
    %657 = vmatpush.msra.mxu0 %v656
    %v658 = vand.u32 %v570, 4294901760
    %v659 = vsub.f32 %v570, %v658
    %660 = vmatpush.msra.mxu0 %v659
    %v661 = vand.u32 %v581, 4294901760
    %v662 = vsub.f32 %v581, %v661
    %663 = vmatmul.f32.gmra.mxu0 %v662
    %v664 = vpop.f32.mrf.mxu0
    %v665 = vadd.f32 %v639, %v664
    %666 = vdwg.mxu0
    %667 = vmatpush.msra.mxu0 0.0
    %668 = vmatpush.msra.mxu0 0.0
    %669 = vmatpush.msra.mxu0 0.0
    %670 = vmatpush.msra.mxu0 0.0
    %671 = vmatpush.msra.mxu0 0.0
    %672 = vmatpush.msra.mxu0 0.0
    %673 = vmatpush.msra.mxu0 0.0
    %674 = vmatpush.msra.mxu0 0.0
    %675 = vmatpush.msra.mxu0 0.0
    %676 = vmatpush.msra.mxu0 0.0
    %677 = vmatpush.msra.mxu0 0.0
    %678 = vmatpush.msra.mxu0 0.0
    %679 = vmatpush.msra.mxu0 0.0
    %680 = vmatpush.msra.mxu0 0.0
    %v681 = vand.u32 %v571, 4294901760
    %682 = vmatpush.msra.mxu0 %v681
    %v683 = vand.u32 %v570, 4294901760
    %684 = vmatpush.msra.mxu0 %v683
    %v685 = vand.u32 %v581, 4294901760
    %v686 = vsub.f32 %v581, %v685
    %v687 = vand.u32 %v686, 4294901760
    %688 = vmatmul.f32.gmra.mxu0 %v687
    %v689 = vpop.f32.mrf.mxu0
    %v690 = vadd.f32 %v665, %v689
    %691 = vdwg.mxu0
    %692 = vmatpush.msra.mxu0 0.0
    %693 = vmatpush.msra.mxu0 0.0
    %694 = vmatpush.msra.mxu0 0.0
    %695 = vmatpush.msra.mxu0 0.0
    %696 = vmatpush.msra.mxu0 0.0
    %697 = vmatpush.msra.mxu0 0.0
    %698 = vmatpush.msra.mxu0 0.0
    %699 = vmatpush.msra.mxu0 0.0
    %700 = vmatpush.msra.mxu0 0.0
    %701 = vmatpush.msra.mxu0 0.0
    %702 = vmatpush.msra.mxu0 0.0
    %703 = vmatpush.msra.mxu0 0.0
    %704 = vmatpush.msra.mxu0 0.0
    %705 = vmatpush.msra.mxu0 0.0
    %v706 = vand.u32 %v571, 4294901760
    %v707 = vsub.f32 %v571, %v706
    %v708 = vand.u32 %v707, 4294901760
    %709 = vmatpush.msra.mxu0 %v708
    %v710 = vand.u32 %v570, 4294901760
    %v711 = vsub.f32 %v570, %v710
    %v712 = vand.u32 %v711, 4294901760
    %713 = vmatpush.msra.mxu0 %v712
    %v714 = vand.u32 %v581, 4294901760
    %715 = vmatmul.f32.gmra.mxu0 %v714
    %v716 = vpop.f32.mrf.mxu0
    %v717 = vadd.f32 %v690, %v716
    %718 = vdwg.mxu0
    %719 = vmatpush.msra.mxu0 0.0
    %720 = vmatpush.msra.mxu0 0.0
    %721 = vmatpush.msra.mxu0 0.0
    %722 = vmatpush.msra.mxu0 0.0
    %723 = vmatpush.msra.mxu0 0.0
    %724 = vmatpush.msra.mxu0 0.0
    %725 = vmatpush.msra.mxu0 0.0
    %726 = vmatpush.msra.mxu0 0.0
    %727 = vmatpush.msra.mxu0 0.0
    %728 = vmatpush.msra.mxu0 0.0
    %729 = vmatpush.msra.mxu0 0.0
    %730 = vmatpush.msra.mxu0 0.0
    %731 = vmatpush.msra.mxu0 0.0
    %732 = vmatpush.msra.mxu0 0.0
    %v733 = vand.u32 %v571, 4294901760
    %734 = vmatpush.msra.mxu0 %v733
    %v735 = vand.u32 %v570, 4294901760
    %736 = vmatpush.msra.mxu0 %v735
    %v737 = vand.u32 %v581, 4294901760
    %738 = vmatmul.f32.gmra.mxu0 %v737
    %v739 = vpop.f32.mrf.mxu0
    %v740 = vadd.f32 %v717, %v739
    %741 = vdwg.mxu0
    %v742 = vadd.f32 %v576, %v740
    %v743 = vxor.u32 %v742, 2147483648
    %v744 = vmul.f32 %v743, 1.442695
    %v745 = vpow.pop %v744
    %v746 = vadd.f32 %v745, 1.0
    %v747 = vrcp.pop %v746
    %v748 = vmul.f32 %v746, %v747
    %v749 = vsub.f32 1.0, %v748
    %v750 = vmul.f32 %v747, %v749
    %v751 = vadd.f32 %v747, %v750
    %vm752 = vweird.f32 %v746
    %vm753 = vweird.f32 %v747
    %vm754 = vmor %vm752, %vm753
    %v755 = vsel %vm754, %v747, %v751
    %v756 = vand.u32 2147483647, %v746
    %vm757 = vcmp.eq.f32.partialorder %v756, 8.507059e+37
    %v758 = vand.u32 %v746, 2147483648
    %v759 = vor.u32 1.1754944e-38, %v758
    %v760 = vsel %vm757, %v759, %v755
    %v761 = vmul.f32 1.0, %v760
    %v763 = vperm.slane %v574, 0
    %764 = vrot.lane.b32.xlu0 %v763, 32
    %v765 = vpop.permute.xlu0 %764
    %v767 = vadd.f32 %v740, %v765
    %769 = vrot.lane.b32.xlu0 %v767, 96
    %v770 = vpop.permute.xlu0 %769
    %v772 = vmul.f32 %v761, %v770
    %774 = vrot.lane.b32.xlu0 %v772, 32
    %v775 = vpop.permute.xlu0 %774
    %v777 = vadd.f32 %v576, %v775
    %v778 = vtanh.pop %v777
    %v779 = vsub.f32 0.0, %v778
    %781 = vrot.lane.b32.xlu0 %v779, 112
    %v782 = vpop.permute.xlu0 %781
    %v784 = vmul.f32 %v761, %v782
    %786 = vrot.lane.b32.xlu0 %v784, 16
    %v787 = vpop.permute.xlu0 %786
    %v789 = vadd.f32 %v778, %v787
    %vm790 = vcmp.gt.s32.totalorder %v117, 0
    %v791 = vsel %vm790, 1, 0
    %792 = vset.pattern.permute.xlu0 0
    %793 = vperm.xlu0 %792, %v791
    %v794 = vpop.permute.xlu0 %793
    %vm795 = vcmp.eq.s32.totalorder %v794, 1
    %v796 = vsel %vm795, %v789, 0.0
    %798 = vrot.lane.b32.xlu0 %v796, 96
    %v799 = vpop.permute.xlu0 %798
    %801 = vst.msk [vmem:[#allocation3] sm:$0xff] %vm579, %v799
    %802 = vmatpush.msra.mxu0 0.0
    %803 = vmatpush.msra.mxu0 0.0
    %804 = vmatpush.msra.mxu0 0.0
    %805 = vmatpush.msra.mxu0 0.0
    %806 = vmatpush.msra.mxu0 0.0
    %807 = vmatpush.msra.mxu0 0.0
    %808 = vmatpush.msra.mxu0 0.0
    %809 = vmatpush.msra.mxu0 0.0
    %810 = vmatpush.msra.mxu0 0.0
    %811 = vmatpush.msra.mxu0 0.0
    %812 = vmatpush.msra.mxu0 0.0
    %813 = vmatpush.msra.mxu0 0.0
    %814 = vmatpush.msra.mxu0 0.0
    %815 = vmatpush.msra.mxu0 0.0
    %v816 = vand.u32 %v573, 4294901760
    %817 = vmatpush.msra.mxu0 %v816
    %v818 = vand.u32 %v572, 4294901760
    %819 = vmatpush.msra.mxu0 %v818
    %v820 = vand.u32 %v581, 4294901760
    %v821 = vsub.f32 %v581, %v820
    %v822 = vand.u32 %v821, 4294901760
    %v823 = vsub.f32 %v821, %v822
    %v824 = vand.u32 %v823, 4294901760
    %825 = vmatmul.f32.gmra.mxu0 %v824
    %v826 = vpop.f32.mrf.mxu0
    %v827 = vadd.f32 0.0, %v826
    %828 = vdwg.mxu0
    %829 = vmatpush.msra.mxu0 0.0
    %830 = vmatpush.msra.mxu0 0.0
    %831 = vmatpush.msra.mxu0 0.0
    %832 = vmatpush.msra.mxu0 0.0
    %833 = vmatpush.msra.mxu0 0.0
    %834 = vmatpush.msra.mxu0 0.0
    %835 = vmatpush.msra.mxu0 0.0
    %836 = vmatpush.msra.mxu0 0.0
    %837 = vmatpush.msra.mxu0 0.0
    %838 = vmatpush.msra.mxu0 0.0
    %839 = vmatpush.msra.mxu0 0.0
    %840 = vmatpush.msra.mxu0 0.0
    %841 = vmatpush.msra.mxu0 0.0
    %842 = vmatpush.msra.mxu0 0.0
    %v843 = vand.u32 %v573, 4294901760
    %v844 = vsub.f32 %v573, %v843
    %v845 = vand.u32 %v844, 4294901760
    %v846 = vsub.f32 %v844, %v845
    %v847 = vand.u32 %v846, 4294901760
    %848 = vmatpush.msra.mxu0 %v847
    %v849 = vand.u32 %v572, 4294901760
    %v850 = vsub.f32 %v572, %v849
    %v851 = vand.u32 %v850, 4294901760
    %v852 = vsub.f32 %v850, %v851
    %v853 = vand.u32 %v852, 4294901760
    %854 = vmatpush.msra.mxu0 %v853
    %v855 = vand.u32 %v581, 4294901760
    %856 = vmatmul.f32.gmra.mxu0 %v855
    %v857 = vpop.f32.mrf.mxu0
    %v858 = vadd.f32 %v827, %v857
    %859 = vdwg.mxu0
    %860 = vmatpush.msra.mxu0 0.0
    %861 = vmatpush.msra.mxu0 0.0
    %862 = vmatpush.msra.mxu0 0.0
    %863 = vmatpush.msra.mxu0 0.0
    %864 = vmatpush.msra.mxu0 0.0
    %865 = vmatpush.msra.mxu0 0.0
    %866 = vmatpush.msra.mxu0 0.0
    %867 = vmatpush.msra.mxu0 0.0
    %868 = vmatpush.msra.mxu0 0.0
    %869 = vmatpush.msra.mxu0 0.0
    %870 = vmatpush.msra.mxu0 0.0
    %871 = vmatpush.msra.mxu0 0.0
    %872 = vmatpush.msra.mxu0 0.0
    %873 = vmatpush.msra.mxu0 0.0
    %v874 = vand.u32 %v573, 4294901760
    %v875 = vsub.f32 %v573, %v874
    %876 = vmatpush.msra.mxu0 %v875
    %v877 = vand.u32 %v572, 4294901760
    %v878 = vsub.f32 %v572, %v877
    %879 = vmatpush.msra.mxu0 %v878
    %v880 = vand.u32 %v581, 4294901760
    %v881 = vsub.f32 %v581, %v880
    %882 = vmatmul.f32.gmra.mxu0 %v881
    %v883 = vpop.f32.mrf.mxu0
    %v884 = vadd.f32 %v858, %v883
    %885 = vdwg.mxu0
    %886 = vmatpush.msra.mxu0 0.0
    %887 = vmatpush.msra.mxu0 0.0
    %888 = vmatpush.msra.mxu0 0.0
    %889 = vmatpush.msra.mxu0 0.0
    %890 = vmatpush.msra.mxu0 0.0
    %891 = vmatpush.msra.mxu0 0.0
    %892 = vmatpush.msra.mxu0 0.0
    %893 = vmatpush.msra.mxu0 0.0
    %894 = vmatpush.msra.mxu0 0.0
    %895 = vmatpush.msra.mxu0 0.0
    %896 = vmatpush.msra.mxu0 0.0
    %897 = vmatpush.msra.mxu0 0.0
    %898 = vmatpush.msra.mxu0 0.0
    %899 = vmatpush.msra.mxu0 0.0
    %v900 = vand.u32 %v573, 4294901760
    %901 = vmatpush.msra.mxu0 %v900
    %v902 = vand.u32 %v572, 4294901760
    %903 = vmatpush.msra.mxu0 %v902
    %v904 = vand.u32 %v581, 4294901760
    %v905 = vsub.f32 %v581, %v904
    %v906 = vand.u32 %v905, 4294901760
    %907 = vmatmul.f32.gmra.mxu0 %v906
    %v908 = vpop.f32.mrf.mxu0
    %v909 = vadd.f32 %v884, %v908
    %910 = vdwg.mxu0
    %911 = vmatpush.msra.mxu0 0.0
    %912 = vmatpush.msra.mxu0 0.0
    %913 = vmatpush.msra.mxu0 0.0
    %914 = vmatpush.msra.mxu0 0.0
    %915 = vmatpush.msra.mxu0 0.0
    %916 = vmatpush.msra.mxu0 0.0
    %917 = vmatpush.msra.mxu0 0.0
    %918 = vmatpush.msra.mxu0 0.0
    %919 = vmatpush.msra.mxu0 0.0
    %920 = vmatpush.msra.mxu0 0.0
    %921 = vmatpush.msra.mxu0 0.0
    %922 = vmatpush.msra.mxu0 0.0
    %923 = vmatpush.msra.mxu0 0.0
    %924 = vmatpush.msra.mxu0 0.0
    %v925 = vand.u32 %v573, 4294901760
    %v926 = vsub.f32 %v573, %v925
    %v927 = vand.u32 %v926, 4294901760
    %928 = vmatpush.msra.mxu0 %v927
    %v929 = vand.u32 %v572, 4294901760
    %v930 = vsub.f32 %v572, %v929
    %v931 = vand.u32 %v930, 4294901760
    %932 = vmatpush.msra.mxu0 %v931
    %v933 = vand.u32 %v581, 4294901760
    %934 = vmatmul.f32.gmra.mxu0 %v933
    %v935 = vpop.f32.mrf.mxu0
    %v936 = vadd.f32 %v909, %v935
    %937 = vdwg.mxu0
    %938 = vmatpush.msra.mxu0 0.0
    %939 = vmatpush.msra.mxu0 0.0
    %940 = vmatpush.msra.mxu0 0.0
    %941 = vmatpush.msra.mxu0 0.0
    %942 = vmatpush.msra.mxu0 0.0
    %943 = vmatpush.msra.mxu0 0.0
    %944 = vmatpush.msra.mxu0 0.0
    %945 = vmatpush.msra.mxu0 0.0
    %946 = vmatpush.msra.mxu0 0.0
    %947 = vmatpush.msra.mxu0 0.0
    %948 = vmatpush.msra.mxu0 0.0
    %949 = vmatpush.msra.mxu0 0.0
    %950 = vmatpush.msra.mxu0 0.0
    %951 = vmatpush.msra.mxu0 0.0
    %v952 = vand.u32 %v573, 4294901760
    %953 = vmatpush.msra.mxu0 %v952
    %v954 = vand.u32 %v572, 4294901760
    %955 = vmatpush.msra.mxu0 %v954
    %v956 = vand.u32 %v581, 4294901760
    %957 = vmatmul.f32.gmra.mxu0 %v956
    %v958 = vpop.f32.mrf.mxu0
    %v959 = vadd.f32 %v936, %v958
    %960 = vdwg.mxu0
    %962 = vrot.lane.b32.xlu0 %v959, 48
    %v963 = vpop.permute.xlu0 %962
    %v965 = vadd.f32 %v578, %v963
    %v966 = vxor.u32 %v965, 2147483648
    %v967 = vmul.f32 %v966, 1.442695
    %v968 = vpow.pop %v967
    %v969 = vadd.f32 %v968, 1.0
    %v970 = vrcp.pop %v969
    %v971 = vmul.f32 %v969, %v970
    %v972 = vsub.f32 1.0, %v971
    %v973 = vmul.f32 %v970, %v972
    %v974 = vadd.f32 %v970, %v973
    %vm975 = vweird.f32 %v969
    %vm976 = vweird.f32 %v970
    %vm977 = vmor %vm975, %vm976
    %v978 = vsel %vm977, %v970, %v974
    %v979 = vand.u32 2147483647, %v969
    %vm980 = vcmp.eq.f32.partialorder %v979, 8.507059e+37
    %v981 = vand.u32 %v969, 2147483648
    %v982 = vor.u32 1.1754944e-38, %v981
    %v983 = vsel %vm980, %v982, %v978
    %v984 = vmul.f32 1.0, %v983
    %v986 = vperm.slane %v575, 0
    %987 = vrot.lane.b32.xlu0 %v986, 32
    %v988 = vpop.permute.xlu0 %987
    %v990 = vadd.f32 %v959, %v988
    %992 = vrot.lane.b32.xlu0 %v990, 16
    %v993 = vpop.permute.xlu0 %992
    %v995 = vmul.f32 %v984, %v993
    %997 = vrot.lane.b32.xlu0 %v995, 32
    %v998 = vpop.permute.xlu0 %997
    %v1000 = vadd.f32 %v578, %v998
    %v1001 = vtanh.pop %v1000
    %v1002 = vsub.f32 0.0, %v1001
    %1004 = vrot.lane.b32.xlu0 %v1002, 112
    %v1005 = vpop.permute.xlu0 %1004
    %v1007 = vmul.f32 %v984, %v1005
    %1009 = vrot.lane.b32.xlu0 %v1007, 16
    %v1010 = vpop.permute.xlu0 %1009
    %v1012 = vadd.f32 %v1001, %v1010
    %vm1013 = vcmp.gt.s32.totalorder %v117, 7
    %v1014 = vsel %vm1013, 1, 0
    %1015 = vset.pattern.permute.xlu0 0
    %1016 = vperm.xlu0 %1015, %v1014
    %v1017 = vpop.permute.xlu0 %1016
    %vm1018 = vcmp.eq.s32.totalorder %v1017, 1
    %v1019 = vsel %vm1018, %v1012, 0.0
    %1021 = vrot.lane.b32.xlu0 %v1019, 64
    %v1022 = vpop.permute.xlu0 %1021
    %s1024 = scalar_lea.vmem [#allocation3], 56
    %vm1025 = vcmask 261248
    %1026 = vst.msk [vmem:[%s1024] sm:$0xff] %vm1025, %v1022
    %s1027 = scalar_lea.vmem [#allocation2], 8
    %v1028 = vld [vmem:[%s1027] sm:$0xff]
    %s1029 = scalar_lea.vmem [#allocation2], 48
    %v1030 = vld [vmem:[%s1029] sm:$0xff]
    %1032 = vrot.lane.b32.xlu0 %v789, 96
    %v1033 = vpop.permute.xlu0 %1032
    %v1034 = vsel %vm579, %v1033, 0
    %1036 = vmatpush.msra.mxu0 0.0
    %1037 = vmatpush.msra.mxu0 0.0
    %1038 = vmatpush.msra.mxu0 0.0
    %1039 = vmatpush.msra.mxu0 0.0
    %1040 = vmatpush.msra.mxu0 0.0
    %1041 = vmatpush.msra.mxu0 0.0
    %1042 = vmatpush.msra.mxu0 0.0
    %1043 = vmatpush.msra.mxu0 0.0
    %1044 = vmatpush.msra.mxu0 0.0
    %1045 = vmatpush.msra.mxu0 0.0
    %1046 = vmatpush.msra.mxu0 0.0
    %1047 = vmatpush.msra.mxu0 0.0
    %1048 = vmatpush.msra.mxu0 0.0
    %1049 = vmatpush.msra.mxu0 0.0
    %v1050 = vand.u32 %v571, 4294901760
    %1051 = vmatpush.msra.mxu0 %v1050
    %v1052 = vand.u32 %v570, 4294901760
    %1053 = vmatpush.msra.mxu0 %v1052
    %v1054 = vand.u32 %v1034, 4294901760
    %v1055 = vsub.f32 %v1034, %v1054
    %v1056 = vand.u32 %v1055, 4294901760
    %v1057 = vsub.f32 %v1055, %v1056
    %v1058 = vand.u32 %v1057, 4294901760
    %1059 = vmatmul.f32.gmra.mxu0 %v1058
    %v1060 = vpop.f32.mrf.mxu0
    %v1061 = vadd.f32 0.0, %v1060
    %1062 = vdwg.mxu0
    %1063 = vmatpush.msra.mxu0 0.0
    %1064 = vmatpush.msra.mxu0 0.0
    %1065 = vmatpush.msra.mxu0 0.0
    %1066 = vmatpush.msra.mxu0 0.0
    %1067 = vmatpush.msra.mxu0 0.0
    %1068 = vmatpush.msra.mxu0 0.0
    %1069 = vmatpush.msra.mxu0 0.0
    %1070 = vmatpush.msra.mxu0 0.0
    %1071 = vmatpush.msra.mxu0 0.0
    %1072 = vmatpush.msra.mxu0 0.0
    %1073 = vmatpush.msra.mxu0 0.0
    %1074 = vmatpush.msra.mxu0 0.0
    %1075 = vmatpush.msra.mxu0 0.0
    %1076 = vmatpush.msra.mxu0 0.0
    %v1077 = vand.u32 %v571, 4294901760
    %v1078 = vsub.f32 %v571, %v1077
    %v1079 = vand.u32 %v1078, 4294901760
    %v1080 = vsub.f32 %v1078, %v1079
    %v1081 = vand.u32 %v1080, 4294901760
    %1082 = vmatpush.msra.mxu0 %v1081
    %v1083 = vand.u32 %v570, 4294901760
    %v1084 = vsub.f32 %v570, %v1083
    %v1085 = vand.u32 %v1084, 4294901760
    %v1086 = vsub.f32 %v1084, %v1085
    %v1087 = vand.u32 %v1086, 4294901760
    %1088 = vmatpush.msra.mxu0 %v1087
    %v1089 = vand.u32 %v1034, 4294901760
    %1090 = vmatmul.f32.gmra.mxu0 %v1089
    %v1091 = vpop.f32.mrf.mxu0
    %v1092 = vadd.f32 %v1061, %v1091
    %1093 = vdwg.mxu0
    %1094 = vmatpush.msra.mxu0 0.0
    %1095 = vmatpush.msra.mxu0 0.0
    %1096 = vmatpush.msra.mxu0 0.0
    %1097 = vmatpush.msra.mxu0 0.0
    %1098 = vmatpush.msra.mxu0 0.0
    %1099 = vmatpush.msra.mxu0 0.0
    %1100 = vmatpush.msra.mxu0 0.0
    %1101 = vmatpush.msra.mxu0 0.0
    %1102 = vmatpush.msra.mxu0 0.0
    %1103 = vmatpush.msra.mxu0 0.0
    %1104 = vmatpush.msra.mxu0 0.0
    %1105 = vmatpush.msra.mxu0 0.0
    %1106 = vmatpush.msra.mxu0 0.0
    %1107 = vmatpush.msra.mxu0 0.0
    %v1108 = vand.u32 %v571, 4294901760
    %v1109 = vsub.f32 %v571, %v1108
    %1110 = vmatpush.msra.mxu0 %v1109
    %v1111 = vand.u32 %v570, 4294901760
    %v1112 = vsub.f32 %v570, %v1111
    %1113 = vmatpush.msra.mxu0 %v1112
    %v1114 = vand.u32 %v1034, 4294901760
    %v1115 = vsub.f32 %v1034, %v1114
    %1116 = vmatmul.f32.gmra.mxu0 %v1115
    %v1117 = vpop.f32.mrf.mxu0
    %v1118 = vadd.f32 %v1092, %v1117
    %1119 = vdwg.mxu0
    %1120 = vmatpush.msra.mxu0 0.0
    %1121 = vmatpush.msra.mxu0 0.0
    %1122 = vmatpush.msra.mxu0 0.0
    %1123 = vmatpush.msra.mxu0 0.0
    %1124 = vmatpush.msra.mxu0 0.0
    %1125 = vmatpush.msra.mxu0 0.0
    %1126 = vmatpush.msra.mxu0 0.0
    %1127 = vmatpush.msra.mxu0 0.0
    %1128 = vmatpush.msra.mxu0 0.0
    %1129 = vmatpush.msra.mxu0 0.0
    %1130 = vmatpush.msra.mxu0 0.0
    %1131 = vmatpush.msra.mxu0 0.0
    %1132 = vmatpush.msra.mxu0 0.0
    %1133 = vmatpush.msra.mxu0 0.0
    %v1134 = vand.u32 %v571, 4294901760
    %1135 = vmatpush.msra.mxu0 %v1134
    %v1136 = vand.u32 %v570, 4294901760
    %1137 = vmatpush.msra.mxu0 %v1136
    %v1138 = vand.u32 %v1034, 4294901760
    %v1139 = vsub.f32 %v1034, %v1138
    %v1140 = vand.u32 %v1139, 4294901760
    %1141 = vmatmul.f32.gmra.mxu0 %v1140
    %v1142 = vpop.f32.mrf.mxu0
    %v1143 = vadd.f32 %v1118, %v1142
    %1144 = vdwg.mxu0
    %1145 = vmatpush.msra.mxu0 0.0
    %1146 = vmatpush.msra.mxu0 0.0
    %1147 = vmatpush.msra.mxu0 0.0
    %1148 = vmatpush.msra.mxu0 0.0
    %1149 = vmatpush.msra.mxu0 0.0
    %1150 = vmatpush.msra.mxu0 0.0
    %1151 = vmatpush.msra.mxu0 0.0
    %1152 = vmatpush.msra.mxu0 0.0
    %1153 = vmatpush.msra.mxu0 0.0
    %1154 = vmatpush.msra.mxu0 0.0
    %1155 = vmatpush.msra.mxu0 0.0
    %1156 = vmatpush.msra.mxu0 0.0
    %1157 = vmatpush.msra.mxu0 0.0
    %1158 = vmatpush.msra.mxu0 0.0
    %v1159 = vand.u32 %v571, 4294901760
    %v1160 = vsub.f32 %v571, %v1159
    %v1161 = vand.u32 %v1160, 4294901760
    %1162 = vmatpush.msra.mxu0 %v1161
    %v1163 = vand.u32 %v570, 4294901760
    %v1164 = vsub.f32 %v570, %v1163
    %v1165 = vand.u32 %v1164, 4294901760
    %1166 = vmatpush.msra.mxu0 %v1165
    %v1167 = vand.u32 %v1034, 4294901760
    %1168 = vmatmul.f32.gmra.mxu0 %v1167
    %v1169 = vpop.f32.mrf.mxu0
    %v1170 = vadd.f32 %v1143, %v1169
    %1171 = vdwg.mxu0
    %1172 = vmatpush.msra.mxu0 0.0
    %1173 = vmatpush.msra.mxu0 0.0
    %1174 = vmatpush.msra.mxu0 0.0
    %1175 = vmatpush.msra.mxu0 0.0
    %1176 = vmatpush.msra.mxu0 0.0
    %1177 = vmatpush.msra.mxu0 0.0
    %1178 = vmatpush.msra.mxu0 0.0
    %1179 = vmatpush.msra.mxu0 0.0
    %1180 = vmatpush.msra.mxu0 0.0
    %1181 = vmatpush.msra.mxu0 0.0
    %1182 = vmatpush.msra.mxu0 0.0
    %1183 = vmatpush.msra.mxu0 0.0
    %1184 = vmatpush.msra.mxu0 0.0
    %1185 = vmatpush.msra.mxu0 0.0
    %v1186 = vand.u32 %v571, 4294901760
    %1187 = vmatpush.msra.mxu0 %v1186
    %v1188 = vand.u32 %v570, 4294901760
    %1189 = vmatpush.msra.mxu0 %v1188
    %v1190 = vand.u32 %v1034, 4294901760
    %1191 = vmatmul.f32.gmra.mxu0 %v1190
    %v1192 = vpop.f32.mrf.mxu0
    %v1193 = vadd.f32 %v1170, %v1192
    %1194 = vdwg.mxu0
    %v1195 = vadd.f32 %v1028, %v1193
    %v1196 = vxor.u32 %v1195, 2147483648
    %v1197 = vmul.f32 %v1196, 1.442695
    %v1198 = vpow.pop %v1197
    %v1199 = vadd.f32 %v1198, 1.0
    %v1200 = vrcp.pop %v1199
    %v1201 = vmul.f32 %v1199, %v1200
    %v1202 = vsub.f32 1.0, %v1201
    %v1203 = vmul.f32 %v1200, %v1202
    %v1204 = vadd.f32 %v1200, %v1203
    %vm1205 = vweird.f32 %v1199
    %vm1206 = vweird.f32 %v1200
    %vm1207 = vmor %vm1205, %vm1206
    %v1208 = vsel %vm1207, %v1200, %v1204
    %v1209 = vand.u32 2147483647, %v1199
    %vm1210 = vcmp.eq.f32.partialorder %v1209, 8.507059e+37
    %v1211 = vand.u32 %v1199, 2147483648
    %v1212 = vor.u32 1.1754944e-38, %v1211
    %v1213 = vsel %vm1210, %v1212, %v1208
    %v1214 = vmul.f32 1.0, %v1213
    %v1215 = vadd.f32 %v1193, %v765
    %1217 = vrot.lane.b32.xlu0 %v1215, 96
    %v1218 = vpop.permute.xlu0 %1217
    %v1220 = vmul.f32 %v1214, %v1218
    %1222 = vrot.lane.b32.xlu0 %v1220, 32
    %v1223 = vpop.permute.xlu0 %1222
    %v1225 = vadd.f32 %v1028, %v1223
    %v1226 = vtanh.pop %v1225
    %v1227 = vsub.f32 %v789, %v1226
    %1229 = vrot.lane.b32.xlu0 %v1227, 112
    %v1230 = vpop.permute.xlu0 %1229
    %v1232 = vmul.f32 %v1214, %v1230
    %1234 = vrot.lane.b32.xlu0 %v1232, 16
    %v1235 = vpop.permute.xlu0 %1234
    %v1237 = vadd.f32 %v1226, %v1235
    %vm1238 = vcmp.gt.s32.totalorder %v117, 1
    %v1239 = vsel %vm1238, 1, 0
    %1240 = vset.pattern.permute.xlu0 0
    %1241 = vperm.xlu0 %1240, %v1239
    %v1242 = vpop.permute.xlu0 %1241
    %vm1243 = vcmp.eq.s32.totalorder %v1242, 1
    %v1244 = vsel %vm1243, %v1237, 0.0
    %1246 = vrot.lane.b32.xlu0 %v1244, 96
    %v1247 = vpop.permute.xlu0 %1246
    %s1249 = scalar_lea.vmem [#allocation3], 8
    %1250 = vst.msk [vmem:[%s1249] sm:$0xff] %vm579, %v1247
    %1251 = vrot.lane.b32.xlu0 %v1019, 48
    %v1252 = vpop.permute.xlu0 %1251
    %v1253 = vsel %vm579, %v1252, 0
    %1255 = vmatpush.msra.mxu0 0.0
    %1256 = vmatpush.msra.mxu0 0.0
    %1257 = vmatpush.msra.mxu0 0.0
    %1258 = vmatpush.msra.mxu0 0.0
    %1259 = vmatpush.msra.mxu0 0.0
    %1260 = vmatpush.msra.mxu0 0.0
    %1261 = vmatpush.msra.mxu0 0.0
    %1262 = vmatpush.msra.mxu0 0.0
    %1263 = vmatpush.msra.mxu0 0.0
    %1264 = vmatpush.msra.mxu0 0.0
    %1265 = vmatpush.msra.mxu0 0.0
    %1266 = vmatpush.msra.mxu0 0.0
    %1267 = vmatpush.msra.mxu0 0.0
    %1268 = vmatpush.msra.mxu0 0.0
    %v1269 = vand.u32 %v573, 4294901760
    %1270 = vmatpush.msra.mxu0 %v1269
    %v1271 = vand.u32 %v572, 4294901760
    %1272 = vmatpush.msra.mxu0 %v1271
    %v1273 = vand.u32 %v1253, 4294901760
    %v1274 = vsub.f32 %v1253, %v1273
    %v1275 = vand.u32 %v1274, 4294901760
    %v1276 = vsub.f32 %v1274, %v1275
    %v1277 = vand.u32 %v1276, 4294901760
    %1278 = vmatmul.f32.gmra.mxu0 %v1277
    %v1279 = vpop.f32.mrf.mxu0
    %v1280 = vadd.f32 0.0, %v1279
    %1281 = vdwg.mxu0
    %1282 = vmatpush.msra.mxu0 0.0
    %1283 = vmatpush.msra.mxu0 0.0
    %1284 = vmatpush.msra.mxu0 0.0
    %1285 = vmatpush.msra.mxu0 0.0
    %1286 = vmatpush.msra.mxu0 0.0
    %1287 = vmatpush.msra.mxu0 0.0
    %1288 = vmatpush.msra.mxu0 0.0
    %1289 = vmatpush.msra.mxu0 0.0
    %1290 = vmatpush.msra.mxu0 0.0
    %1291 = vmatpush.msra.mxu0 0.0
    %1292 = vmatpush.msra.mxu0 0.0
    %1293 = vmatpush.msra.mxu0 0.0
    %1294 = vmatpush.msra.mxu0 0.0
    %1295 = vmatpush.msra.mxu0 0.0
    %v1296 = vand.u32 %v573, 4294901760
    %v1297 = vsub.f32 %v573, %v1296
    %v1298 = vand.u32 %v1297, 4294901760
    %v1299 = vsub.f32 %v1297, %v1298
    %v1300 = vand.u32 %v1299, 4294901760
    %1301 = vmatpush.msra.mxu0 %v1300
    %v1302 = vand.u32 %v572, 4294901760
    %v1303 = vsub.f32 %v572, %v1302
    %v1304 = vand.u32 %v1303, 4294901760
    %v1305 = vsub.f32 %v1303, %v1304
    %v1306 = vand.u32 %v1305, 4294901760
    %1307 = vmatpush.msra.mxu0 %v1306
    %v1308 = vand.u32 %v1253, 4294901760
    %1309 = vmatmul.f32.gmra.mxu0 %v1308
    %v1310 = vpop.f32.mrf.mxu0
    %v1311 = vadd.f32 %v1280, %v1310
    %1312 = vdwg.mxu0
    %1313 = vmatpush.msra.mxu0 0.0
    %1314 = vmatpush.msra.mxu0 0.0
    %1315 = vmatpush.msra.mxu0 0.0
    %1316 = vmatpush.msra.mxu0 0.0
    %1317 = vmatpush.msra.mxu0 0.0
    %1318 = vmatpush.msra.mxu0 0.0
    %1319 = vmatpush.msra.mxu0 0.0
    %1320 = vmatpush.msra.mxu0 0.0
    %1321 = vmatpush.msra.mxu0 0.0
    %1322 = vmatpush.msra.mxu0 0.0
    %1323 = vmatpush.msra.mxu0 0.0
    %1324 = vmatpush.msra.mxu0 0.0
    %1325 = vmatpush.msra.mxu0 0.0
    %1326 = vmatpush.msra.mxu0 0.0
    %v1327 = vand.u32 %v573, 4294901760
    %v1328 = vsub.f32 %v573, %v1327
    %1329 = vmatpush.msra.mxu0 %v1328
    %v1330 = vand.u32 %v572, 4294901760
    %v1331 = vsub.f32 %v572, %v1330
    %1332 = vmatpush.msra.mxu0 %v1331
    %v1333 = vand.u32 %v1253, 4294901760
    %v1334 = vsub.f32 %v1253, %v1333
    %1335 = vmatmul.f32.gmra.mxu0 %v1334
    %v1336 = vpop.f32.mrf.mxu0
    %v1337 = vadd.f32 %v1311, %v1336
    %1338 = vdwg.mxu0
    %1339 = vmatpush.msra.mxu0 0.0
    %1340 = vmatpush.msra.mxu0 0.0
    %1341 = vmatpush.msra.mxu0 0.0
    %1342 = vmatpush.msra.mxu0 0.0
    %1343 = vmatpush.msra.mxu0 0.0
    %1344 = vmatpush.msra.mxu0 0.0
    %1345 = vmatpush.msra.mxu0 0.0
    %1346 = vmatpush.msra.mxu0 0.0
    %1347 = vmatpush.msra.mxu0 0.0
    %1348 = vmatpush.msra.mxu0 0.0
    %1349 = vmatpush.msra.mxu0 0.0
    %1350 = vmatpush.msra.mxu0 0.0
    %1351 = vmatpush.msra.mxu0 0.0
    %1352 = vmatpush.msra.mxu0 0.0
    %v1353 = vand.u32 %v573, 4294901760
    %1354 = vmatpush.msra.mxu0 %v1353
    %v1355 = vand.u32 %v572, 4294901760
    %1356 = vmatpush.msra.mxu0 %v1355
    %v1357 = vand.u32 %v1253, 4294901760
    %v1358 = vsub.f32 %v1253, %v1357
    %v1359 = vand.u32 %v1358, 4294901760
    %1360 = vmatmul.f32.gmra.mxu0 %v1359
    %v1361 = vpop.f32.mrf.mxu0
    %v1362 = vadd.f32 %v1337, %v1361
    %1363 = vdwg.mxu0
    %1364 = vmatpush.msra.mxu0 0.0
    %1365 = vmatpush.msra.mxu0 0.0
    %1366 = vmatpush.msra.mxu0 0.0
    %1367 = vmatpush.msra.mxu0 0.0
    %1368 = vmatpush.msra.mxu0 0.0
    %1369 = vmatpush.msra.mxu0 0.0
    %1370 = vmatpush.msra.mxu0 0.0
    %1371 = vmatpush.msra.mxu0 0.0
    %1372 = vmatpush.msra.mxu0 0.0
    %1373 = vmatpush.msra.mxu0 0.0
    %1374 = vmatpush.msra.mxu0 0.0
    %1375 = vmatpush.msra.mxu0 0.0
    %1376 = vmatpush.msra.mxu0 0.0
    %1377 = vmatpush.msra.mxu0 0.0
    %v1378 = vand.u32 %v573, 4294901760
    %v1379 = vsub.f32 %v573, %v1378
    %v1380 = vand.u32 %v1379, 4294901760
    %1381 = vmatpush.msra.mxu0 %v1380
    %v1382 = vand.u32 %v572, 4294901760
    %v1383 = vsub.f32 %v572, %v1382
    %v1384 = vand.u32 %v1383, 4294901760
    %1385 = vmatpush.msra.mxu0 %v1384
    %v1386 = vand.u32 %v1253, 4294901760
    %1387 = vmatmul.f32.gmra.mxu0 %v1386
    %v1388 = vpop.f32.mrf.mxu0
    %v1389 = vadd.f32 %v1362, %v1388
    %1390 = vdwg.mxu0
    %1391 = vmatpush.msra.mxu0 0.0
    %1392 = vmatpush.msra.mxu0 0.0
    %1393 = vmatpush.msra.mxu0 0.0
    %1394 = vmatpush.msra.mxu0 0.0
    %1395 = vmatpush.msra.mxu0 0.0
    %1396 = vmatpush.msra.mxu0 0.0
    %1397 = vmatpush.msra.mxu0 0.0
    %1398 = vmatpush.msra.mxu0 0.0
    %1399 = vmatpush.msra.mxu0 0.0
    %1400 = vmatpush.msra.mxu0 0.0
    %1401 = vmatpush.msra.mxu0 0.0
    %1402 = vmatpush.msra.mxu0 0.0
    %1403 = vmatpush.msra.mxu0 0.0
    %1404 = vmatpush.msra.mxu0 0.0
    %v1405 = vand.u32 %v573, 4294901760
    %1406 = vmatpush.msra.mxu0 %v1405
    %v1407 = vand.u32 %v572, 4294901760
    %1408 = vmatpush.msra.mxu0 %v1407
    %v1409 = vand.u32 %v1253, 4294901760
    %1410 = vmatmul.f32.gmra.mxu0 %v1409
    %v1411 = vpop.f32.mrf.mxu0
    %v1412 = vadd.f32 %v1389, %v1411
    %1413 = vdwg.mxu0
    %1415 = vrot.lane.b32.xlu0 %v1412, 48
    %v1416 = vpop.permute.xlu0 %1415
    %v1418 = vadd.f32 %v1030, %v1416
    %v1419 = vxor.u32 %v1418, 2147483648
    %v1420 = vmul.f32 %v1419, 1.442695
    %v1421 = vpow.pop %v1420
    %v1422 = vadd.f32 %v1421, 1.0
    %v1423 = vrcp.pop %v1422
    %v1424 = vmul.f32 %v1422, %v1423
    %v1425 = vsub.f32 1.0, %v1424
    %v1426 = vmul.f32 %v1423, %v1425
    %v1427 = vadd.f32 %v1423, %v1426
    %vm1428 = vweird.f32 %v1422
    %vm1429 = vweird.f32 %v1423
    %vm1430 = vmor %vm1428, %vm1429
    %v1431 = vsel %vm1430, %v1423, %v1427
    %v1432 = vand.u32 2147483647, %v1422
    %vm1433 = vcmp.eq.f32.partialorder %v1432, 8.507059e+37
    %v1434 = vand.u32 %v1422, 2147483648
    %v1435 = vor.u32 1.1754944e-38, %v1434
    %v1436 = vsel %vm1433, %v1435, %v1431
    %v1437 = vmul.f32 1.0, %v1436
    %v1438 = vadd.f32 %v1412, %v988
    %1440 = vrot.lane.b32.xlu0 %v1438, 16
    %v1441 = vpop.permute.xlu0 %1440
    %v1443 = vmul.f32 %v1437, %v1441
    %1445 = vrot.lane.b32.xlu0 %v1443, 32
    %v1446 = vpop.permute.xlu0 %1445
    %v1448 = vadd.f32 %v1030, %v1446
    %v1449 = vtanh.pop %v1448
    %v1450 = vsub.f32 %v1019, %v1449
    %1452 = vrot.lane.b32.xlu0 %v1450, 112
    %v1453 = vpop.permute.xlu0 %1452
    %v1455 = vmul.f32 %v1437, %v1453
    %1457 = vrot.lane.b32.xlu0 %v1455, 16
    %v1458 = vpop.permute.xlu0 %1457
    %v1460 = vadd.f32 %v1449, %v1458
    %vm1461 = vcmp.gt.s32.totalorder %v117, 6
    %v1462 = vsel %vm1461, 1, 0
    %1463 = vset.pattern.permute.xlu0 0
    %1464 = vperm.xlu0 %1463, %v1462
    %v1465 = vpop.permute.xlu0 %1464
    %vm1466 = vcmp.eq.s32.totalorder %v1465, 1
    %v1467 = vsel %vm1466, %v1460, 0.0
    %1469 = vrot.lane.b32.xlu0 %v1467, 64
    %v1470 = vpop.permute.xlu0 %1469
    %s1472 = scalar_lea.vmem [#allocation3], 48
    %1473 = vst.msk [vmem:[%s1472] sm:$0xff] %vm1025, %v1470
    %s1474 = scalar_lea.vmem [#allocation2], 16
    %v1475 = vld [vmem:[%s1474] sm:$0xff]
    %s1476 = scalar_lea.vmem [#allocation2], 40
    %v1477 = vld [vmem:[%s1476] sm:$0xff]
    %1479 = vrot.lane.b32.xlu0 %v1237, 96
    %v1480 = vpop.permute.xlu0 %1479
    %v1481 = vsel %vm579, %v1480, 0
    %1483 = vmatpush.msra.mxu0 0.0
    %1484 = vmatpush.msra.mxu0 0.0
    %1485 = vmatpush.msra.mxu0 0.0
    %1486 = vmatpush.msra.mxu0 0.0
    %1487 = vmatpush.msra.mxu0 0.0
    %1488 = vmatpush.msra.mxu0 0.0
    %1489 = vmatpush.msra.mxu0 0.0
    %1490 = vmatpush.msra.mxu0 0.0
    %1491 = vmatpush.msra.mxu0 0.0
    %1492 = vmatpush.msra.mxu0 0.0
    %1493 = vmatpush.msra.mxu0 0.0
    %1494 = vmatpush.msra.mxu0 0.0
    %1495 = vmatpush.msra.mxu0 0.0
    %1496 = vmatpush.msra.mxu0 0.0
    %v1497 = vand.u32 %v571, 4294901760
    %1498 = vmatpush.msra.mxu0 %v1497
    %v1499 = vand.u32 %v570, 4294901760
    %1500 = vmatpush.msra.mxu0 %v1499
    %v1501 = vand.u32 %v1481, 4294901760
    %v1502 = vsub.f32 %v1481, %v1501
    %v1503 = vand.u32 %v1502, 4294901760
    %v1504 = vsub.f32 %v1502, %v1503
    %v1505 = vand.u32 %v1504, 4294901760
    %1506 = vmatmul.f32.gmra.mxu0 %v1505
    %v1507 = vpop.f32.mrf.mxu0
    %v1508 = vadd.f32 0.0, %v1507
    %1509 = vdwg.mxu0
    %1510 = vmatpush.msra.mxu0 0.0
    %1511 = vmatpush.msra.mxu0 0.0
    %1512 = vmatpush.msra.mxu0 0.0
    %1513 = vmatpush.msra.mxu0 0.0
    %1514 = vmatpush.msra.mxu0 0.0
    %1515 = vmatpush.msra.mxu0 0.0
    %1516 = vmatpush.msra.mxu0 0.0
    %1517 = vmatpush.msra.mxu0 0.0
    %1518 = vmatpush.msra.mxu0 0.0
    %1519 = vmatpush.msra.mxu0 0.0
    %1520 = vmatpush.msra.mxu0 0.0
    %1521 = vmatpush.msra.mxu0 0.0
    %1522 = vmatpush.msra.mxu0 0.0
    %1523 = vmatpush.msra.mxu0 0.0
    %v1524 = vand.u32 %v571, 4294901760
    %v1525 = vsub.f32 %v571, %v1524
    %v1526 = vand.u32 %v1525, 4294901760
    %v1527 = vsub.f32 %v1525, %v1526
    %v1528 = vand.u32 %v1527, 4294901760
    %1529 = vmatpush.msra.mxu0 %v1528
    %v1530 = vand.u32 %v570, 4294901760
    %v1531 = vsub.f32 %v570, %v1530
    %v1532 = vand.u32 %v1531, 4294901760
    %v1533 = vsub.f32 %v1531, %v1532
    %v1534 = vand.u32 %v1533, 4294901760
    %1535 = vmatpush.msra.mxu0 %v1534
    %v1536 = vand.u32 %v1481, 4294901760
    %1537 = vmatmul.f32.gmra.mxu0 %v1536
    %v1538 = vpop.f32.mrf.mxu0
    %v1539 = vadd.f32 %v1508, %v1538
    %1540 = vdwg.mxu0
    %1541 = vmatpush.msra.mxu0 0.0
    %1542 = vmatpush.msra.mxu0 0.0
    %1543 = vmatpush.msra.mxu0 0.0
    %1544 = vmatpush.msra.mxu0 0.0
    %1545 = vmatpush.msra.mxu0 0.0
    %1546 = vmatpush.msra.mxu0 0.0
    %1547 = vmatpush.msra.mxu0 0.0
    %1548 = vmatpush.msra.mxu0 0.0
    %1549 = vmatpush.msra.mxu0 0.0
    %1550 = vmatpush.msra.mxu0 0.0
    %1551 = vmatpush.msra.mxu0 0.0
    %1552 = vmatpush.msra.mxu0 0.0
    %1553 = vmatpush.msra.mxu0 0.0
    %1554 = vmatpush.msra.mxu0 0.0
    %v1555 = vand.u32 %v571, 4294901760
    %v1556 = vsub.f32 %v571, %v1555
    %1557 = vmatpush.msra.mxu0 %v1556
    %v1558 = vand.u32 %v570, 4294901760
    %v1559 = vsub.f32 %v570, %v1558
    %1560 = vmatpush.msra.mxu0 %v1559
    %v1561 = vand.u32 %v1481, 4294901760
    %v1562 = vsub.f32 %v1481, %v1561
    %1563 = vmatmul.f32.gmra.mxu0 %v1562
    %v1564 = vpop.f32.mrf.mxu0
    %v1565 = vadd.f32 %v1539, %v1564
    %1566 = vdwg.mxu0
    %1567 = vmatpush.msra.mxu0 0.0
    %1568 = vmatpush.msra.mxu0 0.0
    %1569 = vmatpush.msra.mxu0 0.0
    %1570 = vmatpush.msra.mxu0 0.0
    %1571 = vmatpush.msra.mxu0 0.0
    %1572 = vmatpush.msra.mxu0 0.0
    %1573 = vmatpush.msra.mxu0 0.0
    %1574 = vmatpush.msra.mxu0 0.0
    %1575 = vmatpush.msra.mxu0 0.0
    %1576 = vmatpush.msra.mxu0 0.0
    %1577 = vmatpush.msra.mxu0 0.0
    %1578 = vmatpush.msra.mxu0 0.0
    %1579 = vmatpush.msra.mxu0 0.0
    %1580 = vmatpush.msra.mxu0 0.0
    %v1581 = vand.u32 %v571, 4294901760
    %1582 = vmatpush.msra.mxu0 %v1581
    %v1583 = vand.u32 %v570, 4294901760
    %1584 = vmatpush.msra.mxu0 %v1583
    %v1585 = vand.u32 %v1481, 4294901760
    %v1586 = vsub.f32 %v1481, %v1585
    %v1587 = vand.u32 %v1586, 4294901760
    %1588 = vmatmul.f32.gmra.mxu0 %v1587
    %v1589 = vpop.f32.mrf.mxu0
    %v1590 = vadd.f32 %v1565, %v1589
    %1591 = vdwg.mxu0
    %1592 = vmatpush.msra.mxu0 0.0
    %1593 = vmatpush.msra.mxu0 0.0
    %1594 = vmatpush.msra.mxu0 0.0
    %1595 = vmatpush.msra.mxu0 0.0
    %1596 = vmatpush.msra.mxu0 0.0
    %1597 = vmatpush.msra.mxu0 0.0
    %1598 = vmatpush.msra.mxu0 0.0
    %1599 = vmatpush.msra.mxu0 0.0
    %1600 = vmatpush.msra.mxu0 0.0
    %1601 = vmatpush.msra.mxu0 0.0
    %1602 = vmatpush.msra.mxu0 0.0
    %1603 = vmatpush.msra.mxu0 0.0
    %1604 = vmatpush.msra.mxu0 0.0
    %1605 = vmatpush.msra.mxu0 0.0
    %v1606 = vand.u32 %v571, 4294901760
    %v1607 = vsub.f32 %v571, %v1606
    %v1608 = vand.u32 %v1607, 4294901760
    %1609 = vmatpush.msra.mxu0 %v1608
    %v1610 = vand.u32 %v570, 4294901760
    %v1611 = vsub.f32 %v570, %v1610
    %v1612 = vand.u32 %v1611, 4294901760
    %1613 = vmatpush.msra.mxu0 %v1612
    %v1614 = vand.u32 %v1481, 4294901760
    %1615 = vmatmul.f32.gmra.mxu0 %v1614
    %v1616 = vpop.f32.mrf.mxu0
    %v1617 = vadd.f32 %v1590, %v1616
    %1618 = vdwg.mxu0
    %1619 = vmatpush.msra.mxu0 0.0
    %1620 = vmatpush.msra.mxu0 0.0
    %1621 = vmatpush.msra.mxu0 0.0
    %1622 = vmatpush.msra.mxu0 0.0
    %1623 = vmatpush.msra.mxu0 0.0
    %1624 = vmatpush.msra.mxu0 0.0
    %1625 = vmatpush.msra.mxu0 0.0
    %1626 = vmatpush.msra.mxu0 0.0
    %1627 = vmatpush.msra.mxu0 0.0
    %1628 = vmatpush.msra.mxu0 0.0
    %1629 = vmatpush.msra.mxu0 0.0
    %1630 = vmatpush.msra.mxu0 0.0
    %1631 = vmatpush.msra.mxu0 0.0
    %1632 = vmatpush.msra.mxu0 0.0
    %v1633 = vand.u32 %v571, 4294901760
    %1634 = vmatpush.msra.mxu0 %v1633
    %v1635 = vand.u32 %v570, 4294901760
    %1636 = vmatpush.msra.mxu0 %v1635
    %v1637 = vand.u32 %v1481, 4294901760
    %1638 = vmatmul.f32.gmra.mxu0 %v1637
    %v1639 = vpop.f32.mrf.mxu0
    %v1640 = vadd.f32 %v1617, %v1639
    %1641 = vdwg.mxu0
    %v1642 = vadd.f32 %v1475, %v1640
    %v1643 = vxor.u32 %v1642, 2147483648
    %v1644 = vmul.f32 %v1643, 1.442695
    %v1645 = vpow.pop %v1644
    %v1646 = vadd.f32 %v1645, 1.0
    %v1647 = vrcp.pop %v1646
    %v1648 = vmul.f32 %v1646, %v1647
    %v1649 = vsub.f32 1.0, %v1648
    %v1650 = vmul.f32 %v1647, %v1649
    %v1651 = vadd.f32 %v1647, %v1650
    %vm1652 = vweird.f32 %v1646
    %vm1653 = vweird.f32 %v1647
    %vm1654 = vmor %vm1652, %vm1653
    %v1655 = vsel %vm1654, %v1647, %v1651
    %v1656 = vand.u32 2147483647, %v1646
    %vm1657 = vcmp.eq.f32.partialorder %v1656, 8.507059e+37
    %v1658 = vand.u32 %v1646, 2147483648
    %v1659 = vor.u32 1.1754944e-38, %v1658
    %v1660 = vsel %vm1657, %v1659, %v1655
    %v1661 = vmul.f32 1.0, %v1660
    %v1662 = vadd.f32 %v1640, %v765
    %1664 = vrot.lane.b32.xlu0 %v1662, 96
    %v1665 = vpop.permute.xlu0 %1664
    %v1667 = vmul.f32 %v1661, %v1665
    %1669 = vrot.lane.b32.xlu0 %v1667, 32
    %v1670 = vpop.permute.xlu0 %1669
    %v1672 = vadd.f32 %v1475, %v1670
    %v1673 = vtanh.pop %v1672
    %v1674 = vsub.f32 %v1237, %v1673
    %1676 = vrot.lane.b32.xlu0 %v1674, 112
    %v1677 = vpop.permute.xlu0 %1676
    %v1679 = vmul.f32 %v1661, %v1677
    %1681 = vrot.lane.b32.xlu0 %v1679, 16
    %v1682 = vpop.permute.xlu0 %1681
    %v1684 = vadd.f32 %v1673, %v1682
    %vm1685 = vcmp.gt.s32.totalorder %v117, 2
    %v1686 = vsel %vm1685, 1, 0
    %1687 = vset.pattern.permute.xlu0 0
    %1688 = vperm.xlu0 %1687, %v1686
    %v1689 = vpop.permute.xlu0 %1688
    %vm1690 = vcmp.eq.s32.totalorder %v1689, 1
    %v1691 = vsel %vm1690, %v1684, 0.0
    %1693 = vrot.lane.b32.xlu0 %v1691, 96
    %v1694 = vpop.permute.xlu0 %1693
    %s1696 = scalar_lea.vmem [#allocation3], 16
    %1697 = vst.msk [vmem:[%s1696] sm:$0xff] %vm579, %v1694
    %1698 = vrot.lane.b32.xlu0 %v1467, 48
    %v1699 = vpop.permute.xlu0 %1698
    %v1700 = vsel %vm579, %v1699, 0
    %1702 = vmatpush.msra.mxu0 0.0
    %1703 = vmatpush.msra.mxu0 0.0
    %1704 = vmatpush.msra.mxu0 0.0
    %1705 = vmatpush.msra.mxu0 0.0
    %1706 = vmatpush.msra.mxu0 0.0
    %1707 = vmatpush.msra.mxu0 0.0
    %1708 = vmatpush.msra.mxu0 0.0
    %1709 = vmatpush.msra.mxu0 0.0
    %1710 = vmatpush.msra.mxu0 0.0
    %1711 = vmatpush.msra.mxu0 0.0
    %1712 = vmatpush.msra.mxu0 0.0
    %1713 = vmatpush.msra.mxu0 0.0
    %1714 = vmatpush.msra.mxu0 0.0
    %1715 = vmatpush.msra.mxu0 0.0
    %v1716 = vand.u32 %v573, 4294901760
    %1717 = vmatpush.msra.mxu0 %v1716
    %v1718 = vand.u32 %v572, 4294901760
    %1719 = vmatpush.msra.mxu0 %v1718
    %v1720 = vand.u32 %v1700, 4294901760
    %v1721 = vsub.f32 %v1700, %v1720
    %v1722 = vand.u32 %v1721, 4294901760
    %v1723 = vsub.f32 %v1721, %v1722
    %v1724 = vand.u32 %v1723, 4294901760
    %1725 = vmatmul.f32.gmra.mxu0 %v1724
    %v1726 = vpop.f32.mrf.mxu0
    %v1727 = vadd.f32 0.0, %v1726
    %1728 = vdwg.mxu0
    %1729 = vmatpush.msra.mxu0 0.0
    %1730 = vmatpush.msra.mxu0 0.0
    %1731 = vmatpush.msra.mxu0 0.0
    %1732 = vmatpush.msra.mxu0 0.0
    %1733 = vmatpush.msra.mxu0 0.0
    %1734 = vmatpush.msra.mxu0 0.0
    %1735 = vmatpush.msra.mxu0 0.0
    %1736 = vmatpush.msra.mxu0 0.0
    %1737 = vmatpush.msra.mxu0 0.0
    %1738 = vmatpush.msra.mxu0 0.0
    %1739 = vmatpush.msra.mxu0 0.0
    %1740 = vmatpush.msra.mxu0 0.0
    %1741 = vmatpush.msra.mxu0 0.0
    %1742 = vmatpush.msra.mxu0 0.0
    %v1743 = vand.u32 %v573, 4294901760
    %v1744 = vsub.f32 %v573, %v1743
    %v1745 = vand.u32 %v1744, 4294901760
    %v1746 = vsub.f32 %v1744, %v1745
    %v1747 = vand.u32 %v1746, 4294901760
    %1748 = vmatpush.msra.mxu0 %v1747
    %v1749 = vand.u32 %v572, 4294901760
    %v1750 = vsub.f32 %v572, %v1749
    %v1751 = vand.u32 %v1750, 4294901760
    %v1752 = vsub.f32 %v1750, %v1751
    %v1753 = vand.u32 %v1752, 4294901760
    %1754 = vmatpush.msra.mxu0 %v1753
    %v1755 = vand.u32 %v1700, 4294901760
    %1756 = vmatmul.f32.gmra.mxu0 %v1755
    %v1757 = vpop.f32.mrf.mxu0
    %v1758 = vadd.f32 %v1727, %v1757
    %1759 = vdwg.mxu0
    %1760 = vmatpush.msra.mxu0 0.0
    %1761 = vmatpush.msra.mxu0 0.0
    %1762 = vmatpush.msra.mxu0 0.0
    %1763 = vmatpush.msra.mxu0 0.0
    %1764 = vmatpush.msra.mxu0 0.0
    %1765 = vmatpush.msra.mxu0 0.0
    %1766 = vmatpush.msra.mxu0 0.0
    %1767 = vmatpush.msra.mxu0 0.0
    %1768 = vmatpush.msra.mxu0 0.0
    %1769 = vmatpush.msra.mxu0 0.0
    %1770 = vmatpush.msra.mxu0 0.0
    %1771 = vmatpush.msra.mxu0 0.0
    %1772 = vmatpush.msra.mxu0 0.0
    %1773 = vmatpush.msra.mxu0 0.0
    %v1774 = vand.u32 %v573, 4294901760
    %v1775 = vsub.f32 %v573, %v1774
    %1776 = vmatpush.msra.mxu0 %v1775
    %v1777 = vand.u32 %v572, 4294901760
    %v1778 = vsub.f32 %v572, %v1777
    %1779 = vmatpush.msra.mxu0 %v1778
    %v1780 = vand.u32 %v1700, 4294901760
    %v1781 = vsub.f32 %v1700, %v1780
    %1782 = vmatmul.f32.gmra.mxu0 %v1781
    %v1783 = vpop.f32.mrf.mxu0
    %v1784 = vadd.f32 %v1758, %v1783
    %1785 = vdwg.mxu0
    %1786 = vmatpush.msra.mxu0 0.0
    %1787 = vmatpush.msra.mxu0 0.0
    %1788 = vmatpush.msra.mxu0 0.0
    %1789 = vmatpush.msra.mxu0 0.0
    %1790 = vmatpush.msra.mxu0 0.0
    %1791 = vmatpush.msra.mxu0 0.0
    %1792 = vmatpush.msra.mxu0 0.0
    %1793 = vmatpush.msra.mxu0 0.0
    %1794 = vmatpush.msra.mxu0 0.0
    %1795 = vmatpush.msra.mxu0 0.0
    %1796 = vmatpush.msra.mxu0 0.0
    %1797 = vmatpush.msra.mxu0 0.0
    %1798 = vmatpush.msra.mxu0 0.0
    %1799 = vmatpush.msra.mxu0 0.0
    %v1800 = vand.u32 %v573, 4294901760
    %1801 = vmatpush.msra.mxu0 %v1800
    %v1802 = vand.u32 %v572, 4294901760
    %1803 = vmatpush.msra.mxu0 %v1802
    %v1804 = vand.u32 %v1700, 4294901760
    %v1805 = vsub.f32 %v1700, %v1804
    %v1806 = vand.u32 %v1805, 4294901760
    %1807 = vmatmul.f32.gmra.mxu0 %v1806
    %v1808 = vpop.f32.mrf.mxu0
    %v1809 = vadd.f32 %v1784, %v1808
    %1810 = vdwg.mxu0
    %1811 = vmatpush.msra.mxu0 0.0
    %1812 = vmatpush.msra.mxu0 0.0
    %1813 = vmatpush.msra.mxu0 0.0
    %1814 = vmatpush.msra.mxu0 0.0
    %1815 = vmatpush.msra.mxu0 0.0
    %1816 = vmatpush.msra.mxu0 0.0
    %1817 = vmatpush.msra.mxu0 0.0
    %1818 = vmatpush.msra.mxu0 0.0
    %1819 = vmatpush.msra.mxu0 0.0
    %1820 = vmatpush.msra.mxu0 0.0
    %1821 = vmatpush.msra.mxu0 0.0
    %1822 = vmatpush.msra.mxu0 0.0
    %1823 = vmatpush.msra.mxu0 0.0
    %1824 = vmatpush.msra.mxu0 0.0
    %v1825 = vand.u32 %v573, 4294901760
    %v1826 = vsub.f32 %v573, %v1825
    %v1827 = vand.u32 %v1826, 4294901760
    %1828 = vmatpush.msra.mxu0 %v1827
    %v1829 = vand.u32 %v572, 4294901760
    %v1830 = vsub.f32 %v572, %v1829
    %v1831 = vand.u32 %v1830, 4294901760
    %1832 = vmatpush.msra.mxu0 %v1831
    %v1833 = vand.u32 %v1700, 4294901760
    %1834 = vmatmul.f32.gmra.mxu0 %v1833
    %v1835 = vpop.f32.mrf.mxu0
    %v1836 = vadd.f32 %v1809, %v1835
    %1837 = vdwg.mxu0
    %1838 = vmatpush.msra.mxu0 0.0
    %1839 = vmatpush.msra.mxu0 0.0
    %1840 = vmatpush.msra.mxu0 0.0
    %1841 = vmatpush.msra.mxu0 0.0
    %1842 = vmatpush.msra.mxu0 0.0
    %1843 = vmatpush.msra.mxu0 0.0
    %1844 = vmatpush.msra.mxu0 0.0
    %1845 = vmatpush.msra.mxu0 0.0
    %1846 = vmatpush.msra.mxu0 0.0
    %1847 = vmatpush.msra.mxu0 0.0
    %1848 = vmatpush.msra.mxu0 0.0
    %1849 = vmatpush.msra.mxu0 0.0
    %1850 = vmatpush.msra.mxu0 0.0
    %1851 = vmatpush.msra.mxu0 0.0
    %v1852 = vand.u32 %v573, 4294901760
    %1853 = vmatpush.msra.mxu0 %v1852
    %v1854 = vand.u32 %v572, 4294901760
    %1855 = vmatpush.msra.mxu0 %v1854
    %v1856 = vand.u32 %v1700, 4294901760
    %1857 = vmatmul.f32.gmra.mxu0 %v1856
    %v1858 = vpop.f32.mrf.mxu0
    %v1859 = vadd.f32 %v1836, %v1858
    %1860 = vdwg.mxu0
    %1862 = vrot.lane.b32.xlu0 %v1859, 48
    %v1863 = vpop.permute.xlu0 %1862
    %v1865 = vadd.f32 %v1477, %v1863
    %v1866 = vxor.u32 %v1865, 2147483648
    %v1867 = vmul.f32 %v1866, 1.442695
    %v1868 = vpow.pop %v1867
    %v1869 = vadd.f32 %v1868, 1.0
    %v1870 = vrcp.pop %v1869
    %v1871 = vmul.f32 %v1869, %v1870
    %v1872 = vsub.f32 1.0, %v1871
    %v1873 = vmul.f32 %v1870, %v1872
    %v1874 = vadd.f32 %v1870, %v1873
    %vm1875 = vweird.f32 %v1869
    %vm1876 = vweird.f32 %v1870
    %vm1877 = vmor %vm1875, %vm1876
    %v1878 = vsel %vm1877, %v1870, %v1874
    %v1879 = vand.u32 2147483647, %v1869
    %vm1880 = vcmp.eq.f32.partialorder %v1879, 8.507059e+37
    %v1881 = vand.u32 %v1869, 2147483648
    %v1882 = vor.u32 1.1754944e-38, %v1881
    %v1883 = vsel %vm1880, %v1882, %v1878
    %v1884 = vmul.f32 1.0, %v1883
    %v1885 = vadd.f32 %v1859, %v988
    %1887 = vrot.lane.b32.xlu0 %v1885, 16
    %v1888 = vpop.permute.xlu0 %1887
    %v1890 = vmul.f32 %v1884, %v1888
    %1892 = vrot.lane.b32.xlu0 %v1890, 32
    %v1893 = vpop.permute.xlu0 %1892
    %v1895 = vadd.f32 %v1477, %v1893
    %v1896 = vtanh.pop %v1895
    %v1897 = vsub.f32 %v1467, %v1896
    %1899 = vrot.lane.b32.xlu0 %v1897, 112
    %v1900 = vpop.permute.xlu0 %1899
    %v1902 = vmul.f32 %v1884, %v1900
    %1904 = vrot.lane.b32.xlu0 %v1902, 16
    %v1905 = vpop.permute.xlu0 %1904
    %v1907 = vadd.f32 %v1896, %v1905
    %vm1908 = vcmp.gt.s32.totalorder %v117, 5
    %v1909 = vsel %vm1908, 1, 0
    %1910 = vset.pattern.permute.xlu0 0
    %1911 = vperm.xlu0 %1910, %v1909
    %v1912 = vpop.permute.xlu0 %1911
    %vm1913 = vcmp.eq.s32.totalorder %v1912, 1
    %v1914 = vsel %vm1913, %v1907, 0.0
    %1916 = vrot.lane.b32.xlu0 %v1914, 64
    %v1917 = vpop.permute.xlu0 %1916
    %s1919 = scalar_lea.vmem [#allocation3], 40
    %1920 = vst.msk [vmem:[%s1919] sm:$0xff] %vm1025, %v1917
    %s1921 = scalar_lea.vmem [#allocation2], 24
    %v1922 = vld [vmem:[%s1921] sm:$0xff]
    %s1923 = scalar_lea.vmem [#allocation2], 32
    %v1924 = vld [vmem:[%s1923] sm:$0xff]
    %1926 = vrot.lane.b32.xlu0 %v1684, 96
    %v1927 = vpop.permute.xlu0 %1926
    %v1928 = vsel %vm579, %v1927, 0
    %1930 = vmatpush.msra.mxu0 0.0
    %1931 = vmatpush.msra.mxu0 0.0
    %1932 = vmatpush.msra.mxu0 0.0
    %1933 = vmatpush.msra.mxu0 0.0
    %1934 = vmatpush.msra.mxu0 0.0
    %1935 = vmatpush.msra.mxu0 0.0
    %1936 = vmatpush.msra.mxu0 0.0
    %1937 = vmatpush.msra.mxu0 0.0
    %1938 = vmatpush.msra.mxu0 0.0
    %1939 = vmatpush.msra.mxu0 0.0
    %1940 = vmatpush.msra.mxu0 0.0
    %1941 = vmatpush.msra.mxu0 0.0
    %1942 = vmatpush.msra.mxu0 0.0
    %1943 = vmatpush.msra.mxu0 0.0
    %v1944 = vand.u32 %v571, 4294901760
    %1945 = vmatpush.msra.mxu0 %v1944
    %v1946 = vand.u32 %v570, 4294901760
    %1947 = vmatpush.msra.mxu0 %v1946
    %v1948 = vand.u32 %v1928, 4294901760
    %v1949 = vsub.f32 %v1928, %v1948
    %v1950 = vand.u32 %v1949, 4294901760
    %v1951 = vsub.f32 %v1949, %v1950
    %v1952 = vand.u32 %v1951, 4294901760
    %1953 = vmatmul.f32.gmra.mxu0 %v1952
    %v1954 = vpop.f32.mrf.mxu0
    %v1955 = vadd.f32 0.0, %v1954
    %1956 = vdwg.mxu0
    %1957 = vmatpush.msra.mxu0 0.0
    %1958 = vmatpush.msra.mxu0 0.0
    %1959 = vmatpush.msra.mxu0 0.0
    %1960 = vmatpush.msra.mxu0 0.0
    %1961 = vmatpush.msra.mxu0 0.0
    %1962 = vmatpush.msra.mxu0 0.0
    %1963 = vmatpush.msra.mxu0 0.0
    %1964 = vmatpush.msra.mxu0 0.0
    %1965 = vmatpush.msra.mxu0 0.0
    %1966 = vmatpush.msra.mxu0 0.0
    %1967 = vmatpush.msra.mxu0 0.0
    %1968 = vmatpush.msra.mxu0 0.0
    %1969 = vmatpush.msra.mxu0 0.0
    %1970 = vmatpush.msra.mxu0 0.0
    %v1971 = vand.u32 %v571, 4294901760
    %v1972 = vsub.f32 %v571, %v1971
    %v1973 = vand.u32 %v1972, 4294901760
    %v1974 = vsub.f32 %v1972, %v1973
    %v1975 = vand.u32 %v1974, 4294901760
    %1976 = vmatpush.msra.mxu0 %v1975
    %v1977 = vand.u32 %v570, 4294901760
    %v1978 = vsub.f32 %v570, %v1977
    %v1979 = vand.u32 %v1978, 4294901760
    %v1980 = vsub.f32 %v1978, %v1979
    %v1981 = vand.u32 %v1980, 4294901760
    %1982 = vmatpush.msra.mxu0 %v1981
    %v1983 = vand.u32 %v1928, 4294901760
    %1984 = vmatmul.f32.gmra.mxu0 %v1983
    %v1985 = vpop.f32.mrf.mxu0
    %v1986 = vadd.f32 %v1955, %v1985
    %1987 = vdwg.mxu0
    %1988 = vmatpush.msra.mxu0 0.0
    %1989 = vmatpush.msra.mxu0 0.0
    %1990 = vmatpush.msra.mxu0 0.0
    %1991 = vmatpush.msra.mxu0 0.0
    %1992 = vmatpush.msra.mxu0 0.0
    %1993 = vmatpush.msra.mxu0 0.0
    %1994 = vmatpush.msra.mxu0 0.0
    %1995 = vmatpush.msra.mxu0 0.0
    %1996 = vmatpush.msra.mxu0 0.0
    %1997 = vmatpush.msra.mxu0 0.0
    %1998 = vmatpush.msra.mxu0 0.0
    %1999 = vmatpush.msra.mxu0 0.0
    %2000 = vmatpush.msra.mxu0 0.0
    %2001 = vmatpush.msra.mxu0 0.0
    %v2002 = vand.u32 %v571, 4294901760
    %v2003 = vsub.f32 %v571, %v2002
    %2004 = vmatpush.msra.mxu0 %v2003
    %v2005 = vand.u32 %v570, 4294901760
    %v2006 = vsub.f32 %v570, %v2005
    %2007 = vmatpush.msra.mxu0 %v2006
    %v2008 = vand.u32 %v1928, 4294901760
    %v2009 = vsub.f32 %v1928, %v2008
    %2010 = vmatmul.f32.gmra.mxu0 %v2009
    %v2011 = vpop.f32.mrf.mxu0
    %v2012 = vadd.f32 %v1986, %v2011
    %2013 = vdwg.mxu0
    %2014 = vmatpush.msra.mxu0 0.0
    %2015 = vmatpush.msra.mxu0 0.0
    %2016 = vmatpush.msra.mxu0 0.0
    %2017 = vmatpush.msra.mxu0 0.0
    %2018 = vmatpush.msra.mxu0 0.0
    %2019 = vmatpush.msra.mxu0 0.0
    %2020 = vmatpush.msra.mxu0 0.0
    %2021 = vmatpush.msra.mxu0 0.0
    %2022 = vmatpush.msra.mxu0 0.0
    %2023 = vmatpush.msra.mxu0 0.0
    %2024 = vmatpush.msra.mxu0 0.0
    %2025 = vmatpush.msra.mxu0 0.0
    %2026 = vmatpush.msra.mxu0 0.0
    %2027 = vmatpush.msra.mxu0 0.0
    %v2028 = vand.u32 %v571, 4294901760
    %2029 = vmatpush.msra.mxu0 %v2028
    %v2030 = vand.u32 %v570, 4294901760
    %2031 = vmatpush.msra.mxu0 %v2030
    %v2032 = vand.u32 %v1928, 4294901760
    %v2033 = vsub.f32 %v1928, %v2032
    %v2034 = vand.u32 %v2033, 4294901760
    %2035 = vmatmul.f32.gmra.mxu0 %v2034
    %v2036 = vpop.f32.mrf.mxu0
    %v2037 = vadd.f32 %v2012, %v2036
    %2038 = vdwg.mxu0
    %2039 = vmatpush.msra.mxu0 0.0
    %2040 = vmatpush.msra.mxu0 0.0
    %2041 = vmatpush.msra.mxu0 0.0
    %2042 = vmatpush.msra.mxu0 0.0
    %2043 = vmatpush.msra.mxu0 0.0
    %2044 = vmatpush.msra.mxu0 0.0
    %2045 = vmatpush.msra.mxu0 0.0
    %2046 = vmatpush.msra.mxu0 0.0
    %2047 = vmatpush.msra.mxu0 0.0
    %2048 = vmatpush.msra.mxu0 0.0
    %2049 = vmatpush.msra.mxu0 0.0
    %2050 = vmatpush.msra.mxu0 0.0
    %2051 = vmatpush.msra.mxu0 0.0
    %2052 = vmatpush.msra.mxu0 0.0
    %v2053 = vand.u32 %v571, 4294901760
    %v2054 = vsub.f32 %v571, %v2053
    %v2055 = vand.u32 %v2054, 4294901760
    %2056 = vmatpush.msra.mxu0 %v2055
    %v2057 = vand.u32 %v570, 4294901760
    %v2058 = vsub.f32 %v570, %v2057
    %v2059 = vand.u32 %v2058, 4294901760
    %2060 = vmatpush.msra.mxu0 %v2059
    %v2061 = vand.u32 %v1928, 4294901760
    %2062 = vmatmul.f32.gmra.mxu0 %v2061
    %v2063 = vpop.f32.mrf.mxu0
    %v2064 = vadd.f32 %v2037, %v2063
    %2065 = vdwg.mxu0
    %2066 = vmatpush.msra.mxu0 0.0
    %2067 = vmatpush.msra.mxu0 0.0
    %2068 = vmatpush.msra.mxu0 0.0
    %2069 = vmatpush.msra.mxu0 0.0
    %2070 = vmatpush.msra.mxu0 0.0
    %2071 = vmatpush.msra.mxu0 0.0
    %2072 = vmatpush.msra.mxu0 0.0
    %2073 = vmatpush.msra.mxu0 0.0
    %2074 = vmatpush.msra.mxu0 0.0
    %2075 = vmatpush.msra.mxu0 0.0
    %2076 = vmatpush.msra.mxu0 0.0
    %2077 = vmatpush.msra.mxu0 0.0
    %2078 = vmatpush.msra.mxu0 0.0
    %2079 = vmatpush.msra.mxu0 0.0
    %v2080 = vand.u32 %v571, 4294901760
    %2081 = vmatpush.msra.mxu0 %v2080
    %v2082 = vand.u32 %v570, 4294901760
    %2083 = vmatpush.msra.mxu0 %v2082
    %v2084 = vand.u32 %v1928, 4294901760
    %2085 = vmatmul.f32.gmra.mxu0 %v2084
    %v2086 = vpop.f32.mrf.mxu0
    %v2087 = vadd.f32 %v2064, %v2086
    %2088 = vdwg.mxu0
    %v2089 = vadd.f32 %v1922, %v2087
    %v2090 = vxor.u32 %v2089, 2147483648
    %v2091 = vmul.f32 %v2090, 1.442695
    %v2092 = vpow.pop %v2091
    %v2093 = vadd.f32 %v2092, 1.0
    %v2094 = vrcp.pop %v2093
    %v2095 = vmul.f32 %v2093, %v2094
    %v2096 = vsub.f32 1.0, %v2095
    %v2097 = vmul.f32 %v2094, %v2096
    %v2098 = vadd.f32 %v2094, %v2097
    %vm2099 = vweird.f32 %v2093
    %vm2100 = vweird.f32 %v2094
    %vm2101 = vmor %vm2099, %vm2100
    %v2102 = vsel %vm2101, %v2094, %v2098
    %v2103 = vand.u32 2147483647, %v2093
    %vm2104 = vcmp.eq.f32.partialorder %v2103, 8.507059e+37
    %v2105 = vand.u32 %v2093, 2147483648
    %v2106 = vor.u32 1.1754944e-38, %v2105
    %v2107 = vsel %vm2104, %v2106, %v2102
    %v2108 = vmul.f32 1.0, %v2107
    %v2109 = vadd.f32 %v2087, %v765
    %2111 = vrot.lane.b32.xlu0 %v2109, 96
    %v2112 = vpop.permute.xlu0 %2111
    %v2114 = vmul.f32 %v2108, %v2112
    %2116 = vrot.lane.b32.xlu0 %v2114, 32
    %v2117 = vpop.permute.xlu0 %2116
    %v2119 = vadd.f32 %v1922, %v2117
    %v2120 = vtanh.pop %v2119
    %v2121 = vsub.f32 %v1684, %v2120
    %2123 = vrot.lane.b32.xlu0 %v2121, 112
    %v2124 = vpop.permute.xlu0 %2123
    %v2126 = vmul.f32 %v2108, %v2124
    %2128 = vrot.lane.b32.xlu0 %v2126, 16
    %v2129 = vpop.permute.xlu0 %2128
    %v2131 = vadd.f32 %v2120, %v2129
    %vm2132 = vcmp.gt.s32.totalorder %v117, 3
    %v2133 = vsel %vm2132, 1, 0
    %2134 = vset.pattern.permute.xlu0 0
    %2135 = vperm.xlu0 %2134, %v2133
    %v2136 = vpop.permute.xlu0 %2135
    %vm2137 = vcmp.eq.s32.totalorder %v2136, 1
    %v2138 = vsel %vm2137, %v2131, 0.0
    %2140 = vrot.lane.b32.xlu0 %v2138, 96
    %v2141 = vpop.permute.xlu0 %2140
    %s2143 = scalar_lea.vmem [#allocation3], 24
    %2144 = vst.msk [vmem:[%s2143] sm:$0xff] %vm579, %v2141
    %2145 = vrot.lane.b32.xlu0 %v1914, 48
    %v2146 = vpop.permute.xlu0 %2145
    %v2147 = vsel %vm579, %v2146, 0
    %2149 = vmatpush.msra.mxu0 0.0
    %2150 = vmatpush.msra.mxu0 0.0
    %2151 = vmatpush.msra.mxu0 0.0
    %2152 = vmatpush.msra.mxu0 0.0
    %2153 = vmatpush.msra.mxu0 0.0
    %2154 = vmatpush.msra.mxu0 0.0
    %2155 = vmatpush.msra.mxu0 0.0
    %2156 = vmatpush.msra.mxu0 0.0
    %2157 = vmatpush.msra.mxu0 0.0
    %2158 = vmatpush.msra.mxu0 0.0
    %2159 = vmatpush.msra.mxu0 0.0
    %2160 = vmatpush.msra.mxu0 0.0
    %2161 = vmatpush.msra.mxu0 0.0
    %2162 = vmatpush.msra.mxu0 0.0
    %v2163 = vand.u32 %v573, 4294901760
    %2164 = vmatpush.msra.mxu0 %v2163
    %v2165 = vand.u32 %v572, 4294901760
    %2166 = vmatpush.msra.mxu0 %v2165
    %v2167 = vand.u32 %v2147, 4294901760
    %v2168 = vsub.f32 %v2147, %v2167
    %v2169 = vand.u32 %v2168, 4294901760
    %v2170 = vsub.f32 %v2168, %v2169
    %v2171 = vand.u32 %v2170, 4294901760
    %2172 = vmatmul.f32.gmra.mxu0 %v2171
    %v2173 = vpop.f32.mrf.mxu0
    %v2174 = vadd.f32 0.0, %v2173
    %2175 = vdwg.mxu0
    %2176 = vmatpush.msra.mxu0 0.0
    %2177 = vmatpush.msra.mxu0 0.0
    %2178 = vmatpush.msra.mxu0 0.0
    %2179 = vmatpush.msra.mxu0 0.0
    %2180 = vmatpush.msra.mxu0 0.0
    %2181 = vmatpush.msra.mxu0 0.0
    %2182 = vmatpush.msra.mxu0 0.0
    %2183 = vmatpush.msra.mxu0 0.0
    %2184 = vmatpush.msra.mxu0 0.0
    %2185 = vmatpush.msra.mxu0 0.0
    %2186 = vmatpush.msra.mxu0 0.0
    %2187 = vmatpush.msra.mxu0 0.0
    %2188 = vmatpush.msra.mxu0 0.0
    %2189 = vmatpush.msra.mxu0 0.0
    %v2190 = vand.u32 %v573, 4294901760
    %v2191 = vsub.f32 %v573, %v2190
    %v2192 = vand.u32 %v2191, 4294901760
    %v2193 = vsub.f32 %v2191, %v2192
    %v2194 = vand.u32 %v2193, 4294901760
    %2195 = vmatpush.msra.mxu0 %v2194
    %v2196 = vand.u32 %v572, 4294901760
    %v2197 = vsub.f32 %v572, %v2196
    %v2198 = vand.u32 %v2197, 4294901760
    %v2199 = vsub.f32 %v2197, %v2198
    %v2200 = vand.u32 %v2199, 4294901760
    %2201 = vmatpush.msra.mxu0 %v2200
    %v2202 = vand.u32 %v2147, 4294901760
    %2203 = vmatmul.f32.gmra.mxu0 %v2202
    %v2204 = vpop.f32.mrf.mxu0
    %v2205 = vadd.f32 %v2174, %v2204
    %2206 = vdwg.mxu0
    %2207 = vmatpush.msra.mxu0 0.0
    %2208 = vmatpush.msra.mxu0 0.0
    %2209 = vmatpush.msra.mxu0 0.0
    %2210 = vmatpush.msra.mxu0 0.0
    %2211 = vmatpush.msra.mxu0 0.0
    %2212 = vmatpush.msra.mxu0 0.0
    %2213 = vmatpush.msra.mxu0 0.0
    %2214 = vmatpush.msra.mxu0 0.0
    %2215 = vmatpush.msra.mxu0 0.0
    %2216 = vmatpush.msra.mxu0 0.0
    %2217 = vmatpush.msra.mxu0 0.0
    %2218 = vmatpush.msra.mxu0 0.0
    %2219 = vmatpush.msra.mxu0 0.0
    %2220 = vmatpush.msra.mxu0 0.0
    %v2221 = vand.u32 %v573, 4294901760
    %v2222 = vsub.f32 %v573, %v2221
    %2223 = vmatpush.msra.mxu0 %v2222
    %v2224 = vand.u32 %v572, 4294901760
    %v2225 = vsub.f32 %v572, %v2224
    %2226 = vmatpush.msra.mxu0 %v2225
    %v2227 = vand.u32 %v2147, 4294901760
    %v2228 = vsub.f32 %v2147, %v2227
    %2229 = vmatmul.f32.gmra.mxu0 %v2228
    %v2230 = vpop.f32.mrf.mxu0
    %v2231 = vadd.f32 %v2205, %v2230
    %2232 = vdwg.mxu0
    %2233 = vmatpush.msra.mxu0 0.0
    %2234 = vmatpush.msra.mxu0 0.0
    %2235 = vmatpush.msra.mxu0 0.0
    %2236 = vmatpush.msra.mxu0 0.0
    %2237 = vmatpush.msra.mxu0 0.0
    %2238 = vmatpush.msra.mxu0 0.0
    %2239 = vmatpush.msra.mxu0 0.0
    %2240 = vmatpush.msra.mxu0 0.0
    %2241 = vmatpush.msra.mxu0 0.0
    %2242 = vmatpush.msra.mxu0 0.0
    %2243 = vmatpush.msra.mxu0 0.0
    %2244 = vmatpush.msra.mxu0 0.0
    %2245 = vmatpush.msra.mxu0 0.0
    %2246 = vmatpush.msra.mxu0 0.0
    %v2247 = vand.u32 %v573, 4294901760
    %2248 = vmatpush.msra.mxu0 %v2247
    %v2249 = vand.u32 %v572, 4294901760
    %2250 = vmatpush.msra.mxu0 %v2249
    %v2251 = vand.u32 %v2147, 4294901760
    %v2252 = vsub.f32 %v2147, %v2251
    %v2253 = vand.u32 %v2252, 4294901760
    %2254 = vmatmul.f32.gmra.mxu0 %v2253
    %v2255 = vpop.f32.mrf.mxu0
    %v2256 = vadd.f32 %v2231, %v2255
    %2257 = vdwg.mxu0
    %2258 = vmatpush.msra.mxu0 0.0
    %2259 = vmatpush.msra.mxu0 0.0
    %2260 = vmatpush.msra.mxu0 0.0
    %2261 = vmatpush.msra.mxu0 0.0
    %2262 = vmatpush.msra.mxu0 0.0
    %2263 = vmatpush.msra.mxu0 0.0
    %2264 = vmatpush.msra.mxu0 0.0
    %2265 = vmatpush.msra.mxu0 0.0
    %2266 = vmatpush.msra.mxu0 0.0
    %2267 = vmatpush.msra.mxu0 0.0
    %2268 = vmatpush.msra.mxu0 0.0
    %2269 = vmatpush.msra.mxu0 0.0
    %2270 = vmatpush.msra.mxu0 0.0
    %2271 = vmatpush.msra.mxu0 0.0
    %v2272 = vand.u32 %v573, 4294901760
    %v2273 = vsub.f32 %v573, %v2272
    %v2274 = vand.u32 %v2273, 4294901760
    %2275 = vmatpush.msra.mxu0 %v2274
    %v2276 = vand.u32 %v572, 4294901760
    %v2277 = vsub.f32 %v572, %v2276
    %v2278 = vand.u32 %v2277, 4294901760
    %2279 = vmatpush.msra.mxu0 %v2278
    %v2280 = vand.u32 %v2147, 4294901760
    %2281 = vmatmul.f32.gmra.mxu0 %v2280
    %v2282 = vpop.f32.mrf.mxu0
    %v2283 = vadd.f32 %v2256, %v2282
    %2284 = vdwg.mxu0
    %2285 = vmatpush.msra.mxu0 0.0
    %2286 = vmatpush.msra.mxu0 0.0
    %2287 = vmatpush.msra.mxu0 0.0
    %2288 = vmatpush.msra.mxu0 0.0
    %2289 = vmatpush.msra.mxu0 0.0
    %2290 = vmatpush.msra.mxu0 0.0
    %2291 = vmatpush.msra.mxu0 0.0
    %2292 = vmatpush.msra.mxu0 0.0
    %2293 = vmatpush.msra.mxu0 0.0
    %2294 = vmatpush.msra.mxu0 0.0
    %2295 = vmatpush.msra.mxu0 0.0
    %2296 = vmatpush.msra.mxu0 0.0
    %2297 = vmatpush.msra.mxu0 0.0
    %2298 = vmatpush.msra.mxu0 0.0
    %v2299 = vand.u32 %v573, 4294901760
    %2300 = vmatpush.msra.mxu0 %v2299
    %v2301 = vand.u32 %v572, 4294901760
    %2302 = vmatpush.msra.mxu0 %v2301
    %v2303 = vand.u32 %v2147, 4294901760
    %2304 = vmatmul.f32.gmra.mxu0 %v2303
    %v2305 = vpop.f32.mrf.mxu0
    %v2306 = vadd.f32 %v2283, %v2305
    %2307 = vdwg.mxu0
    %2309 = vrot.lane.b32.xlu0 %v2306, 48
    %v2310 = vpop.permute.xlu0 %2309
    %v2312 = vadd.f32 %v1924, %v2310
    %v2313 = vxor.u32 %v2312, 2147483648
    %v2314 = vmul.f32 %v2313, 1.442695
    %v2315 = vpow.pop %v2314
    %v2316 = vadd.f32 %v2315, 1.0
    %v2317 = vrcp.pop %v2316
    %v2318 = vmul.f32 %v2316, %v2317
    %v2319 = vsub.f32 1.0, %v2318
    %v2320 = vmul.f32 %v2317, %v2319
    %v2321 = vadd.f32 %v2317, %v2320
    %vm2322 = vweird.f32 %v2316
    %vm2323 = vweird.f32 %v2317
    %vm2324 = vmor %vm2322, %vm2323
    %v2325 = vsel %vm2324, %v2317, %v2321
    %v2326 = vand.u32 2147483647, %v2316
    %vm2327 = vcmp.eq.f32.partialorder %v2326, 8.507059e+37
    %v2328 = vand.u32 %v2316, 2147483648
    %v2329 = vor.u32 1.1754944e-38, %v2328
    %v2330 = vsel %vm2327, %v2329, %v2325
    %v2331 = vmul.f32 1.0, %v2330
    %v2332 = vadd.f32 %v2306, %v988
    %2334 = vrot.lane.b32.xlu0 %v2332, 16
    %v2335 = vpop.permute.xlu0 %2334
    %v2337 = vmul.f32 %v2331, %v2335
    %2339 = vrot.lane.b32.xlu0 %v2337, 32
    %v2340 = vpop.permute.xlu0 %2339
    %v2342 = vadd.f32 %v1924, %v2340
    %v2343 = vtanh.pop %v2342
    %v2344 = vsub.f32 %v1914, %v2343
    %2346 = vrot.lane.b32.xlu0 %v2344, 112
    %v2347 = vpop.permute.xlu0 %2346
    %v2349 = vmul.f32 %v2331, %v2347
    %2351 = vrot.lane.b32.xlu0 %v2349, 16
    %v2352 = vpop.permute.xlu0 %2351
    %v2354 = vadd.f32 %v2343, %v2352
    %vm2355 = vcmp.gt.s32.totalorder %v117, 4
    %v2356 = vsel %vm2355, 1, 0
    %2357 = vset.pattern.permute.xlu0 0
    %2358 = vperm.xlu0 %2357, %v2356
    %v2359 = vpop.permute.xlu0 %2358
    %vm2360 = vcmp.eq.s32.totalorder %v2359, 1
    %v2361 = vsel %vm2360, %v2354, 0.0
    %2363 = vrot.lane.b32.xlu0 %v2361, 64
    %v2364 = vpop.permute.xlu0 %2363
    %s2366 = scalar_lea.vmem [#allocation3], 32
    %2367 = vst.msk [vmem:[%s2366] sm:$0xff] %vm1025, %v2364
    %v2368 = vld [vmem:[%s1923] sm:$0xff]
    %v2369 = vld [vmem:[%s1921] sm:$0xff]
    %2371 = vrot.lane.b32.xlu0 %v2131, 96
    %v2372 = vpop.permute.xlu0 %2371
    %v2373 = vsel %vm579, %v2372, 0
    %2375 = vmatpush.msra.mxu0 0.0
    %2376 = vmatpush.msra.mxu0 0.0
    %2377 = vmatpush.msra.mxu0 0.0
    %2378 = vmatpush.msra.mxu0 0.0
    %2379 = vmatpush.msra.mxu0 0.0
    %2380 = vmatpush.msra.mxu0 0.0
    %2381 = vmatpush.msra.mxu0 0.0
    %2382 = vmatpush.msra.mxu0 0.0
    %2383 = vmatpush.msra.mxu0 0.0
    %2384 = vmatpush.msra.mxu0 0.0
    %2385 = vmatpush.msra.mxu0 0.0
    %2386 = vmatpush.msra.mxu0 0.0
    %2387 = vmatpush.msra.mxu0 0.0
    %2388 = vmatpush.msra.mxu0 0.0
    %v2389 = vand.u32 %v571, 4294901760
    %2390 = vmatpush.msra.mxu0 %v2389
    %v2391 = vand.u32 %v570, 4294901760
    %2392 = vmatpush.msra.mxu0 %v2391
    %v2393 = vand.u32 %v2373, 4294901760
    %v2394 = vsub.f32 %v2373, %v2393
    %v2395 = vand.u32 %v2394, 4294901760
    %v2396 = vsub.f32 %v2394, %v2395
    %v2397 = vand.u32 %v2396, 4294901760
    %2398 = vmatmul.f32.gmra.mxu0 %v2397
    %v2399 = vpop.f32.mrf.mxu0
    %v2400 = vadd.f32 0.0, %v2399
    %2401 = vdwg.mxu0
    %2402 = vmatpush.msra.mxu0 0.0
    %2403 = vmatpush.msra.mxu0 0.0
    %2404 = vmatpush.msra.mxu0 0.0
    %2405 = vmatpush.msra.mxu0 0.0
    %2406 = vmatpush.msra.mxu0 0.0
    %2407 = vmatpush.msra.mxu0 0.0
    %2408 = vmatpush.msra.mxu0 0.0
    %2409 = vmatpush.msra.mxu0 0.0
    %2410 = vmatpush.msra.mxu0 0.0
    %2411 = vmatpush.msra.mxu0 0.0
    %2412 = vmatpush.msra.mxu0 0.0
    %2413 = vmatpush.msra.mxu0 0.0
    %2414 = vmatpush.msra.mxu0 0.0
    %2415 = vmatpush.msra.mxu0 0.0
    %v2416 = vand.u32 %v571, 4294901760
    %v2417 = vsub.f32 %v571, %v2416
    %v2418 = vand.u32 %v2417, 4294901760
    %v2419 = vsub.f32 %v2417, %v2418
    %v2420 = vand.u32 %v2419, 4294901760
    %2421 = vmatpush.msra.mxu0 %v2420
    %v2422 = vand.u32 %v570, 4294901760
    %v2423 = vsub.f32 %v570, %v2422
    %v2424 = vand.u32 %v2423, 4294901760
    %v2425 = vsub.f32 %v2423, %v2424
    %v2426 = vand.u32 %v2425, 4294901760
    %2427 = vmatpush.msra.mxu0 %v2426
    %v2428 = vand.u32 %v2373, 4294901760
    %2429 = vmatmul.f32.gmra.mxu0 %v2428
    %v2430 = vpop.f32.mrf.mxu0
    %v2431 = vadd.f32 %v2400, %v2430
    %2432 = vdwg.mxu0
    %2433 = vmatpush.msra.mxu0 0.0
    %2434 = vmatpush.msra.mxu0 0.0
    %2435 = vmatpush.msra.mxu0 0.0
    %2436 = vmatpush.msra.mxu0 0.0
    %2437 = vmatpush.msra.mxu0 0.0
    %2438 = vmatpush.msra.mxu0 0.0
    %2439 = vmatpush.msra.mxu0 0.0
    %2440 = vmatpush.msra.mxu0 0.0
    %2441 = vmatpush.msra.mxu0 0.0
    %2442 = vmatpush.msra.mxu0 0.0
    %2443 = vmatpush.msra.mxu0 0.0
    %2444 = vmatpush.msra.mxu0 0.0
    %2445 = vmatpush.msra.mxu0 0.0
    %2446 = vmatpush.msra.mxu0 0.0
    %v2447 = vand.u32 %v571, 4294901760
    %v2448 = vsub.f32 %v571, %v2447
    %2449 = vmatpush.msra.mxu0 %v2448
    %v2450 = vand.u32 %v570, 4294901760
    %v2451 = vsub.f32 %v570, %v2450
    %2452 = vmatpush.msra.mxu0 %v2451
    %v2453 = vand.u32 %v2373, 4294901760
    %v2454 = vsub.f32 %v2373, %v2453
    %2455 = vmatmul.f32.gmra.mxu0 %v2454
    %v2456 = vpop.f32.mrf.mxu0
    %v2457 = vadd.f32 %v2431, %v2456
    %2458 = vdwg.mxu0
    %2459 = vmatpush.msra.mxu0 0.0
    %2460 = vmatpush.msra.mxu0 0.0
    %2461 = vmatpush.msra.mxu0 0.0
    %2462 = vmatpush.msra.mxu0 0.0
    %2463 = vmatpush.msra.mxu0 0.0
    %2464 = vmatpush.msra.mxu0 0.0
    %2465 = vmatpush.msra.mxu0 0.0
    %2466 = vmatpush.msra.mxu0 0.0
    %2467 = vmatpush.msra.mxu0 0.0
    %2468 = vmatpush.msra.mxu0 0.0
    %2469 = vmatpush.msra.mxu0 0.0
    %2470 = vmatpush.msra.mxu0 0.0
    %2471 = vmatpush.msra.mxu0 0.0
    %2472 = vmatpush.msra.mxu0 0.0
    %v2473 = vand.u32 %v571, 4294901760
    %2474 = vmatpush.msra.mxu0 %v2473
    %v2475 = vand.u32 %v570, 4294901760
    %2476 = vmatpush.msra.mxu0 %v2475
    %v2477 = vand.u32 %v2373, 4294901760
    %v2478 = vsub.f32 %v2373, %v2477
    %v2479 = vand.u32 %v2478, 4294901760
    %2480 = vmatmul.f32.gmra.mxu0 %v2479
    %v2481 = vpop.f32.mrf.mxu0
    %v2482 = vadd.f32 %v2457, %v2481
    %2483 = vdwg.mxu0
    %2484 = vmatpush.msra.mxu0 0.0
    %2485 = vmatpush.msra.mxu0 0.0
    %2486 = vmatpush.msra.mxu0 0.0
    %2487 = vmatpush.msra.mxu0 0.0
    %2488 = vmatpush.msra.mxu0 0.0
    %2489 = vmatpush.msra.mxu0 0.0
    %2490 = vmatpush.msra.mxu0 0.0
    %2491 = vmatpush.msra.mxu0 0.0
    %2492 = vmatpush.msra.mxu0 0.0
    %2493 = vmatpush.msra.mxu0 0.0
    %2494 = vmatpush.msra.mxu0 0.0
    %2495 = vmatpush.msra.mxu0 0.0
    %2496 = vmatpush.msra.mxu0 0.0
    %2497 = vmatpush.msra.mxu0 0.0
    %v2498 = vand.u32 %v571, 4294901760
    %v2499 = vsub.f32 %v571, %v2498
    %v2500 = vand.u32 %v2499, 4294901760
    %2501 = vmatpush.msra.mxu0 %v2500
    %v2502 = vand.u32 %v570, 4294901760
    %v2503 = vsub.f32 %v570, %v2502
    %v2504 = vand.u32 %v2503, 4294901760
    %2505 = vmatpush.msra.mxu0 %v2504
    %v2506 = vand.u32 %v2373, 4294901760
    %2507 = vmatmul.f32.gmra.mxu0 %v2506
    %v2508 = vpop.f32.mrf.mxu0
    %v2509 = vadd.f32 %v2482, %v2508
    %2510 = vdwg.mxu0
    %2511 = vmatpush.msra.mxu0 0.0
    %2512 = vmatpush.msra.mxu0 0.0
    %2513 = vmatpush.msra.mxu0 0.0
    %2514 = vmatpush.msra.mxu0 0.0
    %2515 = vmatpush.msra.mxu0 0.0
    %2516 = vmatpush.msra.mxu0 0.0
    %2517 = vmatpush.msra.mxu0 0.0
    %2518 = vmatpush.msra.mxu0 0.0
    %2519 = vmatpush.msra.mxu0 0.0
    %2520 = vmatpush.msra.mxu0 0.0
    %2521 = vmatpush.msra.mxu0 0.0
    %2522 = vmatpush.msra.mxu0 0.0
    %2523 = vmatpush.msra.mxu0 0.0
    %2524 = vmatpush.msra.mxu0 0.0
    %v2525 = vand.u32 %v571, 4294901760
    %2526 = vmatpush.msra.mxu0 %v2525
    %v2527 = vand.u32 %v570, 4294901760
    %2528 = vmatpush.msra.mxu0 %v2527
    %v2529 = vand.u32 %v2373, 4294901760
    %2530 = vmatmul.f32.gmra.mxu0 %v2529
    %v2531 = vpop.f32.mrf.mxu0
    %v2532 = vadd.f32 %v2509, %v2531
    %2533 = vdwg.mxu0
    %v2534 = vadd.f32 %v2368, %v2532
    %v2535 = vxor.u32 %v2534, 2147483648
    %v2536 = vmul.f32 %v2535, 1.442695
    %v2537 = vpow.pop %v2536
    %v2538 = vadd.f32 %v2537, 1.0
    %v2539 = vrcp.pop %v2538
    %v2540 = vmul.f32 %v2538, %v2539
    %v2541 = vsub.f32 1.0, %v2540
    %v2542 = vmul.f32 %v2539, %v2541
    %v2543 = vadd.f32 %v2539, %v2542
    %vm2544 = vweird.f32 %v2538
    %vm2545 = vweird.f32 %v2539
    %vm2546 = vmor %vm2544, %vm2545
    %v2547 = vsel %vm2546, %v2539, %v2543
    %v2548 = vand.u32 2147483647, %v2538
    %vm2549 = vcmp.eq.f32.partialorder %v2548, 8.507059e+37
    %v2550 = vand.u32 %v2538, 2147483648
    %v2551 = vor.u32 1.1754944e-38, %v2550
    %v2552 = vsel %vm2549, %v2551, %v2547
    %v2553 = vmul.f32 1.0, %v2552
    %v2554 = vadd.f32 %v2532, %v765
    %2556 = vrot.lane.b32.xlu0 %v2554, 96
    %v2557 = vpop.permute.xlu0 %2556
    %v2559 = vmul.f32 %v2553, %v2557
    %2561 = vrot.lane.b32.xlu0 %v2559, 32
    %v2562 = vpop.permute.xlu0 %2561
    %v2564 = vadd.f32 %v2368, %v2562
    %v2565 = vtanh.pop %v2564
    %v2566 = vsub.f32 %v2131, %v2565
    %2568 = vrot.lane.b32.xlu0 %v2566, 112
    %v2569 = vpop.permute.xlu0 %2568
    %v2571 = vmul.f32 %v2553, %v2569
    %2573 = vrot.lane.b32.xlu0 %v2571, 16
    %v2574 = vpop.permute.xlu0 %2573
    %v2576 = vadd.f32 %v2565, %v2574
    %v2577 = vsel %vm2360, %v2576, 0.0
    %2579 = vrot.lane.b32.xlu0 %v2577, 96
    %v2580 = vpop.permute.xlu0 %2579
    %2582 = vst.msk [vmem:[%s2366] sm:$0xff] %vm579, %v2580
    %2583 = vrot.lane.b32.xlu0 %v2361, 48
    %v2584 = vpop.permute.xlu0 %2583
    %v2585 = vsel %vm579, %v2584, 0
    %2587 = vmatpush.msra.mxu0 0.0
    %2588 = vmatpush.msra.mxu0 0.0
    %2589 = vmatpush.msra.mxu0 0.0
    %2590 = vmatpush.msra.mxu0 0.0
    %2591 = vmatpush.msra.mxu0 0.0
    %2592 = vmatpush.msra.mxu0 0.0
    %2593 = vmatpush.msra.mxu0 0.0
    %2594 = vmatpush.msra.mxu0 0.0
    %2595 = vmatpush.msra.mxu0 0.0
    %2596 = vmatpush.msra.mxu0 0.0
    %2597 = vmatpush.msra.mxu0 0.0
    %2598 = vmatpush.msra.mxu0 0.0
    %2599 = vmatpush.msra.mxu0 0.0
    %2600 = vmatpush.msra.mxu0 0.0
    %v2601 = vand.u32 %v573, 4294901760
    %2602 = vmatpush.msra.mxu0 %v2601
    %v2603 = vand.u32 %v572, 4294901760
    %2604 = vmatpush.msra.mxu0 %v2603
    %v2605 = vand.u32 %v2585, 4294901760
    %v2606 = vsub.f32 %v2585, %v2605
    %v2607 = vand.u32 %v2606, 4294901760
    %v2608 = vsub.f32 %v2606, %v2607
    %v2609 = vand.u32 %v2608, 4294901760
    %2610 = vmatmul.f32.gmra.mxu0 %v2609
    %v2611 = vpop.f32.mrf.mxu0
    %v2612 = vadd.f32 0.0, %v2611
    %2613 = vdwg.mxu0
    %2614 = vmatpush.msra.mxu0 0.0
    %2615 = vmatpush.msra.mxu0 0.0
    %2616 = vmatpush.msra.mxu0 0.0
    %2617 = vmatpush.msra.mxu0 0.0
    %2618 = vmatpush.msra.mxu0 0.0
    %2619 = vmatpush.msra.mxu0 0.0
    %2620 = vmatpush.msra.mxu0 0.0
    %2621 = vmatpush.msra.mxu0 0.0
    %2622 = vmatpush.msra.mxu0 0.0
    %2623 = vmatpush.msra.mxu0 0.0
    %2624 = vmatpush.msra.mxu0 0.0
    %2625 = vmatpush.msra.mxu0 0.0
    %2626 = vmatpush.msra.mxu0 0.0
    %2627 = vmatpush.msra.mxu0 0.0
    %v2628 = vand.u32 %v573, 4294901760
    %v2629 = vsub.f32 %v573, %v2628
    %v2630 = vand.u32 %v2629, 4294901760
    %v2631 = vsub.f32 %v2629, %v2630
    %v2632 = vand.u32 %v2631, 4294901760
    %2633 = vmatpush.msra.mxu0 %v2632
    %v2634 = vand.u32 %v572, 4294901760
    %v2635 = vsub.f32 %v572, %v2634
    %v2636 = vand.u32 %v2635, 4294901760
    %v2637 = vsub.f32 %v2635, %v2636
    %v2638 = vand.u32 %v2637, 4294901760
    %2639 = vmatpush.msra.mxu0 %v2638
    %v2640 = vand.u32 %v2585, 4294901760
    %2641 = vmatmul.f32.gmra.mxu0 %v2640
    %v2642 = vpop.f32.mrf.mxu0
    %v2643 = vadd.f32 %v2612, %v2642
    %2644 = vdwg.mxu0
    %2645 = vmatpush.msra.mxu0 0.0
    %2646 = vmatpush.msra.mxu0 0.0
    %2647 = vmatpush.msra.mxu0 0.0
    %2648 = vmatpush.msra.mxu0 0.0
    %2649 = vmatpush.msra.mxu0 0.0
    %2650 = vmatpush.msra.mxu0 0.0
    %2651 = vmatpush.msra.mxu0 0.0
    %2652 = vmatpush.msra.mxu0 0.0
    %2653 = vmatpush.msra.mxu0 0.0
    %2654 = vmatpush.msra.mxu0 0.0
    %2655 = vmatpush.msra.mxu0 0.0
    %2656 = vmatpush.msra.mxu0 0.0
    %2657 = vmatpush.msra.mxu0 0.0
    %2658 = vmatpush.msra.mxu0 0.0
    %v2659 = vand.u32 %v573, 4294901760
    %v2660 = vsub.f32 %v573, %v2659
    %2661 = vmatpush.msra.mxu0 %v2660
    %v2662 = vand.u32 %v572, 4294901760
    %v2663 = vsub.f32 %v572, %v2662
    %2664 = vmatpush.msra.mxu0 %v2663
    %v2665 = vand.u32 %v2585, 4294901760
    %v2666 = vsub.f32 %v2585, %v2665
    %2667 = vmatmul.f32.gmra.mxu0 %v2666
    %v2668 = vpop.f32.mrf.mxu0
    %v2669 = vadd.f32 %v2643, %v2668
    %2670 = vdwg.mxu0
    %2671 = vmatpush.msra.mxu0 0.0
    %2672 = vmatpush.msra.mxu0 0.0
    %2673 = vmatpush.msra.mxu0 0.0
    %2674 = vmatpush.msra.mxu0 0.0
    %2675 = vmatpush.msra.mxu0 0.0
    %2676 = vmatpush.msra.mxu0 0.0
    %2677 = vmatpush.msra.mxu0 0.0
    %2678 = vmatpush.msra.mxu0 0.0
    %2679 = vmatpush.msra.mxu0 0.0
    %2680 = vmatpush.msra.mxu0 0.0
    %2681 = vmatpush.msra.mxu0 0.0
    %2682 = vmatpush.msra.mxu0 0.0
    %2683 = vmatpush.msra.mxu0 0.0
    %2684 = vmatpush.msra.mxu0 0.0
    %v2685 = vand.u32 %v573, 4294901760
    %2686 = vmatpush.msra.mxu0 %v2685
    %v2687 = vand.u32 %v572, 4294901760
    %2688 = vmatpush.msra.mxu0 %v2687
    %v2689 = vand.u32 %v2585, 4294901760
    %v2690 = vsub.f32 %v2585, %v2689
    %v2691 = vand.u32 %v2690, 4294901760
    %2692 = vmatmul.f32.gmra.mxu0 %v2691
    %v2693 = vpop.f32.mrf.mxu0
    %v2694 = vadd.f32 %v2669, %v2693
    %2695 = vdwg.mxu0
    %2696 = vmatpush.msra.mxu0 0.0
    %2697 = vmatpush.msra.mxu0 0.0
    %2698 = vmatpush.msra.mxu0 0.0
    %2699 = vmatpush.msra.mxu0 0.0
    %2700 = vmatpush.msra.mxu0 0.0
    %2701 = vmatpush.msra.mxu0 0.0
    %2702 = vmatpush.msra.mxu0 0.0
    %2703 = vmatpush.msra.mxu0 0.0
    %2704 = vmatpush.msra.mxu0 0.0
    %2705 = vmatpush.msra.mxu0 0.0
    %2706 = vmatpush.msra.mxu0 0.0
    %2707 = vmatpush.msra.mxu0 0.0
    %2708 = vmatpush.msra.mxu0 0.0
    %2709 = vmatpush.msra.mxu0 0.0
    %v2710 = vand.u32 %v573, 4294901760
    %v2711 = vsub.f32 %v573, %v2710
    %v2712 = vand.u32 %v2711, 4294901760
    %2713 = vmatpush.msra.mxu0 %v2712
    %v2714 = vand.u32 %v572, 4294901760
    %v2715 = vsub.f32 %v572, %v2714
    %v2716 = vand.u32 %v2715, 4294901760
    %2717 = vmatpush.msra.mxu0 %v2716
    %v2718 = vand.u32 %v2585, 4294901760
    %2719 = vmatmul.f32.gmra.mxu0 %v2718
    %v2720 = vpop.f32.mrf.mxu0
    %v2721 = vadd.f32 %v2694, %v2720
    %2722 = vdwg.mxu0
    %2723 = vmatpush.msra.mxu0 0.0
    %2724 = vmatpush.msra.mxu0 0.0
    %2725 = vmatpush.msra.mxu0 0.0
    %2726 = vmatpush.msra.mxu0 0.0
    %2727 = vmatpush.msra.mxu0 0.0
    %2728 = vmatpush.msra.mxu0 0.0
    %2729 = vmatpush.msra.mxu0 0.0
    %2730 = vmatpush.msra.mxu0 0.0
    %2731 = vmatpush.msra.mxu0 0.0
    %2732 = vmatpush.msra.mxu0 0.0
    %2733 = vmatpush.msra.mxu0 0.0
    %2734 = vmatpush.msra.mxu0 0.0
    %2735 = vmatpush.msra.mxu0 0.0
    %2736 = vmatpush.msra.mxu0 0.0
    %v2737 = vand.u32 %v573, 4294901760
    %2738 = vmatpush.msra.mxu0 %v2737
    %v2739 = vand.u32 %v572, 4294901760
    %2740 = vmatpush.msra.mxu0 %v2739
    %v2741 = vand.u32 %v2585, 4294901760
    %2742 = vmatmul.f32.gmra.mxu0 %v2741
    %v2743 = vpop.f32.mrf.mxu0
    %v2744 = vadd.f32 %v2721, %v2743
    %2745 = vdwg.mxu0
    %2747 = vrot.lane.b32.xlu0 %v2744, 48
    %v2748 = vpop.permute.xlu0 %2747
    %v2750 = vadd.f32 %v2369, %v2748
    %v2751 = vxor.u32 %v2750, 2147483648
    %v2752 = vmul.f32 %v2751, 1.442695
    %v2753 = vpow.pop %v2752
    %v2754 = vadd.f32 %v2753, 1.0
    %v2755 = vrcp.pop %v2754
    %v2756 = vmul.f32 %v2754, %v2755
    %v2757 = vsub.f32 1.0, %v2756
    %v2758 = vmul.f32 %v2755, %v2757
    %v2759 = vadd.f32 %v2755, %v2758
    %vm2760 = vweird.f32 %v2754
    %vm2761 = vweird.f32 %v2755
    %vm2762 = vmor %vm2760, %vm2761
    %v2763 = vsel %vm2762, %v2755, %v2759
    %v2764 = vand.u32 2147483647, %v2754
    %vm2765 = vcmp.eq.f32.partialorder %v2764, 8.507059e+37
    %v2766 = vand.u32 %v2754, 2147483648
    %v2767 = vor.u32 1.1754944e-38, %v2766
    %v2768 = vsel %vm2765, %v2767, %v2763
    %v2769 = vmul.f32 1.0, %v2768
    %v2770 = vadd.f32 %v2744, %v988
    %2772 = vrot.lane.b32.xlu0 %v2770, 16
    %v2773 = vpop.permute.xlu0 %2772
    %v2775 = vmul.f32 %v2769, %v2773
    %2777 = vrot.lane.b32.xlu0 %v2775, 32
    %v2778 = vpop.permute.xlu0 %2777
    %v2780 = vadd.f32 %v2369, %v2778
    %v2781 = vtanh.pop %v2780
    %v2782 = vsub.f32 %v2361, %v2781
    %2784 = vrot.lane.b32.xlu0 %v2782, 112
    %v2785 = vpop.permute.xlu0 %2784
    %v2787 = vmul.f32 %v2769, %v2785
    %2789 = vrot.lane.b32.xlu0 %v2787, 16
    %v2790 = vpop.permute.xlu0 %2789
    %v2792 = vadd.f32 %v2781, %v2790
    %v2793 = vsel %vm2137, %v2792, 0.0
    %2795 = vrot.lane.b32.xlu0 %v2793, 64
    %v2796 = vpop.permute.xlu0 %2795
    %2798 = vst.msk [vmem:[%s2143] sm:$0xff] %vm1025, %v2796
    %v2799 = vld [vmem:[%s1476] sm:$0xff]
    %v2800 = vld [vmem:[%s1474] sm:$0xff]
    %2802 = vrot.lane.b32.xlu0 %v2576, 96
    %v2803 = vpop.permute.xlu0 %2802
    %v2804 = vsel %vm579, %v2803, 0
    %2806 = vmatpush.msra.mxu0 0.0
    %2807 = vmatpush.msra.mxu0 0.0
    %2808 = vmatpush.msra.mxu0 0.0
    %2809 = vmatpush.msra.mxu0 0.0
    %2810 = vmatpush.msra.mxu0 0.0
    %2811 = vmatpush.msra.mxu0 0.0
    %2812 = vmatpush.msra.mxu0 0.0
    %2813 = vmatpush.msra.mxu0 0.0
    %2814 = vmatpush.msra.mxu0 0.0
    %2815 = vmatpush.msra.mxu0 0.0
    %2816 = vmatpush.msra.mxu0 0.0
    %2817 = vmatpush.msra.mxu0 0.0
    %2818 = vmatpush.msra.mxu0 0.0
    %2819 = vmatpush.msra.mxu0 0.0
    %v2820 = vand.u32 %v571, 4294901760
    %2821 = vmatpush.msra.mxu0 %v2820
    %v2822 = vand.u32 %v570, 4294901760
    %2823 = vmatpush.msra.mxu0 %v2822
    %v2824 = vand.u32 %v2804, 4294901760
    %v2825 = vsub.f32 %v2804, %v2824
    %v2826 = vand.u32 %v2825, 4294901760
    %v2827 = vsub.f32 %v2825, %v2826
    %v2828 = vand.u32 %v2827, 4294901760
    %2829 = vmatmul.f32.gmra.mxu0 %v2828
    %v2830 = vpop.f32.mrf.mxu0
    %v2831 = vadd.f32 0.0, %v2830
    %2832 = vdwg.mxu0
    %2833 = vmatpush.msra.mxu0 0.0
    %2834 = vmatpush.msra.mxu0 0.0
    %2835 = vmatpush.msra.mxu0 0.0
    %2836 = vmatpush.msra.mxu0 0.0
    %2837 = vmatpush.msra.mxu0 0.0
    %2838 = vmatpush.msra.mxu0 0.0
    %2839 = vmatpush.msra.mxu0 0.0
    %2840 = vmatpush.msra.mxu0 0.0
    %2841 = vmatpush.msra.mxu0 0.0
    %2842 = vmatpush.msra.mxu0 0.0
    %2843 = vmatpush.msra.mxu0 0.0
    %2844 = vmatpush.msra.mxu0 0.0
    %2845 = vmatpush.msra.mxu0 0.0
    %2846 = vmatpush.msra.mxu0 0.0
    %v2847 = vand.u32 %v571, 4294901760
    %v2848 = vsub.f32 %v571, %v2847
    %v2849 = vand.u32 %v2848, 4294901760
    %v2850 = vsub.f32 %v2848, %v2849
    %v2851 = vand.u32 %v2850, 4294901760
    %2852 = vmatpush.msra.mxu0 %v2851
    %v2853 = vand.u32 %v570, 4294901760
    %v2854 = vsub.f32 %v570, %v2853
    %v2855 = vand.u32 %v2854, 4294901760
    %v2856 = vsub.f32 %v2854, %v2855
    %v2857 = vand.u32 %v2856, 4294901760
    %2858 = vmatpush.msra.mxu0 %v2857
    %v2859 = vand.u32 %v2804, 4294901760
    %2860 = vmatmul.f32.gmra.mxu0 %v2859
    %v2861 = vpop.f32.mrf.mxu0
    %v2862 = vadd.f32 %v2831, %v2861
    %2863 = vdwg.mxu0
    %2864 = vmatpush.msra.mxu0 0.0
    %2865 = vmatpush.msra.mxu0 0.0
    %2866 = vmatpush.msra.mxu0 0.0
    %2867 = vmatpush.msra.mxu0 0.0
    %2868 = vmatpush.msra.mxu0 0.0
    %2869 = vmatpush.msra.mxu0 0.0
    %2870 = vmatpush.msra.mxu0 0.0
    %2871 = vmatpush.msra.mxu0 0.0
    %2872 = vmatpush.msra.mxu0 0.0
    %2873 = vmatpush.msra.mxu0 0.0
    %2874 = vmatpush.msra.mxu0 0.0
    %2875 = vmatpush.msra.mxu0 0.0
    %2876 = vmatpush.msra.mxu0 0.0
    %2877 = vmatpush.msra.mxu0 0.0
    %v2878 = vand.u32 %v571, 4294901760
    %v2879 = vsub.f32 %v571, %v2878
    %2880 = vmatpush.msra.mxu0 %v2879
    %v2881 = vand.u32 %v570, 4294901760
    %v2882 = vsub.f32 %v570, %v2881
    %2883 = vmatpush.msra.mxu0 %v2882
    %v2884 = vand.u32 %v2804, 4294901760
    %v2885 = vsub.f32 %v2804, %v2884
    %2886 = vmatmul.f32.gmra.mxu0 %v2885
    %v2887 = vpop.f32.mrf.mxu0
    %v2888 = vadd.f32 %v2862, %v2887
    %2889 = vdwg.mxu0
    %2890 = vmatpush.msra.mxu0 0.0
    %2891 = vmatpush.msra.mxu0 0.0
    %2892 = vmatpush.msra.mxu0 0.0
    %2893 = vmatpush.msra.mxu0 0.0
    %2894 = vmatpush.msra.mxu0 0.0
    %2895 = vmatpush.msra.mxu0 0.0
    %2896 = vmatpush.msra.mxu0 0.0
    %2897 = vmatpush.msra.mxu0 0.0
    %2898 = vmatpush.msra.mxu0 0.0
    %2899 = vmatpush.msra.mxu0 0.0
    %2900 = vmatpush.msra.mxu0 0.0
    %2901 = vmatpush.msra.mxu0 0.0
    %2902 = vmatpush.msra.mxu0 0.0
    %2903 = vmatpush.msra.mxu0 0.0
    %v2904 = vand.u32 %v571, 4294901760
    %2905 = vmatpush.msra.mxu0 %v2904
    %v2906 = vand.u32 %v570, 4294901760
    %2907 = vmatpush.msra.mxu0 %v2906
    %v2908 = vand.u32 %v2804, 4294901760
    %v2909 = vsub.f32 %v2804, %v2908
    %v2910 = vand.u32 %v2909, 4294901760
    %2911 = vmatmul.f32.gmra.mxu0 %v2910
    %v2912 = vpop.f32.mrf.mxu0
    %v2913 = vadd.f32 %v2888, %v2912
    %2914 = vdwg.mxu0
    %2915 = vmatpush.msra.mxu0 0.0
    %2916 = vmatpush.msra.mxu0 0.0
    %2917 = vmatpush.msra.mxu0 0.0
    %2918 = vmatpush.msra.mxu0 0.0
    %2919 = vmatpush.msra.mxu0 0.0
    %2920 = vmatpush.msra.mxu0 0.0
    %2921 = vmatpush.msra.mxu0 0.0
    %2922 = vmatpush.msra.mxu0 0.0
    %2923 = vmatpush.msra.mxu0 0.0
    %2924 = vmatpush.msra.mxu0 0.0
    %2925 = vmatpush.msra.mxu0 0.0
    %2926 = vmatpush.msra.mxu0 0.0
    %2927 = vmatpush.msra.mxu0 0.0
    %2928 = vmatpush.msra.mxu0 0.0
    %v2929 = vand.u32 %v571, 4294901760
    %v2930 = vsub.f32 %v571, %v2929
    %v2931 = vand.u32 %v2930, 4294901760
    %2932 = vmatpush.msra.mxu0 %v2931
    %v2933 = vand.u32 %v570, 4294901760
    %v2934 = vsub.f32 %v570, %v2933
    %v2935 = vand.u32 %v2934, 4294901760
    %2936 = vmatpush.msra.mxu0 %v2935
    %v2937 = vand.u32 %v2804, 4294901760
    %2938 = vmatmul.f32.gmra.mxu0 %v2937
    %v2939 = vpop.f32.mrf.mxu0
    %v2940 = vadd.f32 %v2913, %v2939
    %2941 = vdwg.mxu0
    %2942 = vmatpush.msra.mxu0 0.0
    %2943 = vmatpush.msra.mxu0 0.0
    %2944 = vmatpush.msra.mxu0 0.0
    %2945 = vmatpush.msra.mxu0 0.0
    %2946 = vmatpush.msra.mxu0 0.0
    %2947 = vmatpush.msra.mxu0 0.0
    %2948 = vmatpush.msra.mxu0 0.0
    %2949 = vmatpush.msra.mxu0 0.0
    %2950 = vmatpush.msra.mxu0 0.0
    %2951 = vmatpush.msra.mxu0 0.0
    %2952 = vmatpush.msra.mxu0 0.0
    %2953 = vmatpush.msra.mxu0 0.0
    %2954 = vmatpush.msra.mxu0 0.0
    %2955 = vmatpush.msra.mxu0 0.0
    %v2956 = vand.u32 %v571, 4294901760
    %2957 = vmatpush.msra.mxu0 %v2956
    %v2958 = vand.u32 %v570, 4294901760
    %2959 = vmatpush.msra.mxu0 %v2958
    %v2960 = vand.u32 %v2804, 4294901760
    %2961 = vmatmul.f32.gmra.mxu0 %v2960
    %v2962 = vpop.f32.mrf.mxu0
    %v2963 = vadd.f32 %v2940, %v2962
    %2964 = vdwg.mxu0
    %v2965 = vadd.f32 %v2799, %v2963
    %v2966 = vxor.u32 %v2965, 2147483648
    %v2967 = vmul.f32 %v2966, 1.442695
    %v2968 = vpow.pop %v2967
    %v2969 = vadd.f32 %v2968, 1.0
    %v2970 = vrcp.pop %v2969
    %v2971 = vmul.f32 %v2969, %v2970
    %v2972 = vsub.f32 1.0, %v2971
    %v2973 = vmul.f32 %v2970, %v2972
    %v2974 = vadd.f32 %v2970, %v2973
    %vm2975 = vweird.f32 %v2969
    %vm2976 = vweird.f32 %v2970
    %vm2977 = vmor %vm2975, %vm2976
    %v2978 = vsel %vm2977, %v2970, %v2974
    %v2979 = vand.u32 2147483647, %v2969
    %vm2980 = vcmp.eq.f32.partialorder %v2979, 8.507059e+37
    %v2981 = vand.u32 %v2969, 2147483648
    %v2982 = vor.u32 1.1754944e-38, %v2981
    %v2983 = vsel %vm2980, %v2982, %v2978
    %v2984 = vmul.f32 1.0, %v2983
    %v2985 = vadd.f32 %v2963, %v765
    %2987 = vrot.lane.b32.xlu0 %v2985, 96
    %v2988 = vpop.permute.xlu0 %2987
    %v2990 = vmul.f32 %v2984, %v2988
    %2992 = vrot.lane.b32.xlu0 %v2990, 32
    %v2993 = vpop.permute.xlu0 %2992
    %v2995 = vadd.f32 %v2799, %v2993
    %v2996 = vtanh.pop %v2995
    %v2997 = vsub.f32 %v2576, %v2996
    %2999 = vrot.lane.b32.xlu0 %v2997, 112
    %v3000 = vpop.permute.xlu0 %2999
    %v3002 = vmul.f32 %v2984, %v3000
    %3004 = vrot.lane.b32.xlu0 %v3002, 16
    %v3005 = vpop.permute.xlu0 %3004
    %v3007 = vadd.f32 %v2996, %v3005
    %v3008 = vsel %vm1913, %v3007, 0.0
    %3010 = vrot.lane.b32.xlu0 %v3008, 96
    %v3011 = vpop.permute.xlu0 %3010
    %3013 = vst.msk [vmem:[%s1919] sm:$0xff] %vm579, %v3011
    %3014 = vrot.lane.b32.xlu0 %v2793, 48
    %v3015 = vpop.permute.xlu0 %3014
    %v3016 = vsel %vm579, %v3015, 0
    %3018 = vmatpush.msra.mxu0 0.0
    %3019 = vmatpush.msra.mxu0 0.0
    %3020 = vmatpush.msra.mxu0 0.0
    %3021 = vmatpush.msra.mxu0 0.0
    %3022 = vmatpush.msra.mxu0 0.0
    %3023 = vmatpush.msra.mxu0 0.0
    %3024 = vmatpush.msra.mxu0 0.0
    %3025 = vmatpush.msra.mxu0 0.0
    %3026 = vmatpush.msra.mxu0 0.0
    %3027 = vmatpush.msra.mxu0 0.0
    %3028 = vmatpush.msra.mxu0 0.0
    %3029 = vmatpush.msra.mxu0 0.0
    %3030 = vmatpush.msra.mxu0 0.0
    %3031 = vmatpush.msra.mxu0 0.0
    %v3032 = vand.u32 %v573, 4294901760
    %3033 = vmatpush.msra.mxu0 %v3032
    %v3034 = vand.u32 %v572, 4294901760
    %3035 = vmatpush.msra.mxu0 %v3034
    %v3036 = vand.u32 %v3016, 4294901760
    %v3037 = vsub.f32 %v3016, %v3036
    %v3038 = vand.u32 %v3037, 4294901760
    %v3039 = vsub.f32 %v3037, %v3038
    %v3040 = vand.u32 %v3039, 4294901760
    %3041 = vmatmul.f32.gmra.mxu0 %v3040
    %v3042 = vpop.f32.mrf.mxu0
    %v3043 = vadd.f32 0.0, %v3042
    %3044 = vdwg.mxu0
    %3045 = vmatpush.msra.mxu0 0.0
    %3046 = vmatpush.msra.mxu0 0.0
    %3047 = vmatpush.msra.mxu0 0.0
    %3048 = vmatpush.msra.mxu0 0.0
    %3049 = vmatpush.msra.mxu0 0.0
    %3050 = vmatpush.msra.mxu0 0.0
    %3051 = vmatpush.msra.mxu0 0.0
    %3052 = vmatpush.msra.mxu0 0.0
    %3053 = vmatpush.msra.mxu0 0.0
    %3054 = vmatpush.msra.mxu0 0.0
    %3055 = vmatpush.msra.mxu0 0.0
    %3056 = vmatpush.msra.mxu0 0.0
    %3057 = vmatpush.msra.mxu0 0.0
    %3058 = vmatpush.msra.mxu0 0.0
    %v3059 = vand.u32 %v573, 4294901760
    %v3060 = vsub.f32 %v573, %v3059
    %v3061 = vand.u32 %v3060, 4294901760
    %v3062 = vsub.f32 %v3060, %v3061
    %v3063 = vand.u32 %v3062, 4294901760
    %3064 = vmatpush.msra.mxu0 %v3063
    %v3065 = vand.u32 %v572, 4294901760
    %v3066 = vsub.f32 %v572, %v3065
    %v3067 = vand.u32 %v3066, 4294901760
    %v3068 = vsub.f32 %v3066, %v3067
    %v3069 = vand.u32 %v3068, 4294901760
    %3070 = vmatpush.msra.mxu0 %v3069
    %v3071 = vand.u32 %v3016, 4294901760
    %3072 = vmatmul.f32.gmra.mxu0 %v3071
    %v3073 = vpop.f32.mrf.mxu0
    %v3074 = vadd.f32 %v3043, %v3073
    %3075 = vdwg.mxu0
    %3076 = vmatpush.msra.mxu0 0.0
    %3077 = vmatpush.msra.mxu0 0.0
    %3078 = vmatpush.msra.mxu0 0.0
    %3079 = vmatpush.msra.mxu0 0.0
    %3080 = vmatpush.msra.mxu0 0.0
    %3081 = vmatpush.msra.mxu0 0.0
    %3082 = vmatpush.msra.mxu0 0.0
    %3083 = vmatpush.msra.mxu0 0.0
    %3084 = vmatpush.msra.mxu0 0.0
    %3085 = vmatpush.msra.mxu0 0.0
    %3086 = vmatpush.msra.mxu0 0.0
    %3087 = vmatpush.msra.mxu0 0.0
    %3088 = vmatpush.msra.mxu0 0.0
    %3089 = vmatpush.msra.mxu0 0.0
    %v3090 = vand.u32 %v573, 4294901760
    %v3091 = vsub.f32 %v573, %v3090
    %3092 = vmatpush.msra.mxu0 %v3091
    %v3093 = vand.u32 %v572, 4294901760
    %v3094 = vsub.f32 %v572, %v3093
    %3095 = vmatpush.msra.mxu0 %v3094
    %v3096 = vand.u32 %v3016, 4294901760
    %v3097 = vsub.f32 %v3016, %v3096
    %3098 = vmatmul.f32.gmra.mxu0 %v3097
    %v3099 = vpop.f32.mrf.mxu0
    %v3100 = vadd.f32 %v3074, %v3099
    %3101 = vdwg.mxu0
    %3102 = vmatpush.msra.mxu0 0.0
    %3103 = vmatpush.msra.mxu0 0.0
    %3104 = vmatpush.msra.mxu0 0.0
    %3105 = vmatpush.msra.mxu0 0.0
    %3106 = vmatpush.msra.mxu0 0.0
    %3107 = vmatpush.msra.mxu0 0.0
    %3108 = vmatpush.msra.mxu0 0.0
    %3109 = vmatpush.msra.mxu0 0.0
    %3110 = vmatpush.msra.mxu0 0.0
    %3111 = vmatpush.msra.mxu0 0.0
    %3112 = vmatpush.msra.mxu0 0.0
    %3113 = vmatpush.msra.mxu0 0.0
    %3114 = vmatpush.msra.mxu0 0.0
    %3115 = vmatpush.msra.mxu0 0.0
    %v3116 = vand.u32 %v573, 4294901760
    %3117 = vmatpush.msra.mxu0 %v3116
    %v3118 = vand.u32 %v572, 4294901760
    %3119 = vmatpush.msra.mxu0 %v3118
    %v3120 = vand.u32 %v3016, 4294901760
    %v3121 = vsub.f32 %v3016, %v3120
    %v3122 = vand.u32 %v3121, 4294901760
    %3123 = vmatmul.f32.gmra.mxu0 %v3122
    %v3124 = vpop.f32.mrf.mxu0
    %v3125 = vadd.f32 %v3100, %v3124
    %3126 = vdwg.mxu0
    %3127 = vmatpush.msra.mxu0 0.0
    %3128 = vmatpush.msra.mxu0 0.0
    %3129 = vmatpush.msra.mxu0 0.0
    %3130 = vmatpush.msra.mxu0 0.0
    %3131 = vmatpush.msra.mxu0 0.0
    %3132 = vmatpush.msra.mxu0 0.0
    %3133 = vmatpush.msra.mxu0 0.0
    %3134 = vmatpush.msra.mxu0 0.0
    %3135 = vmatpush.msra.mxu0 0.0
    %3136 = vmatpush.msra.mxu0 0.0
    %3137 = vmatpush.msra.mxu0 0.0
    %3138 = vmatpush.msra.mxu0 0.0
    %3139 = vmatpush.msra.mxu0 0.0
    %3140 = vmatpush.msra.mxu0 0.0
    %v3141 = vand.u32 %v573, 4294901760
    %v3142 = vsub.f32 %v573, %v3141
    %v3143 = vand.u32 %v3142, 4294901760
    %3144 = vmatpush.msra.mxu0 %v3143
    %v3145 = vand.u32 %v572, 4294901760
    %v3146 = vsub.f32 %v572, %v3145
    %v3147 = vand.u32 %v3146, 4294901760
    %3148 = vmatpush.msra.mxu0 %v3147
    %v3149 = vand.u32 %v3016, 4294901760
    %3150 = vmatmul.f32.gmra.mxu0 %v3149
    %v3151 = vpop.f32.mrf.mxu0
    %v3152 = vadd.f32 %v3125, %v3151
    %3153 = vdwg.mxu0
    %3154 = vmatpush.msra.mxu0 0.0
    %3155 = vmatpush.msra.mxu0 0.0
    %3156 = vmatpush.msra.mxu0 0.0
    %3157 = vmatpush.msra.mxu0 0.0
    %3158 = vmatpush.msra.mxu0 0.0
    %3159 = vmatpush.msra.mxu0 0.0
    %3160 = vmatpush.msra.mxu0 0.0
    %3161 = vmatpush.msra.mxu0 0.0
    %3162 = vmatpush.msra.mxu0 0.0
    %3163 = vmatpush.msra.mxu0 0.0
    %3164 = vmatpush.msra.mxu0 0.0
    %3165 = vmatpush.msra.mxu0 0.0
    %3166 = vmatpush.msra.mxu0 0.0
    %3167 = vmatpush.msra.mxu0 0.0
    %v3168 = vand.u32 %v573, 4294901760
    %3169 = vmatpush.msra.mxu0 %v3168
    %v3170 = vand.u32 %v572, 4294901760
    %3171 = vmatpush.msra.mxu0 %v3170
    %v3172 = vand.u32 %v3016, 4294901760
    %3173 = vmatmul.f32.gmra.mxu0 %v3172
    %v3174 = vpop.f32.mrf.mxu0
    %v3175 = vadd.f32 %v3152, %v3174
    %3176 = vdwg.mxu0
    %3178 = vrot.lane.b32.xlu0 %v3175, 48
    %v3179 = vpop.permute.xlu0 %3178
    %v3181 = vadd.f32 %v2800, %v3179
    %v3182 = vxor.u32 %v3181, 2147483648
    %v3183 = vmul.f32 %v3182, 1.442695
    %v3184 = vpow.pop %v3183
    %v3185 = vadd.f32 %v3184, 1.0
    %v3186 = vrcp.pop %v3185
    %v3187 = vmul.f32 %v3185, %v3186
    %v3188 = vsub.f32 1.0, %v3187
    %v3189 = vmul.f32 %v3186, %v3188
    %v3190 = vadd.f32 %v3186, %v3189
    %vm3191 = vweird.f32 %v3185
    %vm3192 = vweird.f32 %v3186
    %vm3193 = vmor %vm3191, %vm3192
    %v3194 = vsel %vm3193, %v3186, %v3190
    %v3195 = vand.u32 2147483647, %v3185
    %vm3196 = vcmp.eq.f32.partialorder %v3195, 8.507059e+37
    %v3197 = vand.u32 %v3185, 2147483648
    %v3198 = vor.u32 1.1754944e-38, %v3197
    %v3199 = vsel %vm3196, %v3198, %v3194
    %v3200 = vmul.f32 1.0, %v3199
    %v3201 = vadd.f32 %v3175, %v988
    %3203 = vrot.lane.b32.xlu0 %v3201, 16
    %v3204 = vpop.permute.xlu0 %3203
    %v3206 = vmul.f32 %v3200, %v3204
    %3208 = vrot.lane.b32.xlu0 %v3206, 32
    %v3209 = vpop.permute.xlu0 %3208
    %v3211 = vadd.f32 %v2800, %v3209
    %v3212 = vtanh.pop %v3211
    %v3213 = vsub.f32 %v2793, %v3212
    %3215 = vrot.lane.b32.xlu0 %v3213, 112
    %v3216 = vpop.permute.xlu0 %3215
    %v3218 = vmul.f32 %v3200, %v3216
    %3220 = vrot.lane.b32.xlu0 %v3218, 16
    %v3221 = vpop.permute.xlu0 %3220
    %v3223 = vadd.f32 %v3212, %v3221
    %v3224 = vsel %vm1690, %v3223, 0.0
    %3226 = vrot.lane.b32.xlu0 %v3224, 64
    %v3227 = vpop.permute.xlu0 %3226
    %3229 = vst.msk [vmem:[%s1696] sm:$0xff] %vm1025, %v3227
    %v3230 = vld [vmem:[%s1029] sm:$0xff]
    %v3231 = vld [vmem:[%s1027] sm:$0xff]
    %3233 = vrot.lane.b32.xlu0 %v3007, 96
    %v3234 = vpop.permute.xlu0 %3233
    %v3235 = vsel %vm579, %v3234, 0
    %3237 = vmatpush.msra.mxu0 0.0
    %3238 = vmatpush.msra.mxu0 0.0
    %3239 = vmatpush.msra.mxu0 0.0
    %3240 = vmatpush.msra.mxu0 0.0
    %3241 = vmatpush.msra.mxu0 0.0
    %3242 = vmatpush.msra.mxu0 0.0
    %3243 = vmatpush.msra.mxu0 0.0
    %3244 = vmatpush.msra.mxu0 0.0
    %3245 = vmatpush.msra.mxu0 0.0
    %3246 = vmatpush.msra.mxu0 0.0
    %3247 = vmatpush.msra.mxu0 0.0
    %3248 = vmatpush.msra.mxu0 0.0
    %3249 = vmatpush.msra.mxu0 0.0
    %3250 = vmatpush.msra.mxu0 0.0
    %v3251 = vand.u32 %v571, 4294901760
    %3252 = vmatpush.msra.mxu0 %v3251
    %v3253 = vand.u32 %v570, 4294901760
    %3254 = vmatpush.msra.mxu0 %v3253
    %v3255 = vand.u32 %v3235, 4294901760
    %v3256 = vsub.f32 %v3235, %v3255
    %v3257 = vand.u32 %v3256, 4294901760
    %v3258 = vsub.f32 %v3256, %v3257
    %v3259 = vand.u32 %v3258, 4294901760
    %3260 = vmatmul.f32.gmra.mxu0 %v3259
    %v3261 = vpop.f32.mrf.mxu0
    %v3262 = vadd.f32 0.0, %v3261
    %3263 = vdwg.mxu0
    %3264 = vmatpush.msra.mxu0 0.0
    %3265 = vmatpush.msra.mxu0 0.0
    %3266 = vmatpush.msra.mxu0 0.0
    %3267 = vmatpush.msra.mxu0 0.0
    %3268 = vmatpush.msra.mxu0 0.0
    %3269 = vmatpush.msra.mxu0 0.0
    %3270 = vmatpush.msra.mxu0 0.0
    %3271 = vmatpush.msra.mxu0 0.0
    %3272 = vmatpush.msra.mxu0 0.0
    %3273 = vmatpush.msra.mxu0 0.0
    %3274 = vmatpush.msra.mxu0 0.0
    %3275 = vmatpush.msra.mxu0 0.0
    %3276 = vmatpush.msra.mxu0 0.0
    %3277 = vmatpush.msra.mxu0 0.0
    %v3278 = vand.u32 %v571, 4294901760
    %v3279 = vsub.f32 %v571, %v3278
    %v3280 = vand.u32 %v3279, 4294901760
    %v3281 = vsub.f32 %v3279, %v3280
    %v3282 = vand.u32 %v3281, 4294901760
    %3283 = vmatpush.msra.mxu0 %v3282
    %v3284 = vand.u32 %v570, 4294901760
    %v3285 = vsub.f32 %v570, %v3284
    %v3286 = vand.u32 %v3285, 4294901760
    %v3287 = vsub.f32 %v3285, %v3286
    %v3288 = vand.u32 %v3287, 4294901760
    %3289 = vmatpush.msra.mxu0 %v3288
    %v3290 = vand.u32 %v3235, 4294901760
    %3291 = vmatmul.f32.gmra.mxu0 %v3290
    %v3292 = vpop.f32.mrf.mxu0
    %v3293 = vadd.f32 %v3262, %v3292
    %3294 = vdwg.mxu0
    %3295 = vmatpush.msra.mxu0 0.0
    %3296 = vmatpush.msra.mxu0 0.0
    %3297 = vmatpush.msra.mxu0 0.0
    %3298 = vmatpush.msra.mxu0 0.0
    %3299 = vmatpush.msra.mxu0 0.0
    %3300 = vmatpush.msra.mxu0 0.0
    %3301 = vmatpush.msra.mxu0 0.0
    %3302 = vmatpush.msra.mxu0 0.0
    %3303 = vmatpush.msra.mxu0 0.0
    %3304 = vmatpush.msra.mxu0 0.0
    %3305 = vmatpush.msra.mxu0 0.0
    %3306 = vmatpush.msra.mxu0 0.0
    %3307 = vmatpush.msra.mxu0 0.0
    %3308 = vmatpush.msra.mxu0 0.0
    %v3309 = vand.u32 %v571, 4294901760
    %v3310 = vsub.f32 %v571, %v3309
    %3311 = vmatpush.msra.mxu0 %v3310
    %v3312 = vand.u32 %v570, 4294901760
    %v3313 = vsub.f32 %v570, %v3312
    %3314 = vmatpush.msra.mxu0 %v3313
    %v3315 = vand.u32 %v3235, 4294901760
    %v3316 = vsub.f32 %v3235, %v3315
    %3317 = vmatmul.f32.gmra.mxu0 %v3316
    %v3318 = vpop.f32.mrf.mxu0
    %v3319 = vadd.f32 %v3293, %v3318
    %3320 = vdwg.mxu0
    %3321 = vmatpush.msra.mxu0 0.0
    %3322 = vmatpush.msra.mxu0 0.0
    %3323 = vmatpush.msra.mxu0 0.0
    %3324 = vmatpush.msra.mxu0 0.0
    %3325 = vmatpush.msra.mxu0 0.0
    %3326 = vmatpush.msra.mxu0 0.0
    %3327 = vmatpush.msra.mxu0 0.0
    %3328 = vmatpush.msra.mxu0 0.0
    %3329 = vmatpush.msra.mxu0 0.0
    %3330 = vmatpush.msra.mxu0 0.0
    %3331 = vmatpush.msra.mxu0 0.0
    %3332 = vmatpush.msra.mxu0 0.0
    %3333 = vmatpush.msra.mxu0 0.0
    %3334 = vmatpush.msra.mxu0 0.0
    %v3335 = vand.u32 %v571, 4294901760
    %3336 = vmatpush.msra.mxu0 %v3335
    %v3337 = vand.u32 %v570, 4294901760
    %3338 = vmatpush.msra.mxu0 %v3337
    %v3339 = vand.u32 %v3235, 4294901760
    %v3340 = vsub.f32 %v3235, %v3339
    %v3341 = vand.u32 %v3340, 4294901760
    %3342 = vmatmul.f32.gmra.mxu0 %v3341
    %v3343 = vpop.f32.mrf.mxu0
    %v3344 = vadd.f32 %v3319, %v3343
    %3345 = vdwg.mxu0
    %3346 = vmatpush.msra.mxu0 0.0
    %3347 = vmatpush.msra.mxu0 0.0
    %3348 = vmatpush.msra.mxu0 0.0
    %3349 = vmatpush.msra.mxu0 0.0
    %3350 = vmatpush.msra.mxu0 0.0
    %3351 = vmatpush.msra.mxu0 0.0
    %3352 = vmatpush.msra.mxu0 0.0
    %3353 = vmatpush.msra.mxu0 0.0
    %3354 = vmatpush.msra.mxu0 0.0
    %3355 = vmatpush.msra.mxu0 0.0
    %3356 = vmatpush.msra.mxu0 0.0
    %3357 = vmatpush.msra.mxu0 0.0
    %3358 = vmatpush.msra.mxu0 0.0
    %3359 = vmatpush.msra.mxu0 0.0
    %v3360 = vand.u32 %v571, 4294901760
    %v3361 = vsub.f32 %v571, %v3360
    %v3362 = vand.u32 %v3361, 4294901760
    %3363 = vmatpush.msra.mxu0 %v3362
    %v3364 = vand.u32 %v570, 4294901760
    %v3365 = vsub.f32 %v570, %v3364
    %v3366 = vand.u32 %v3365, 4294901760
    %3367 = vmatpush.msra.mxu0 %v3366
    %v3368 = vand.u32 %v3235, 4294901760
    %3369 = vmatmul.f32.gmra.mxu0 %v3368
    %v3370 = vpop.f32.mrf.mxu0
    %v3371 = vadd.f32 %v3344, %v3370
    %3372 = vdwg.mxu0
    %3373 = vmatpush.msra.mxu0 0.0
    %3374 = vmatpush.msra.mxu0 0.0
    %3375 = vmatpush.msra.mxu0 0.0
    %3376 = vmatpush.msra.mxu0 0.0
    %3377 = vmatpush.msra.mxu0 0.0
    %3378 = vmatpush.msra.mxu0 0.0
    %3379 = vmatpush.msra.mxu0 0.0
    %3380 = vmatpush.msra.mxu0 0.0
    %3381 = vmatpush.msra.mxu0 0.0
    %3382 = vmatpush.msra.mxu0 0.0
    %3383 = vmatpush.msra.mxu0 0.0
    %3384 = vmatpush.msra.mxu0 0.0
    %3385 = vmatpush.msra.mxu0 0.0
    %3386 = vmatpush.msra.mxu0 0.0
    %v3387 = vand.u32 %v571, 4294901760
    %3388 = vmatpush.msra.mxu0 %v3387
    %v3389 = vand.u32 %v570, 4294901760
    %3390 = vmatpush.msra.mxu0 %v3389
    %v3391 = vand.u32 %v3235, 4294901760
    %3392 = vmatmul.f32.gmra.mxu0 %v3391
    %v3393 = vpop.f32.mrf.mxu0
    %v3394 = vadd.f32 %v3371, %v3393
    %3395 = vdwg.mxu0
    %v3396 = vadd.f32 %v3230, %v3394
    %v3397 = vxor.u32 %v3396, 2147483648
    %v3398 = vmul.f32 %v3397, 1.442695
    %v3399 = vpow.pop %v3398
    %v3400 = vadd.f32 %v3399, 1.0
    %v3401 = vrcp.pop %v3400
    %v3402 = vmul.f32 %v3400, %v3401
    %v3403 = vsub.f32 1.0, %v3402
    %v3404 = vmul.f32 %v3401, %v3403
    %v3405 = vadd.f32 %v3401, %v3404
    %vm3406 = vweird.f32 %v3400
    %vm3407 = vweird.f32 %v3401
    %vm3408 = vmor %vm3406, %vm3407
    %v3409 = vsel %vm3408, %v3401, %v3405
    %v3410 = vand.u32 2147483647, %v3400
    %vm3411 = vcmp.eq.f32.partialorder %v3410, 8.507059e+37
    %v3412 = vand.u32 %v3400, 2147483648
    %v3413 = vor.u32 1.1754944e-38, %v3412
    %v3414 = vsel %vm3411, %v3413, %v3409
    %v3415 = vmul.f32 1.0, %v3414
    %v3416 = vadd.f32 %v3394, %v765
    %3418 = vrot.lane.b32.xlu0 %v3416, 96
    %v3419 = vpop.permute.xlu0 %3418
    %v3421 = vmul.f32 %v3415, %v3419
    %3423 = vrot.lane.b32.xlu0 %v3421, 32
    %v3424 = vpop.permute.xlu0 %3423
    %v3426 = vadd.f32 %v3230, %v3424
    %v3427 = vtanh.pop %v3426
    %v3428 = vsub.f32 %v3007, %v3427
    %3430 = vrot.lane.b32.xlu0 %v3428, 112
    %v3431 = vpop.permute.xlu0 %3430
    %v3433 = vmul.f32 %v3415, %v3431
    %3435 = vrot.lane.b32.xlu0 %v3433, 16
    %v3436 = vpop.permute.xlu0 %3435
    %v3438 = vadd.f32 %v3427, %v3436
    %v3439 = vsel %vm1466, %v3438, 0.0
    %3441 = vrot.lane.b32.xlu0 %v3439, 96
    %v3442 = vpop.permute.xlu0 %3441
    %3444 = vst.msk [vmem:[%s1472] sm:$0xff] %vm579, %v3442
    %3445 = vrot.lane.b32.xlu0 %v3224, 48
    %v3446 = vpop.permute.xlu0 %3445
    %v3447 = vsel %vm579, %v3446, 0
    %3449 = vmatpush.msra.mxu0 0.0
    %3450 = vmatpush.msra.mxu0 0.0
    %3451 = vmatpush.msra.mxu0 0.0
    %3452 = vmatpush.msra.mxu0 0.0
    %3453 = vmatpush.msra.mxu0 0.0
    %3454 = vmatpush.msra.mxu0 0.0
    %3455 = vmatpush.msra.mxu0 0.0
    %3456 = vmatpush.msra.mxu0 0.0
    %3457 = vmatpush.msra.mxu0 0.0
    %3458 = vmatpush.msra.mxu0 0.0
    %3459 = vmatpush.msra.mxu0 0.0
    %3460 = vmatpush.msra.mxu0 0.0
    %3461 = vmatpush.msra.mxu0 0.0
    %3462 = vmatpush.msra.mxu0 0.0
    %v3463 = vand.u32 %v573, 4294901760
    %3464 = vmatpush.msra.mxu0 %v3463
    %v3465 = vand.u32 %v572, 4294901760
    %3466 = vmatpush.msra.mxu0 %v3465
    %v3467 = vand.u32 %v3447, 4294901760
    %v3468 = vsub.f32 %v3447, %v3467
    %v3469 = vand.u32 %v3468, 4294901760
    %v3470 = vsub.f32 %v3468, %v3469
    %v3471 = vand.u32 %v3470, 4294901760
    %3472 = vmatmul.f32.gmra.mxu0 %v3471
    %v3473 = vpop.f32.mrf.mxu0
    %v3474 = vadd.f32 0.0, %v3473
    %3475 = vdwg.mxu0
    %3476 = vmatpush.msra.mxu0 0.0
    %3477 = vmatpush.msra.mxu0 0.0
    %3478 = vmatpush.msra.mxu0 0.0
    %3479 = vmatpush.msra.mxu0 0.0
    %3480 = vmatpush.msra.mxu0 0.0
    %3481 = vmatpush.msra.mxu0 0.0
    %3482 = vmatpush.msra.mxu0 0.0
    %3483 = vmatpush.msra.mxu0 0.0
    %3484 = vmatpush.msra.mxu0 0.0
    %3485 = vmatpush.msra.mxu0 0.0
    %3486 = vmatpush.msra.mxu0 0.0
    %3487 = vmatpush.msra.mxu0 0.0
    %3488 = vmatpush.msra.mxu0 0.0
    %3489 = vmatpush.msra.mxu0 0.0
    %v3490 = vand.u32 %v573, 4294901760
    %v3491 = vsub.f32 %v573, %v3490
    %v3492 = vand.u32 %v3491, 4294901760
    %v3493 = vsub.f32 %v3491, %v3492
    %v3494 = vand.u32 %v3493, 4294901760
    %3495 = vmatpush.msra.mxu0 %v3494
    %v3496 = vand.u32 %v572, 4294901760
    %v3497 = vsub.f32 %v572, %v3496
    %v3498 = vand.u32 %v3497, 4294901760
    %v3499 = vsub.f32 %v3497, %v3498
    %v3500 = vand.u32 %v3499, 4294901760
    %3501 = vmatpush.msra.mxu0 %v3500
    %v3502 = vand.u32 %v3447, 4294901760
    %3503 = vmatmul.f32.gmra.mxu0 %v3502
    %v3504 = vpop.f32.mrf.mxu0
    %v3505 = vadd.f32 %v3474, %v3504
    %3506 = vdwg.mxu0
    %3507 = vmatpush.msra.mxu0 0.0
    %3508 = vmatpush.msra.mxu0 0.0
    %3509 = vmatpush.msra.mxu0 0.0
    %3510 = vmatpush.msra.mxu0 0.0
    %3511 = vmatpush.msra.mxu0 0.0
    %3512 = vmatpush.msra.mxu0 0.0
    %3513 = vmatpush.msra.mxu0 0.0
    %3514 = vmatpush.msra.mxu0 0.0
    %3515 = vmatpush.msra.mxu0 0.0
    %3516 = vmatpush.msra.mxu0 0.0
    %3517 = vmatpush.msra.mxu0 0.0
    %3518 = vmatpush.msra.mxu0 0.0
    %3519 = vmatpush.msra.mxu0 0.0
    %3520 = vmatpush.msra.mxu0 0.0
    %v3521 = vand.u32 %v573, 4294901760
    %v3522 = vsub.f32 %v573, %v3521
    %3523 = vmatpush.msra.mxu0 %v3522
    %v3524 = vand.u32 %v572, 4294901760
    %v3525 = vsub.f32 %v572, %v3524
    %3526 = vmatpush.msra.mxu0 %v3525
    %v3527 = vand.u32 %v3447, 4294901760
    %v3528 = vsub.f32 %v3447, %v3527
    %3529 = vmatmul.f32.gmra.mxu0 %v3528
    %v3530 = vpop.f32.mrf.mxu0
    %v3531 = vadd.f32 %v3505, %v3530
    %3532 = vdwg.mxu0
    %3533 = vmatpush.msra.mxu0 0.0
    %3534 = vmatpush.msra.mxu0 0.0
    %3535 = vmatpush.msra.mxu0 0.0
    %3536 = vmatpush.msra.mxu0 0.0
    %3537 = vmatpush.msra.mxu0 0.0
    %3538 = vmatpush.msra.mxu0 0.0
    %3539 = vmatpush.msra.mxu0 0.0
    %3540 = vmatpush.msra.mxu0 0.0
    %3541 = vmatpush.msra.mxu0 0.0
    %3542 = vmatpush.msra.mxu0 0.0
    %3543 = vmatpush.msra.mxu0 0.0
    %3544 = vmatpush.msra.mxu0 0.0
    %3545 = vmatpush.msra.mxu0 0.0
    %3546 = vmatpush.msra.mxu0 0.0
    %v3547 = vand.u32 %v573, 4294901760
    %3548 = vmatpush.msra.mxu0 %v3547
    %v3549 = vand.u32 %v572, 4294901760
    %3550 = vmatpush.msra.mxu0 %v3549
    %v3551 = vand.u32 %v3447, 4294901760
    %v3552 = vsub.f32 %v3447, %v3551
    %v3553 = vand.u32 %v3552, 4294901760
    %3554 = vmatmul.f32.gmra.mxu0 %v3553
    %v3555 = vpop.f32.mrf.mxu0
    %v3556 = vadd.f32 %v3531, %v3555
    %3557 = vdwg.mxu0
    %3558 = vmatpush.msra.mxu0 0.0
    %3559 = vmatpush.msra.mxu0 0.0
    %3560 = vmatpush.msra.mxu0 0.0
    %3561 = vmatpush.msra.mxu0 0.0
    %3562 = vmatpush.msra.mxu0 0.0
    %3563 = vmatpush.msra.mxu0 0.0
    %3564 = vmatpush.msra.mxu0 0.0
    %3565 = vmatpush.msra.mxu0 0.0
    %3566 = vmatpush.msra.mxu0 0.0
    %3567 = vmatpush.msra.mxu0 0.0
    %3568 = vmatpush.msra.mxu0 0.0
    %3569 = vmatpush.msra.mxu0 0.0
    %3570 = vmatpush.msra.mxu0 0.0
    %3571 = vmatpush.msra.mxu0 0.0
    %v3572 = vand.u32 %v573, 4294901760
    %v3573 = vsub.f32 %v573, %v3572
    %v3574 = vand.u32 %v3573, 4294901760
    %3575 = vmatpush.msra.mxu0 %v3574
    %v3576 = vand.u32 %v572, 4294901760
    %v3577 = vsub.f32 %v572, %v3576
    %v3578 = vand.u32 %v3577, 4294901760
    %3579 = vmatpush.msra.mxu0 %v3578
    %v3580 = vand.u32 %v3447, 4294901760
    %3581 = vmatmul.f32.gmra.mxu0 %v3580
    %v3582 = vpop.f32.mrf.mxu0
    %v3583 = vadd.f32 %v3556, %v3582
    %3584 = vdwg.mxu0
    %3585 = vmatpush.msra.mxu0 0.0
    %3586 = vmatpush.msra.mxu0 0.0
    %3587 = vmatpush.msra.mxu0 0.0
    %3588 = vmatpush.msra.mxu0 0.0
    %3589 = vmatpush.msra.mxu0 0.0
    %3590 = vmatpush.msra.mxu0 0.0
    %3591 = vmatpush.msra.mxu0 0.0
    %3592 = vmatpush.msra.mxu0 0.0
    %3593 = vmatpush.msra.mxu0 0.0
    %3594 = vmatpush.msra.mxu0 0.0
    %3595 = vmatpush.msra.mxu0 0.0
    %3596 = vmatpush.msra.mxu0 0.0
    %3597 = vmatpush.msra.mxu0 0.0
    %3598 = vmatpush.msra.mxu0 0.0
    %v3599 = vand.u32 %v573, 4294901760
    %3600 = vmatpush.msra.mxu0 %v3599
    %v3601 = vand.u32 %v572, 4294901760
    %3602 = vmatpush.msra.mxu0 %v3601
    %v3603 = vand.u32 %v3447, 4294901760
    %3604 = vmatmul.f32.gmra.mxu0 %v3603
    %v3605 = vpop.f32.mrf.mxu0
    %v3606 = vadd.f32 %v3583, %v3605
    %3607 = vdwg.mxu0
    %3609 = vrot.lane.b32.xlu0 %v3606, 48
    %v3610 = vpop.permute.xlu0 %3609
    %v3612 = vadd.f32 %v3231, %v3610
    %v3613 = vxor.u32 %v3612, 2147483648
    %v3614 = vmul.f32 %v3613, 1.442695
    %v3615 = vpow.pop %v3614
    %v3616 = vadd.f32 %v3615, 1.0
    %v3617 = vrcp.pop %v3616
    %v3618 = vmul.f32 %v3616, %v3617
    %v3619 = vsub.f32 1.0, %v3618
    %v3620 = vmul.f32 %v3617, %v3619
    %v3621 = vadd.f32 %v3617, %v3620
    %vm3622 = vweird.f32 %v3616
    %vm3623 = vweird.f32 %v3617
    %vm3624 = vmor %vm3622, %vm3623
    %v3625 = vsel %vm3624, %v3617, %v3621
    %v3626 = vand.u32 2147483647, %v3616
    %vm3627 = vcmp.eq.f32.partialorder %v3626, 8.507059e+37
    %v3628 = vand.u32 %v3616, 2147483648
    %v3629 = vor.u32 1.1754944e-38, %v3628
    %v3630 = vsel %vm3627, %v3629, %v3625
    %v3631 = vmul.f32 1.0, %v3630
    %v3632 = vadd.f32 %v3606, %v988
    %3634 = vrot.lane.b32.xlu0 %v3632, 16
    %v3635 = vpop.permute.xlu0 %3634
    %v3637 = vmul.f32 %v3631, %v3635
    %3639 = vrot.lane.b32.xlu0 %v3637, 32
    %v3640 = vpop.permute.xlu0 %3639
    %v3642 = vadd.f32 %v3231, %v3640
    %v3643 = vtanh.pop %v3642
    %v3644 = vsub.f32 %v3224, %v3643
    %3646 = vrot.lane.b32.xlu0 %v3644, 112
    %v3647 = vpop.permute.xlu0 %3646
    %v3649 = vmul.f32 %v3631, %v3647
    %3651 = vrot.lane.b32.xlu0 %v3649, 16
    %v3652 = vpop.permute.xlu0 %3651
    %v3654 = vadd.f32 %v3643, %v3652
    %v3655 = vsel %vm1243, %v3654, 0.0
    %3657 = vrot.lane.b32.xlu0 %v3655, 64
    %v3658 = vpop.permute.xlu0 %3657
    %3660 = vst.msk [vmem:[%s1249] sm:$0xff] %vm1025, %v3658
    %v3661 = vld [vmem:[%s577] sm:$0xff]
    %v3662 = vld [vmem:[#allocation2] sm:$0xff]
    %3664 = vrot.lane.b32.xlu0 %v3438, 96
    %v3665 = vpop.permute.xlu0 %3664
    %v3666 = vsel %vm579, %v3665, 0
    %3668 = vmatpush.msra.mxu0 0.0
    %3669 = vmatpush.msra.mxu0 0.0
    %3670 = vmatpush.msra.mxu0 0.0
    %3671 = vmatpush.msra.mxu0 0.0
    %3672 = vmatpush.msra.mxu0 0.0
    %3673 = vmatpush.msra.mxu0 0.0
    %3674 = vmatpush.msra.mxu0 0.0
    %3675 = vmatpush.msra.mxu0 0.0
    %3676 = vmatpush.msra.mxu0 0.0
    %3677 = vmatpush.msra.mxu0 0.0
    %3678 = vmatpush.msra.mxu0 0.0
    %3679 = vmatpush.msra.mxu0 0.0
    %3680 = vmatpush.msra.mxu0 0.0
    %3681 = vmatpush.msra.mxu0 0.0
    %v3682 = vand.u32 %v571, 4294901760
    %3683 = vmatpush.msra.mxu0 %v3682
    %v3684 = vand.u32 %v570, 4294901760
    %3685 = vmatpush.msra.mxu0 %v3684
    %v3686 = vand.u32 %v3666, 4294901760
    %v3687 = vsub.f32 %v3666, %v3686
    %v3688 = vand.u32 %v3687, 4294901760
    %v3689 = vsub.f32 %v3687, %v3688
    %v3690 = vand.u32 %v3689, 4294901760
    %3691 = vmatmul.f32.gmra.mxu0 %v3690
    %v3692 = vpop.f32.mrf.mxu0
    %v3693 = vadd.f32 0.0, %v3692
    %3694 = vdwg.mxu0
    %3695 = vmatpush.msra.mxu0 0.0
    %3696 = vmatpush.msra.mxu0 0.0
    %3697 = vmatpush.msra.mxu0 0.0
    %3698 = vmatpush.msra.mxu0 0.0
    %3699 = vmatpush.msra.mxu0 0.0
    %3700 = vmatpush.msra.mxu0 0.0
    %3701 = vmatpush.msra.mxu0 0.0
    %3702 = vmatpush.msra.mxu0 0.0
    %3703 = vmatpush.msra.mxu0 0.0
    %3704 = vmatpush.msra.mxu0 0.0
    %3705 = vmatpush.msra.mxu0 0.0
    %3706 = vmatpush.msra.mxu0 0.0
    %3707 = vmatpush.msra.mxu0 0.0
    %3708 = vmatpush.msra.mxu0 0.0
    %v3709 = vand.u32 %v571, 4294901760
    %v3710 = vsub.f32 %v571, %v3709
    %v3711 = vand.u32 %v3710, 4294901760
    %v3712 = vsub.f32 %v3710, %v3711
    %v3713 = vand.u32 %v3712, 4294901760
    %3714 = vmatpush.msra.mxu0 %v3713
    %v3715 = vand.u32 %v570, 4294901760
    %v3716 = vsub.f32 %v570, %v3715
    %v3717 = vand.u32 %v3716, 4294901760
    %v3718 = vsub.f32 %v3716, %v3717
    %v3719 = vand.u32 %v3718, 4294901760
    %3720 = vmatpush.msra.mxu0 %v3719
    %v3721 = vand.u32 %v3666, 4294901760
    %3722 = vmatmul.f32.gmra.mxu0 %v3721
    %v3723 = vpop.f32.mrf.mxu0
    %v3724 = vadd.f32 %v3693, %v3723
    %3725 = vdwg.mxu0
    %3726 = vmatpush.msra.mxu0 0.0
    %3727 = vmatpush.msra.mxu0 0.0
    %3728 = vmatpush.msra.mxu0 0.0
    %3729 = vmatpush.msra.mxu0 0.0
    %3730 = vmatpush.msra.mxu0 0.0
    %3731 = vmatpush.msra.mxu0 0.0
    %3732 = vmatpush.msra.mxu0 0.0
    %3733 = vmatpush.msra.mxu0 0.0
    %3734 = vmatpush.msra.mxu0 0.0
    %3735 = vmatpush.msra.mxu0 0.0
    %3736 = vmatpush.msra.mxu0 0.0
    %3737 = vmatpush.msra.mxu0 0.0
    %3738 = vmatpush.msra.mxu0 0.0
    %3739 = vmatpush.msra.mxu0 0.0
    %v3740 = vand.u32 %v571, 4294901760
    %v3741 = vsub.f32 %v571, %v3740
    %3742 = vmatpush.msra.mxu0 %v3741
    %v3743 = vand.u32 %v570, 4294901760
    %v3744 = vsub.f32 %v570, %v3743
    %3745 = vmatpush.msra.mxu0 %v3744
    %v3746 = vand.u32 %v3666, 4294901760
    %v3747 = vsub.f32 %v3666, %v3746
    %3748 = vmatmul.f32.gmra.mxu0 %v3747
    %v3749 = vpop.f32.mrf.mxu0
    %v3750 = vadd.f32 %v3724, %v3749
    %3751 = vdwg.mxu0
    %3752 = vmatpush.msra.mxu0 0.0
    %3753 = vmatpush.msra.mxu0 0.0
    %3754 = vmatpush.msra.mxu0 0.0
    %3755 = vmatpush.msra.mxu0 0.0
    %3756 = vmatpush.msra.mxu0 0.0
    %3757 = vmatpush.msra.mxu0 0.0
    %3758 = vmatpush.msra.mxu0 0.0
    %3759 = vmatpush.msra.mxu0 0.0
    %3760 = vmatpush.msra.mxu0 0.0
    %3761 = vmatpush.msra.mxu0 0.0
    %3762 = vmatpush.msra.mxu0 0.0
    %3763 = vmatpush.msra.mxu0 0.0
    %3764 = vmatpush.msra.mxu0 0.0
    %3765 = vmatpush.msra.mxu0 0.0
    %v3766 = vand.u32 %v571, 4294901760
    %3767 = vmatpush.msra.mxu0 %v3766
    %v3768 = vand.u32 %v570, 4294901760
    %3769 = vmatpush.msra.mxu0 %v3768
    %v3770 = vand.u32 %v3666, 4294901760
    %v3771 = vsub.f32 %v3666, %v3770
    %v3772 = vand.u32 %v3771, 4294901760
    %3773 = vmatmul.f32.gmra.mxu0 %v3772
    %v3774 = vpop.f32.mrf.mxu0
    %v3775 = vadd.f32 %v3750, %v3774
    %3776 = vdwg.mxu0
    %3777 = vmatpush.msra.mxu0 0.0
    %3778 = vmatpush.msra.mxu0 0.0
    %3779 = vmatpush.msra.mxu0 0.0
    %3780 = vmatpush.msra.mxu0 0.0
    %3781 = vmatpush.msra.mxu0 0.0
    %3782 = vmatpush.msra.mxu0 0.0
    %3783 = vmatpush.msra.mxu0 0.0
    %3784 = vmatpush.msra.mxu0 0.0
    %3785 = vmatpush.msra.mxu0 0.0
    %3786 = vmatpush.msra.mxu0 0.0
    %3787 = vmatpush.msra.mxu0 0.0
    %3788 = vmatpush.msra.mxu0 0.0
    %3789 = vmatpush.msra.mxu0 0.0
    %3790 = vmatpush.msra.mxu0 0.0
    %v3791 = vand.u32 %v571, 4294901760
    %v3792 = vsub.f32 %v571, %v3791
    %v3793 = vand.u32 %v3792, 4294901760
    %3794 = vmatpush.msra.mxu0 %v3793
    %v3795 = vand.u32 %v570, 4294901760
    %v3796 = vsub.f32 %v570, %v3795
    %v3797 = vand.u32 %v3796, 4294901760
    %3798 = vmatpush.msra.mxu0 %v3797
    %v3799 = vand.u32 %v3666, 4294901760
    %3800 = vmatmul.f32.gmra.mxu0 %v3799
    %v3801 = vpop.f32.mrf.mxu0
    %v3802 = vadd.f32 %v3775, %v3801
    %3803 = vdwg.mxu0
    %3804 = vmatpush.msra.mxu0 0.0
    %3805 = vmatpush.msra.mxu0 0.0
    %3806 = vmatpush.msra.mxu0 0.0
    %3807 = vmatpush.msra.mxu0 0.0
    %3808 = vmatpush.msra.mxu0 0.0
    %3809 = vmatpush.msra.mxu0 0.0
    %3810 = vmatpush.msra.mxu0 0.0
    %3811 = vmatpush.msra.mxu0 0.0
    %3812 = vmatpush.msra.mxu0 0.0
    %3813 = vmatpush.msra.mxu0 0.0
    %3814 = vmatpush.msra.mxu0 0.0
    %3815 = vmatpush.msra.mxu0 0.0
    %3816 = vmatpush.msra.mxu0 0.0
    %3817 = vmatpush.msra.mxu0 0.0
    %v3818 = vand.u32 %v571, 4294901760
    %3819 = vmatpush.msra.mxu0 %v3818
    %v3820 = vand.u32 %v570, 4294901760
    %3821 = vmatpush.msra.mxu0 %v3820
    %v3822 = vand.u32 %v3666, 4294901760
    %3823 = vmatmul.f32.gmra.mxu0 %v3822
    %v3824 = vpop.f32.mrf.mxu0
    %v3825 = vadd.f32 %v3802, %v3824
    %3826 = vdwg.mxu0
    %v3827 = vadd.f32 %v3661, %v3825
    %v3828 = vxor.u32 %v3827, 2147483648
    %v3829 = vmul.f32 %v3828, 1.442695
    %v3830 = vpow.pop %v3829
    %v3831 = vadd.f32 %v3830, 1.0
    %v3832 = vrcp.pop %v3831
    %v3833 = vmul.f32 %v3831, %v3832
    %v3834 = vsub.f32 1.0, %v3833
    %v3835 = vmul.f32 %v3832, %v3834
    %v3836 = vadd.f32 %v3832, %v3835
    %vm3837 = vweird.f32 %v3831
    %vm3838 = vweird.f32 %v3832
    %vm3839 = vmor %vm3837, %vm3838
    %v3840 = vsel %vm3839, %v3832, %v3836
    %v3841 = vand.u32 2147483647, %v3831
    %vm3842 = vcmp.eq.f32.partialorder %v3841, 8.507059e+37
    %v3843 = vand.u32 %v3831, 2147483648
    %v3844 = vor.u32 1.1754944e-38, %v3843
    %v3845 = vsel %vm3842, %v3844, %v3840
    %v3846 = vmul.f32 1.0, %v3845
    %v3847 = vadd.f32 %v3825, %v765
    %3849 = vrot.lane.b32.xlu0 %v3847, 96
    %v3850 = vpop.permute.xlu0 %3849
    %v3852 = vmul.f32 %v3846, %v3850
    %3854 = vrot.lane.b32.xlu0 %v3852, 32
    %v3855 = vpop.permute.xlu0 %3854
    %v3857 = vadd.f32 %v3661, %v3855
    %v3858 = vtanh.pop %v3857
    %v3859 = vsub.f32 %v3438, %v3858
    %3861 = vrot.lane.b32.xlu0 %v3859, 112
    %v3862 = vpop.permute.xlu0 %3861
    %v3864 = vmul.f32 %v3846, %v3862
    %3866 = vrot.lane.b32.xlu0 %v3864, 16
    %v3867 = vpop.permute.xlu0 %3866
    %v3869 = vadd.f32 %v3858, %v3867
    %v3870 = vsel %vm1018, %v3869, 0.0
    %3872 = vrot.lane.b32.xlu0 %v3870, 96
    %v3873 = vpop.permute.xlu0 %3872
    %3875 = vst.msk [vmem:[%s1024] sm:$0xff] %vm579, %v3873
    %3876 = vrot.lane.b32.xlu0 %v3655, 48
    %v3877 = vpop.permute.xlu0 %3876
    %v3878 = vsel %vm579, %v3877, 0
    %3880 = vmatpush.msra.mxu0 0.0
    %3881 = vmatpush.msra.mxu0 0.0
    %3882 = vmatpush.msra.mxu0 0.0
    %3883 = vmatpush.msra.mxu0 0.0
    %3884 = vmatpush.msra.mxu0 0.0
    %3885 = vmatpush.msra.mxu0 0.0
    %3886 = vmatpush.msra.mxu0 0.0
    %3887 = vmatpush.msra.mxu0 0.0
    %3888 = vmatpush.msra.mxu0 0.0
    %3889 = vmatpush.msra.mxu0 0.0
    %3890 = vmatpush.msra.mxu0 0.0
    %3891 = vmatpush.msra.mxu0 0.0
    %3892 = vmatpush.msra.mxu0 0.0
    %3893 = vmatpush.msra.mxu0 0.0
    %v3894 = vand.u32 %v573, 4294901760
    %3895 = vmatpush.msra.mxu0 %v3894
    %v3896 = vand.u32 %v572, 4294901760
    %3897 = vmatpush.msra.mxu0 %v3896
    %v3898 = vand.u32 %v3878, 4294901760
    %v3899 = vsub.f32 %v3878, %v3898
    %v3900 = vand.u32 %v3899, 4294901760
    %v3901 = vsub.f32 %v3899, %v3900
    %v3902 = vand.u32 %v3901, 4294901760
    %3903 = vmatmul.f32.gmra.mxu0 %v3902
    %v3904 = vpop.f32.mrf.mxu0
    %v3905 = vadd.f32 0.0, %v3904
    %3906 = vdwg.mxu0
    %3907 = vmatpush.msra.mxu0 0.0
    %3908 = vmatpush.msra.mxu0 0.0
    %3909 = vmatpush.msra.mxu0 0.0
    %3910 = vmatpush.msra.mxu0 0.0
    %3911 = vmatpush.msra.mxu0 0.0
    %3912 = vmatpush.msra.mxu0 0.0
    %3913 = vmatpush.msra.mxu0 0.0
    %3914 = vmatpush.msra.mxu0 0.0
    %3915 = vmatpush.msra.mxu0 0.0
    %3916 = vmatpush.msra.mxu0 0.0
    %3917 = vmatpush.msra.mxu0 0.0
    %3918 = vmatpush.msra.mxu0 0.0
    %3919 = vmatpush.msra.mxu0 0.0
    %3920 = vmatpush.msra.mxu0 0.0
    %v3921 = vand.u32 %v573, 4294901760
    %v3922 = vsub.f32 %v573, %v3921
    %v3923 = vand.u32 %v3922, 4294901760
    %v3924 = vsub.f32 %v3922, %v3923
    %v3925 = vand.u32 %v3924, 4294901760
    %3926 = vmatpush.msra.mxu0 %v3925
    %v3927 = vand.u32 %v572, 4294901760
    %v3928 = vsub.f32 %v572, %v3927
    %v3929 = vand.u32 %v3928, 4294901760
    %v3930 = vsub.f32 %v3928, %v3929
    %v3931 = vand.u32 %v3930, 4294901760
    %3932 = vmatpush.msra.mxu0 %v3931
    %v3933 = vand.u32 %v3878, 4294901760
    %3934 = vmatmul.f32.gmra.mxu0 %v3933
    %v3935 = vpop.f32.mrf.mxu0
    %v3936 = vadd.f32 %v3905, %v3935
    %3937 = vdwg.mxu0
    %3938 = vmatpush.msra.mxu0 0.0
    %3939 = vmatpush.msra.mxu0 0.0
    %3940 = vmatpush.msra.mxu0 0.0
    %3941 = vmatpush.msra.mxu0 0.0
    %3942 = vmatpush.msra.mxu0 0.0
    %3943 = vmatpush.msra.mxu0 0.0
    %3944 = vmatpush.msra.mxu0 0.0
    %3945 = vmatpush.msra.mxu0 0.0
    %3946 = vmatpush.msra.mxu0 0.0
    %3947 = vmatpush.msra.mxu0 0.0
    %3948 = vmatpush.msra.mxu0 0.0
    %3949 = vmatpush.msra.mxu0 0.0
    %3950 = vmatpush.msra.mxu0 0.0
    %3951 = vmatpush.msra.mxu0 0.0
    %v3952 = vand.u32 %v573, 4294901760
    %v3953 = vsub.f32 %v573, %v3952
    %3954 = vmatpush.msra.mxu0 %v3953
    %v3955 = vand.u32 %v572, 4294901760
    %v3956 = vsub.f32 %v572, %v3955
    %3957 = vmatpush.msra.mxu0 %v3956
    %v3958 = vand.u32 %v3878, 4294901760
    %v3959 = vsub.f32 %v3878, %v3958
    %3960 = vmatmul.f32.gmra.mxu0 %v3959
    %v3961 = vpop.f32.mrf.mxu0
    %v3962 = vadd.f32 %v3936, %v3961
    %3963 = vdwg.mxu0
    %3964 = vmatpush.msra.mxu0 0.0
    %3965 = vmatpush.msra.mxu0 0.0
    %3966 = vmatpush.msra.mxu0 0.0
    %3967 = vmatpush.msra.mxu0 0.0
    %3968 = vmatpush.msra.mxu0 0.0
    %3969 = vmatpush.msra.mxu0 0.0
    %3970 = vmatpush.msra.mxu0 0.0
    %3971 = vmatpush.msra.mxu0 0.0
    %3972 = vmatpush.msra.mxu0 0.0
    %3973 = vmatpush.msra.mxu0 0.0
    %3974 = vmatpush.msra.mxu0 0.0
    %3975 = vmatpush.msra.mxu0 0.0
    %3976 = vmatpush.msra.mxu0 0.0
    %3977 = vmatpush.msra.mxu0 0.0
    %v3978 = vand.u32 %v573, 4294901760
    %3979 = vmatpush.msra.mxu0 %v3978
    %v3980 = vand.u32 %v572, 4294901760
    %3981 = vmatpush.msra.mxu0 %v3980
    %v3982 = vand.u32 %v3878, 4294901760
    %v3983 = vsub.f32 %v3878, %v3982
    %v3984 = vand.u32 %v3983, 4294901760
    %3985 = vmatmul.f32.gmra.mxu0 %v3984
    %v3986 = vpop.f32.mrf.mxu0
    %v3987 = vadd.f32 %v3962, %v3986
    %3988 = vdwg.mxu0
    %3989 = vmatpush.msra.mxu0 0.0
    %3990 = vmatpush.msra.mxu0 0.0
    %3991 = vmatpush.msra.mxu0 0.0
    %3992 = vmatpush.msra.mxu0 0.0
    %3993 = vmatpush.msra.mxu0 0.0
    %3994 = vmatpush.msra.mxu0 0.0
    %3995 = vmatpush.msra.mxu0 0.0
    %3996 = vmatpush.msra.mxu0 0.0
    %3997 = vmatpush.msra.mxu0 0.0
    %3998 = vmatpush.msra.mxu0 0.0
    %3999 = vmatpush.msra.mxu0 0.0
    %4000 = vmatpush.msra.mxu0 0.0
    %4001 = vmatpush.msra.mxu0 0.0
    %4002 = vmatpush.msra.mxu0 0.0
    %v4003 = vand.u32 %v573, 4294901760
    %v4004 = vsub.f32 %v573, %v4003
    %v4005 = vand.u32 %v4004, 4294901760
    %4006 = vmatpush.msra.mxu0 %v4005
    %v4007 = vand.u32 %v572, 4294901760
    %v4008 = vsub.f32 %v572, %v4007
    %v4009 = vand.u32 %v4008, 4294901760
    %4010 = vmatpush.msra.mxu0 %v4009
    %v4011 = vand.u32 %v3878, 4294901760
    %4012 = vmatmul.f32.gmra.mxu0 %v4011
    %v4013 = vpop.f32.mrf.mxu0
    %v4014 = vadd.f32 %v3987, %v4013
    %4015 = vdwg.mxu0
    %4016 = vmatpush.msra.mxu0 0.0
    %4017 = vmatpush.msra.mxu0 0.0
    %4018 = vmatpush.msra.mxu0 0.0
    %4019 = vmatpush.msra.mxu0 0.0
    %4020 = vmatpush.msra.mxu0 0.0
    %4021 = vmatpush.msra.mxu0 0.0
    %4022 = vmatpush.msra.mxu0 0.0
    %4023 = vmatpush.msra.mxu0 0.0
    %4024 = vmatpush.msra.mxu0 0.0
    %4025 = vmatpush.msra.mxu0 0.0
    %4026 = vmatpush.msra.mxu0 0.0
    %4027 = vmatpush.msra.mxu0 0.0
    %4028 = vmatpush.msra.mxu0 0.0
    %4029 = vmatpush.msra.mxu0 0.0
    %v4030 = vand.u32 %v573, 4294901760
    %4031 = vmatpush.msra.mxu0 %v4030
    %v4032 = vand.u32 %v572, 4294901760
    %4033 = vmatpush.msra.mxu0 %v4032
    %v4034 = vand.u32 %v3878, 4294901760
    %4035 = vmatmul.f32.gmra.mxu0 %v4034
    %v4036 = vpop.f32.mrf.mxu0
    %v4037 = vadd.f32 %v4014, %v4036
    %4038 = vdwg.mxu0
    %4040 = vrot.lane.b32.xlu0 %v4037, 48
    %v4041 = vpop.permute.xlu0 %4040
    %v4043 = vadd.f32 %v3662, %v4041
    %v4044 = vxor.u32 %v4043, 2147483648
    %v4045 = vmul.f32 %v4044, 1.442695
    %v4046 = vpow.pop %v4045
    %v4047 = vadd.f32 %v4046, 1.0
    %v4048 = vrcp.pop %v4047
    %v4049 = vmul.f32 %v4047, %v4048
    %v4050 = vsub.f32 1.0, %v4049
    %v4051 = vmul.f32 %v4048, %v4050
    %v4052 = vadd.f32 %v4048, %v4051
    %vm4053 = vweird.f32 %v4047
    %vm4054 = vweird.f32 %v4048
    %vm4055 = vmor %vm4053, %vm4054
    %v4056 = vsel %vm4055, %v4048, %v4052
    %v4057 = vand.u32 2147483647, %v4047
    %vm4058 = vcmp.eq.f32.partialorder %v4057, 8.507059e+37
    %v4059 = vand.u32 %v4047, 2147483648
    %v4060 = vor.u32 1.1754944e-38, %v4059
    %v4061 = vsel %vm4058, %v4060, %v4056
    %v4062 = vmul.f32 1.0, %v4061
    %v4063 = vadd.f32 %v4037, %v988
    %4065 = vrot.lane.b32.xlu0 %v4063, 16
    %v4066 = vpop.permute.xlu0 %4065
    %v4068 = vmul.f32 %v4062, %v4066
    %4070 = vrot.lane.b32.xlu0 %v4068, 32
    %v4071 = vpop.permute.xlu0 %4070
    %v4073 = vadd.f32 %v3662, %v4071
    %v4074 = vtanh.pop %v4073
    %v4075 = vsub.f32 %v3655, %v4074
    %4077 = vrot.lane.b32.xlu0 %v4075, 112
    %v4078 = vpop.permute.xlu0 %4077
    %v4080 = vmul.f32 %v4062, %v4078
    %4082 = vrot.lane.b32.xlu0 %v4080, 16
    %v4083 = vpop.permute.xlu0 %4082
    %v4085 = vadd.f32 %v4074, %v4083
    %v4086 = vsel %vm795, %v4085, 0.0
    %4088 = vrot.lane.b32.xlu0 %v4086, 64
    %v4089 = vpop.permute.xlu0 %4088
    %4091 = vst.msk [vmem:[#allocation3] sm:$0xff] %vm1025, %v4089
    %v4092 = vld [vmem:[#allocation3] sm:$0xff]
    %v4093 = vld [vmem:[#allocation3 + $0x8] sm:$0xff]
    %v4094 = vld [vmem:[#allocation3 + $0x10] sm:$0xff]
    %v4095 = vld [vmem:[#allocation3 + $0x18] sm:$0xff]
    %v4096 = vld [vmem:[#allocation3 + $0x20] sm:$0xff]
    %v4097 = vld [vmem:[#allocation3 + $0x28] sm:$0xff]
    %v4098 = vld [vmem:[#allocation3 + $0x30] sm:$0xff]
    %v4099 = vld [vmem:[#allocation3 + $0x38] sm:$0xff]
    %v4100 = vld [vmem:[#allocation12] sm:$0xff]
    %v4101 = vld [vmem:[#allocation12 + $0x8] sm:$0xff]
    %v4102 = vld [vmem:[#allocation12 + $0x10] sm:$0xff]
    %v4103 = vld [vmem:[#allocation12 + $0x18] sm:$0xff]
    %v4104 = vld [vmem:[%s9] sm:$0x1]
    %v4106 = vperm.slane %v4104, 0
    %v4109 = vsel %vm134, %v4092, 0
    %v4112 = vsel %vm134, %v4093, 0
    %v4115 = vsel %vm134, %v4094, 0
    %v4118 = vsel %vm134, %v4095, 0
    %v4121 = vsel %vm134, %v4096, 0
    %v4124 = vsel %vm134, %v4097, 0
    %v4127 = vsel %vm134, %v4098, 0
    %v4130 = vsel %vm134, %v4099, 0
    %4132 = vmatpush.msra.mxu0 0.0
    %4133 = vmatpush.msra.mxu0 0.0
    %4134 = vmatpush.msra.mxu0 0.0
    %4135 = vmatpush.msra.mxu0 0.0
    %4136 = vmatpush.msra.mxu0 0.0
    %4137 = vmatpush.msra.mxu0 0.0
    %4138 = vmatpush.msra.mxu0 0.0
    %4139 = vmatpush.msra.mxu0 0.0
    %4140 = vmatpush.msra.mxu0 0.0
    %4141 = vmatpush.msra.mxu0 0.0
    %4142 = vmatpush.msra.mxu0 0.0
    %4143 = vmatpush.msra.mxu0 0.0
    %v4144 = vand.u32 %v4103, 4294901760
    %4145 = vmatpush.msra.mxu0 %v4144
    %v4146 = vand.u32 %v4102, 4294901760
    %4147 = vmatpush.msra.mxu0 %v4146
    %v4148 = vand.u32 %v4101, 4294901760
    %4149 = vmatpush.msra.mxu0 %v4148
    %v4150 = vand.u32 %v4100, 4294901760
    %4151 = vmatpush.msra.mxu0 %v4150
    %v4152 = vand.u32 %v4109, 4294901760
    %v4153 = vsub.f32 %v4109, %v4152
    %v4154 = vand.u32 %v4153, 4294901760
    %v4155 = vsub.f32 %v4153, %v4154
    %v4156 = vand.u32 %v4155, 4294901760
    %4157 = vmatmul.f32.gmra.mxu0 %v4156
    %v4158 = vpop.f32.mrf.mxu0
    %v4159 = vadd.f32 %v4106, %v4158
    %v4160 = vand.u32 %v4112, 4294901760
    %v4161 = vsub.f32 %v4112, %v4160
    %v4162 = vand.u32 %v4161, 4294901760
    %v4163 = vsub.f32 %v4161, %v4162
    %v4164 = vand.u32 %v4163, 4294901760
    %4165 = vmatmul.f32.gmra.mxu0 %v4164
    %v4166 = vpop.f32.mrf.mxu0
    %v4167 = vadd.f32 %v4106, %v4166
    %v4168 = vand.u32 %v4115, 4294901760
    %v4169 = vsub.f32 %v4115, %v4168
    %v4170 = vand.u32 %v4169, 4294901760
    %v4171 = vsub.f32 %v4169, %v4170
    %v4172 = vand.u32 %v4171, 4294901760
    %4173 = vmatmul.f32.gmra.mxu0 %v4172
    %v4174 = vpop.f32.mrf.mxu0
    %v4175 = vadd.f32 %v4106, %v4174
    %v4176 = vand.u32 %v4118, 4294901760
    %v4177 = vsub.f32 %v4118, %v4176
    %v4178 = vand.u32 %v4177, 4294901760
    %v4179 = vsub.f32 %v4177, %v4178
    %v4180 = vand.u32 %v4179, 4294901760
    %4181 = vmatmul.f32.gmra.mxu0 %v4180
    %v4182 = vpop.f32.mrf.mxu0
    %v4183 = vadd.f32 %v4106, %v4182
    %v4184 = vand.u32 %v4121, 4294901760
    %v4185 = vsub.f32 %v4121, %v4184
    %v4186 = vand.u32 %v4185, 4294901760
    %v4187 = vsub.f32 %v4185, %v4186
    %v4188 = vand.u32 %v4187, 4294901760
    %4189 = vmatmul.f32.gmra.mxu0 %v4188
    %v4190 = vpop.f32.mrf.mxu0
    %v4191 = vadd.f32 %v4106, %v4190
    %v4192 = vand.u32 %v4124, 4294901760
    %v4193 = vsub.f32 %v4124, %v4192
    %v4194 = vand.u32 %v4193, 4294901760
    %v4195 = vsub.f32 %v4193, %v4194
    %v4196 = vand.u32 %v4195, 4294901760
    %4197 = vmatmul.f32.gmra.mxu0 %v4196
    %v4198 = vpop.f32.mrf.mxu0
    %v4199 = vadd.f32 %v4106, %v4198
    %v4200 = vand.u32 %v4127, 4294901760
    %v4201 = vsub.f32 %v4127, %v4200
    %v4202 = vand.u32 %v4201, 4294901760
    %v4203 = vsub.f32 %v4201, %v4202
    %v4204 = vand.u32 %v4203, 4294901760
    %4205 = vmatmul.f32.gmra.mxu0 %v4204
    %v4206 = vpop.f32.mrf.mxu0
    %v4207 = vadd.f32 %v4106, %v4206
    %v4208 = vand.u32 %v4130, 4294901760
    %v4209 = vsub.f32 %v4130, %v4208
    %v4210 = vand.u32 %v4209, 4294901760
    %v4211 = vsub.f32 %v4209, %v4210
    %v4212 = vand.u32 %v4211, 4294901760
    %4213 = vmatmul.f32.gmra.mxu0 %v4212
    %v4214 = vpop.f32.mrf.mxu0
    %v4215 = vadd.f32 %v4106, %v4214
    %4216 = vdwg.mxu0
    %4217 = vmatpush.msra.mxu0 0.0
    %4218 = vmatpush.msra.mxu0 0.0
    %4219 = vmatpush.msra.mxu0 0.0
    %4220 = vmatpush.msra.mxu0 0.0
    %4221 = vmatpush.msra.mxu0 0.0
    %4222 = vmatpush.msra.mxu0 0.0
    %4223 = vmatpush.msra.mxu0 0.0
    %4224 = vmatpush.msra.mxu0 0.0
    %4225 = vmatpush.msra.mxu0 0.0
    %4226 = vmatpush.msra.mxu0 0.0
    %4227 = vmatpush.msra.mxu0 0.0
    %4228 = vmatpush.msra.mxu0 0.0
    %v4229 = vand.u32 %v4103, 4294901760
    %v4230 = vsub.f32 %v4103, %v4229
    %v4231 = vand.u32 %v4230, 4294901760
    %v4232 = vsub.f32 %v4230, %v4231
    %v4233 = vand.u32 %v4232, 4294901760
    %4234 = vmatpush.msra.mxu0 %v4233
    %v4235 = vand.u32 %v4102, 4294901760
    %v4236 = vsub.f32 %v4102, %v4235
    %v4237 = vand.u32 %v4236, 4294901760
    %v4238 = vsub.f32 %v4236, %v4237
    %v4239 = vand.u32 %v4238, 4294901760
    %4240 = vmatpush.msra.mxu0 %v4239
    %v4241 = vand.u32 %v4101, 4294901760
    %v4242 = vsub.f32 %v4101, %v4241
    %v4243 = vand.u32 %v4242, 4294901760
    %v4244 = vsub.f32 %v4242, %v4243
    %v4245 = vand.u32 %v4244, 4294901760
    %4246 = vmatpush.msra.mxu0 %v4245
    %v4247 = vand.u32 %v4100, 4294901760
    %v4248 = vsub.f32 %v4100, %v4247
    %v4249 = vand.u32 %v4248, 4294901760
    %v4250 = vsub.f32 %v4248, %v4249
    %v4251 = vand.u32 %v4250, 4294901760
    %4252 = vmatpush.msra.mxu0 %v4251
    %v4253 = vand.u32 %v4109, 4294901760
    %4254 = vmatmul.f32.gmra.mxu0 %v4253
    %v4255 = vpop.f32.mrf.mxu0
    %v4256 = vadd.f32 %v4159, %v4255
    %v4257 = vand.u32 %v4112, 4294901760
    %4258 = vmatmul.f32.gmra.mxu0 %v4257
    %v4259 = vpop.f32.mrf.mxu0
    %v4260 = vadd.f32 %v4167, %v4259
    %v4261 = vand.u32 %v4115, 4294901760
    %4262 = vmatmul.f32.gmra.mxu0 %v4261
    %v4263 = vpop.f32.mrf.mxu0
    %v4264 = vadd.f32 %v4175, %v4263
    %v4265 = vand.u32 %v4118, 4294901760
    %4266 = vmatmul.f32.gmra.mxu0 %v4265
    %v4267 = vpop.f32.mrf.mxu0
    %v4268 = vadd.f32 %v4183, %v4267
    %v4269 = vand.u32 %v4121, 4294901760
    %4270 = vmatmul.f32.gmra.mxu0 %v4269
    %v4271 = vpop.f32.mrf.mxu0
    %v4272 = vadd.f32 %v4191, %v4271
    %v4273 = vand.u32 %v4124, 4294901760
    %4274 = vmatmul.f32.gmra.mxu0 %v4273
    %v4275 = vpop.f32.mrf.mxu0
    %v4276 = vadd.f32 %v4199, %v4275
    %v4277 = vand.u32 %v4127, 4294901760
    %4278 = vmatmul.f32.gmra.mxu0 %v4277
    %v4279 = vpop.f32.mrf.mxu0
    %v4280 = vadd.f32 %v4207, %v4279
    %v4281 = vand.u32 %v4130, 4294901760
    %4282 = vmatmul.f32.gmra.mxu0 %v4281
    %v4283 = vpop.f32.mrf.mxu0
    %v4284 = vadd.f32 %v4215, %v4283
    %4285 = vdwg.mxu0
    %4286 = vmatpush.msra.mxu0 0.0
    %4287 = vmatpush.msra.mxu0 0.0
    %4288 = vmatpush.msra.mxu0 0.0
    %4289 = vmatpush.msra.mxu0 0.0
    %4290 = vmatpush.msra.mxu0 0.0
    %4291 = vmatpush.msra.mxu0 0.0
    %4292 = vmatpush.msra.mxu0 0.0
    %4293 = vmatpush.msra.mxu0 0.0
    %4294 = vmatpush.msra.mxu0 0.0
    %4295 = vmatpush.msra.mxu0 0.0
    %4296 = vmatpush.msra.mxu0 0.0
    %4297 = vmatpush.msra.mxu0 0.0
    %v4298 = vand.u32 %v4103, 4294901760
    %v4299 = vsub.f32 %v4103, %v4298
    %4300 = vmatpush.msra.mxu0 %v4299
    %v4301 = vand.u32 %v4102, 4294901760
    %v4302 = vsub.f32 %v4102, %v4301
    %4303 = vmatpush.msra.mxu0 %v4302
    %v4304 = vand.u32 %v4101, 4294901760
    %v4305 = vsub.f32 %v4101, %v4304
    %4306 = vmatpush.msra.mxu0 %v4305
    %v4307 = vand.u32 %v4100, 4294901760
    %v4308 = vsub.f32 %v4100, %v4307
    %4309 = vmatpush.msra.mxu0 %v4308
    %v4310 = vand.u32 %v4109, 4294901760
    %v4311 = vsub.f32 %v4109, %v4310
    %4312 = vmatmul.f32.gmra.mxu0 %v4311
    %v4313 = vpop.f32.mrf.mxu0
    %v4314 = vadd.f32 %v4256, %v4313
    %v4315 = vand.u32 %v4112, 4294901760
    %v4316 = vsub.f32 %v4112, %v4315
    %4317 = vmatmul.f32.gmra.mxu0 %v4316
    %v4318 = vpop.f32.mrf.mxu0
    %v4319 = vadd.f32 %v4260, %v4318
    %v4320 = vand.u32 %v4115, 4294901760
    %v4321 = vsub.f32 %v4115, %v4320
    %4322 = vmatmul.f32.gmra.mxu0 %v4321
    %v4323 = vpop.f32.mrf.mxu0
    %v4324 = vadd.f32 %v4264, %v4323
    %v4325 = vand.u32 %v4118, 4294901760
    %v4326 = vsub.f32 %v4118, %v4325
    %4327 = vmatmul.f32.gmra.mxu0 %v4326
    %v4328 = vpop.f32.mrf.mxu0
    %v4329 = vadd.f32 %v4268, %v4328
    %v4330 = vand.u32 %v4121, 4294901760
    %v4331 = vsub.f32 %v4121, %v4330
    %4332 = vmatmul.f32.gmra.mxu0 %v4331
    %v4333 = vpop.f32.mrf.mxu0
    %v4334 = vadd.f32 %v4272, %v4333
    %v4335 = vand.u32 %v4124, 4294901760
    %v4336 = vsub.f32 %v4124, %v4335
    %4337 = vmatmul.f32.gmra.mxu0 %v4336
    %v4338 = vpop.f32.mrf.mxu0
    %v4339 = vadd.f32 %v4276, %v4338
    %v4340 = vand.u32 %v4127, 4294901760
    %v4341 = vsub.f32 %v4127, %v4340
    %4342 = vmatmul.f32.gmra.mxu0 %v4341
    %v4343 = vpop.f32.mrf.mxu0
    %v4344 = vadd.f32 %v4280, %v4343
    %v4345 = vand.u32 %v4130, 4294901760
    %v4346 = vsub.f32 %v4130, %v4345
    %4347 = vmatmul.f32.gmra.mxu0 %v4346
    %v4348 = vpop.f32.mrf.mxu0
    %v4349 = vadd.f32 %v4284, %v4348
    %4350 = vdwg.mxu0
    %4351 = vmatpush.msra.mxu0 0.0
    %4352 = vmatpush.msra.mxu0 0.0
    %4353 = vmatpush.msra.mxu0 0.0
    %4354 = vmatpush.msra.mxu0 0.0
    %4355 = vmatpush.msra.mxu0 0.0
    %4356 = vmatpush.msra.mxu0 0.0
    %4357 = vmatpush.msra.mxu0 0.0
    %4358 = vmatpush.msra.mxu0 0.0
    %4359 = vmatpush.msra.mxu0 0.0
    %4360 = vmatpush.msra.mxu0 0.0
    %4361 = vmatpush.msra.mxu0 0.0
    %4362 = vmatpush.msra.mxu0 0.0
    %v4363 = vand.u32 %v4103, 4294901760
    %4364 = vmatpush.msra.mxu0 %v4363
    %v4365 = vand.u32 %v4102, 4294901760
    %4366 = vmatpush.msra.mxu0 %v4365
    %v4367 = vand.u32 %v4101, 4294901760
    %4368 = vmatpush.msra.mxu0 %v4367
    %v4369 = vand.u32 %v4100, 4294901760
    %4370 = vmatpush.msra.mxu0 %v4369
    %v4371 = vand.u32 %v4109, 4294901760
    %v4372 = vsub.f32 %v4109, %v4371
    %v4373 = vand.u32 %v4372, 4294901760
    %4374 = vmatmul.f32.gmra.mxu0 %v4373
    %v4375 = vpop.f32.mrf.mxu0
    %v4376 = vadd.f32 %v4314, %v4375
    %v4377 = vand.u32 %v4112, 4294901760
    %v4378 = vsub.f32 %v4112, %v4377
    %v4379 = vand.u32 %v4378, 4294901760
    %4380 = vmatmul.f32.gmra.mxu0 %v4379
    %v4381 = vpop.f32.mrf.mxu0
    %v4382 = vadd.f32 %v4319, %v4381
    %v4383 = vand.u32 %v4115, 4294901760
    %v4384 = vsub.f32 %v4115, %v4383
    %v4385 = vand.u32 %v4384, 4294901760
    %4386 = vmatmul.f32.gmra.mxu0 %v4385
    %v4387 = vpop.f32.mrf.mxu0
    %v4388 = vadd.f32 %v4324, %v4387
    %v4389 = vand.u32 %v4118, 4294901760
    %v4390 = vsub.f32 %v4118, %v4389
    %v4391 = vand.u32 %v4390, 4294901760
    %4392 = vmatmul.f32.gmra.mxu0 %v4391
    %v4393 = vpop.f32.mrf.mxu0
    %v4394 = vadd.f32 %v4329, %v4393
    %v4395 = vand.u32 %v4121, 4294901760
    %v4396 = vsub.f32 %v4121, %v4395
    %v4397 = vand.u32 %v4396, 4294901760
    %4398 = vmatmul.f32.gmra.mxu0 %v4397
    %v4399 = vpop.f32.mrf.mxu0
    %v4400 = vadd.f32 %v4334, %v4399
    %v4401 = vand.u32 %v4124, 4294901760
    %v4402 = vsub.f32 %v4124, %v4401
    %v4403 = vand.u32 %v4402, 4294901760
    %4404 = vmatmul.f32.gmra.mxu0 %v4403
    %v4405 = vpop.f32.mrf.mxu0
    %v4406 = vadd.f32 %v4339, %v4405
    %v4407 = vand.u32 %v4127, 4294901760
    %v4408 = vsub.f32 %v4127, %v4407
    %v4409 = vand.u32 %v4408, 4294901760
    %4410 = vmatmul.f32.gmra.mxu0 %v4409
    %v4411 = vpop.f32.mrf.mxu0
    %v4412 = vadd.f32 %v4344, %v4411
    %v4413 = vand.u32 %v4130, 4294901760
    %v4414 = vsub.f32 %v4130, %v4413
    %v4415 = vand.u32 %v4414, 4294901760
    %4416 = vmatmul.f32.gmra.mxu0 %v4415
    %v4417 = vpop.f32.mrf.mxu0
    %v4418 = vadd.f32 %v4349, %v4417
    %4419 = vdwg.mxu0
    %4420 = vmatpush.msra.mxu0 0.0
    %4421 = vmatpush.msra.mxu0 0.0
    %4422 = vmatpush.msra.mxu0 0.0
    %4423 = vmatpush.msra.mxu0 0.0
    %4424 = vmatpush.msra.mxu0 0.0
    %4425 = vmatpush.msra.mxu0 0.0
    %4426 = vmatpush.msra.mxu0 0.0
    %4427 = vmatpush.msra.mxu0 0.0
    %4428 = vmatpush.msra.mxu0 0.0
    %4429 = vmatpush.msra.mxu0 0.0
    %4430 = vmatpush.msra.mxu0 0.0
    %4431 = vmatpush.msra.mxu0 0.0
    %v4432 = vand.u32 %v4103, 4294901760
    %v4433 = vsub.f32 %v4103, %v4432
    %v4434 = vand.u32 %v4433, 4294901760
    %4435 = vmatpush.msra.mxu0 %v4434
    %v4436 = vand.u32 %v4102, 4294901760
    %v4437 = vsub.f32 %v4102, %v4436
    %v4438 = vand.u32 %v4437, 4294901760
    %4439 = vmatpush.msra.mxu0 %v4438
    %v4440 = vand.u32 %v4101, 4294901760
    %v4441 = vsub.f32 %v4101, %v4440
    %v4442 = vand.u32 %v4441, 4294901760
    %4443 = vmatpush.msra.mxu0 %v4442
    %v4444 = vand.u32 %v4100, 4294901760
    %v4445 = vsub.f32 %v4100, %v4444
    %v4446 = vand.u32 %v4445, 4294901760
    %4447 = vmatpush.msra.mxu0 %v4446
    %v4448 = vand.u32 %v4109, 4294901760
    %4449 = vmatmul.f32.gmra.mxu0 %v4448
    %v4450 = vpop.f32.mrf.mxu0
    %v4451 = vadd.f32 %v4376, %v4450
    %v4452 = vand.u32 %v4112, 4294901760
    %4453 = vmatmul.f32.gmra.mxu0 %v4452
    %v4454 = vpop.f32.mrf.mxu0
    %v4455 = vadd.f32 %v4382, %v4454
    %v4456 = vand.u32 %v4115, 4294901760
    %4457 = vmatmul.f32.gmra.mxu0 %v4456
    %v4458 = vpop.f32.mrf.mxu0
    %v4459 = vadd.f32 %v4388, %v4458
    %v4460 = vand.u32 %v4118, 4294901760
    %4461 = vmatmul.f32.gmra.mxu0 %v4460
    %v4462 = vpop.f32.mrf.mxu0
    %v4463 = vadd.f32 %v4394, %v4462
    %v4464 = vand.u32 %v4121, 4294901760
    %4465 = vmatmul.f32.gmra.mxu0 %v4464
    %v4466 = vpop.f32.mrf.mxu0
    %v4467 = vadd.f32 %v4400, %v4466
    %v4468 = vand.u32 %v4124, 4294901760
    %4469 = vmatmul.f32.gmra.mxu0 %v4468
    %v4470 = vpop.f32.mrf.mxu0
    %v4471 = vadd.f32 %v4406, %v4470
    %v4472 = vand.u32 %v4127, 4294901760
    %4473 = vmatmul.f32.gmra.mxu0 %v4472
    %v4474 = vpop.f32.mrf.mxu0
    %v4475 = vadd.f32 %v4412, %v4474
    %v4476 = vand.u32 %v4130, 4294901760
    %4477 = vmatmul.f32.gmra.mxu0 %v4476
    %v4478 = vpop.f32.mrf.mxu0
    %v4479 = vadd.f32 %v4418, %v4478
    %4480 = vdwg.mxu0
    %4481 = vmatpush.msra.mxu0 0.0
    %4482 = vmatpush.msra.mxu0 0.0
    %4483 = vmatpush.msra.mxu0 0.0
    %4484 = vmatpush.msra.mxu0 0.0
    %4485 = vmatpush.msra.mxu0 0.0
    %4486 = vmatpush.msra.mxu0 0.0
    %4487 = vmatpush.msra.mxu0 0.0
    %4488 = vmatpush.msra.mxu0 0.0
    %4489 = vmatpush.msra.mxu0 0.0
    %4490 = vmatpush.msra.mxu0 0.0
    %4491 = vmatpush.msra.mxu0 0.0
    %4492 = vmatpush.msra.mxu0 0.0
    %v4493 = vand.u32 %v4103, 4294901760
    %4494 = vmatpush.msra.mxu0 %v4493
    %v4495 = vand.u32 %v4102, 4294901760
    %4496 = vmatpush.msra.mxu0 %v4495
    %v4497 = vand.u32 %v4101, 4294901760
    %4498 = vmatpush.msra.mxu0 %v4497
    %v4499 = vand.u32 %v4100, 4294901760
    %4500 = vmatpush.msra.mxu0 %v4499
    %v4501 = vand.u32 %v4109, 4294901760
    %4502 = vmatmul.f32.gmra.mxu0 %v4501
    %v4503 = vpop.f32.mrf.mxu0
    %v4504 = vadd.f32 %v4451, %v4503
    %v4505 = vand.u32 %v4112, 4294901760
    %4506 = vmatmul.f32.gmra.mxu0 %v4505
    %v4507 = vpop.f32.mrf.mxu0
    %v4508 = vadd.f32 %v4455, %v4507
    %v4509 = vand.u32 %v4115, 4294901760
    %4510 = vmatmul.f32.gmra.mxu0 %v4509
    %v4511 = vpop.f32.mrf.mxu0
    %v4512 = vadd.f32 %v4459, %v4511
    %v4513 = vand.u32 %v4118, 4294901760
    %4514 = vmatmul.f32.gmra.mxu0 %v4513
    %v4515 = vpop.f32.mrf.mxu0
    %v4516 = vadd.f32 %v4463, %v4515
    %v4517 = vand.u32 %v4121, 4294901760
    %4518 = vmatmul.f32.gmra.mxu0 %v4517
    %v4519 = vpop.f32.mrf.mxu0
    %v4520 = vadd.f32 %v4467, %v4519
    %v4521 = vand.u32 %v4124, 4294901760
    %4522 = vmatmul.f32.gmra.mxu0 %v4521
    %v4523 = vpop.f32.mrf.mxu0
    %v4524 = vadd.f32 %v4471, %v4523
    %v4525 = vand.u32 %v4127, 4294901760
    %4526 = vmatmul.f32.gmra.mxu0 %v4525
    %v4527 = vpop.f32.mrf.mxu0
    %v4528 = vadd.f32 %v4475, %v4527
    %v4529 = vand.u32 %v4130, 4294901760
    %4530 = vmatmul.f32.gmra.mxu0 %v4529
    %v4531 = vpop.f32.mrf.mxu0
    %v4532 = vadd.f32 %v4479, %v4531
    %4533 = vdwg.mxu0
    %v4534 = vtanh.pop %v4504
    %v4535 = vtanh.pop %v4508
    %v4536 = vtanh.pop %v4512
    %v4537 = vtanh.pop %v4516
    %v4538 = vtanh.pop %v4520
    %v4539 = vtanh.pop %v4524
    %v4540 = vtanh.pop %v4528
    %v4541 = vtanh.pop %v4532
    %v4542 = vld [vmem:[%s10] sm:$0x1]
    %v4544 = vperm.slane %v4542, 0
    %v4546 = vmul.f32 %v4534, %v4544
    %v4547 = vmul.f32 %v4535, %v4544
    %v4548 = vmul.f32 %v4536, %v4544
    %v4549 = vmul.f32 %v4537, %v4544
    %v4550 = vmul.f32 %v4538, %v4544
    %v4551 = vmul.f32 %v4539, %v4544
    %v4552 = vmul.f32 %v4540, %v4544
    %v4553 = vmul.f32 %v4541, %v4544
    %v4554 = vsel %vm134, %v4546, 0.0
    %4555 = vadd.xlane.f32.xlu0 %v4554
    %v4556 = vpop.xlane.xlu0 %4555
    %v4557 = vsel %vm134, %v4547, 0.0
    %4558 = vadd.xlane.f32.xlu0 %v4557
    %v4559 = vpop.xlane.xlu0 %4558
    %v4560 = vsel %vm134, %v4548, 0.0
    %4561 = vadd.xlane.f32.xlu0 %v4560
    %v4562 = vpop.xlane.xlu0 %4561
    %v4563 = vsel %vm134, %v4549, 0.0
    %4564 = vadd.xlane.f32.xlu0 %v4563
    %v4565 = vpop.xlane.xlu0 %4564
    %v4566 = vsel %vm134, %v4550, 0.0
    %4567 = vadd.xlane.f32.xlu0 %v4566
    %v4568 = vpop.xlane.xlu0 %4567
    %v4569 = vsel %vm134, %v4551, 0.0
    %4570 = vadd.xlane.f32.xlu0 %v4569
    %v4571 = vpop.xlane.xlu0 %4570
    %v4572 = vsel %vm134, %v4552, 0.0
    %4573 = vadd.xlane.f32.xlu0 %v4572
    %v4574 = vpop.xlane.xlu0 %4573
    %v4575 = vsel %vm134, %v4553, 0.0
    %4576 = vadd.xlane.f32.xlu0 %v4575
    %v4577 = vpop.xlane.xlu0 %4576
    %v4578 = vsel %vm790, %v4556, -1e+30
    %v4579 = vsel %vm1238, %v4559, -1e+30
    %v4580 = vsel %vm1685, %v4562, -1e+30
    %v4581 = vsel %vm2132, %v4565, -1e+30
    %v4582 = vsel %vm2355, %v4568, -1e+30
    %v4583 = vsel %vm1908, %v4571, -1e+30
    %v4584 = vsel %vm1461, %v4574, -1e+30
    %v4585 = vsel %vm1013, %v4577, -1e+30
    %vm4586 = vcmask 7168
    %v4587 = vsel %vm4586, %v4578, -inf
    %v4588 = vsel %vm4586, %v4579, -inf
    %v4589 = vsel %vm4586, %v4580, -inf
    %v4590 = vsel %vm4586, %v4581, -inf
    %v4591 = vsel %vm4586, %v4582, -inf
    %v4592 = vmax.f32 %v4587, %v4591
    %v4593 = vsel %vm4586, %v4583, -inf
    %v4594 = vmax.f32 %v4588, %v4593
    %v4595 = vsel %vm4586, %v4584, -inf
    %v4596 = vmax.f32 %v4589, %v4595
    %v4597 = vsel %vm4586, %v4585, -inf
    %v4598 = vmax.f32 %v4590, %v4597
    %v4599 = vmax.f32 %v4592, %v4594
    %v4600 = vmax.f32 %v4596, %v4598
    %v4601 = vmax.f32 %v4599, %v4600
    %v4602 = vsub.f32 %v4556, %v4601
    %v4603 = vsub.f32 %v4559, %v4601
    %v4604 = vsub.f32 %v4562, %v4601
    %v4605 = vsub.f32 %v4565, %v4601
    %v4606 = vsub.f32 %v4568, %v4601
    %v4607 = vsub.f32 %v4571, %v4601
    %v4608 = vsub.f32 %v4574, %v4601
    %v4609 = vsub.f32 %v4577, %v4601
    %v4610 = vmul.f32 %v4602, 1.442695
    %v4611 = vpow.pop %v4610
    %v4612 = vmul.f32 %v4603, 1.442695
    %v4613 = vpow.pop %v4612
    %v4614 = vmul.f32 %v4604, 1.442695
    %v4615 = vpow.pop %v4614
    %v4616 = vmul.f32 %v4605, 1.442695
    %v4617 = vpow.pop %v4616
    %v4618 = vmul.f32 %v4606, 1.442695
    %v4619 = vpow.pop %v4618
    %v4620 = vmul.f32 %v4607, 1.442695
    %v4621 = vpow.pop %v4620
    %v4622 = vmul.f32 %v4608, 1.442695
    %v4623 = vpow.pop %v4622
    %v4624 = vmul.f32 %v4609, 1.442695
    %v4625 = vpow.pop %v4624
    %v4626 = vsel %vm790, %v4611, 0.0
    %v4627 = vsel %vm1238, %v4613, 0.0
    %v4628 = vsel %vm1685, %v4615, 0.0
    %v4629 = vsel %vm2132, %v4617, 0.0
    %v4630 = vsel %vm2355, %v4619, 0.0
    %v4631 = vsel %vm1908, %v4621, 0.0
    %v4632 = vsel %vm1461, %v4623, 0.0
    %v4633 = vsel %vm1013, %v4625, 0.0
    %v4634 = vsel %vm4586, %v4626, 0.0
    %v4635 = vsel %vm4586, %v4627, 0.0
    %v4636 = vadd.f32 %v4634, %v4635
    %v4637 = vsel %vm4586, %v4628, 0.0
    %v4638 = vadd.f32 %v4636, %v4637
    %v4639 = vsel %vm4586, %v4629, 0.0
    %v4640 = vadd.f32 %v4638, %v4639
    %v4641 = vsel %vm4586, %v4630, 0.0
    %v4642 = vadd.f32 %v4640, %v4641
    %v4643 = vsel %vm4586, %v4631, 0.0
    %v4644 = vadd.f32 %v4642, %v4643
    %v4645 = vsel %vm4586, %v4632, 0.0
    %v4646 = vadd.f32 %v4644, %v4645
    %v4647 = vsel %vm4586, %v4633, 0.0
    %v4648 = vadd.f32 %v4646, %v4647
    %v4649 = vrcp.pop %v4648
    %v4650 = vmul.f32 %v4648, %v4649
    %v4651 = vsub.f32 1.0, %v4650
    %v4652 = vmul.f32 %v4649, %v4651
    %v4653 = vadd.f32 %v4649, %v4652
    %vm4654 = vweird.f32 %v4648
    %vm4655 = vweird.f32 %v4649
    %vm4656 = vmor %vm4654, %vm4655
    %v4657 = vsel %vm4656, %v4649, %v4653
    %v4658 = vand.u32 2147483647, %v4648
    %vm4659 = vcmp.eq.f32.partialorder %v4658, 8.507059e+37
    %v4660 = vand.u32 %v4648, 2147483648
    %v4661 = vor.u32 1.1754944e-38, %v4660
    %v4662 = vsel %vm4659, %v4661, %v4657
    %v4663 = vmul.f32 %v4626, %v4662
    %v4664 = vmul.f32 %v4627, %v4662
    %v4665 = vmul.f32 %v4628, %v4662
    %v4666 = vmul.f32 %v4629, %v4662
    %v4667 = vmul.f32 %v4630, %v4662
    %v4668 = vmul.f32 %v4631, %v4662
    %v4669 = vmul.f32 %v4632, %v4662
    %v4670 = vmul.f32 %v4633, %v4662
    %4672 = vset.pattern.permute.xlu0 0
    %4673 = vperm.xlu0 %4672, %v4663
    %v4674 = vpop.permute.xlu0 %4673
    %4677 = vset.pattern.permute.xlu0 0
    %4678 = vperm.xlu0 %4677, %v4664
    %v4679 = vpop.permute.xlu0 %4678
    %4682 = vset.pattern.permute.xlu0 0
    %4683 = vperm.xlu0 %4682, %v4665
    %v4684 = vpop.permute.xlu0 %4683
    %4687 = vset.pattern.permute.xlu0 0
    %4688 = vperm.xlu0 %4687, %v4666
    %v4689 = vpop.permute.xlu0 %4688
    %4692 = vset.pattern.permute.xlu0 0
    %4693 = vperm.xlu0 %4692, %v4667
    %v4694 = vpop.permute.xlu0 %4693
    %4697 = vset.pattern.permute.xlu0 0
    %4698 = vperm.xlu0 %4697, %v4668
    %v4699 = vpop.permute.xlu0 %4698
    %4702 = vset.pattern.permute.xlu0 0
    %4703 = vperm.xlu0 %4702, %v4669
    %v4704 = vpop.permute.xlu0 %4703
    %4707 = vset.pattern.permute.xlu0 0
    %4708 = vperm.xlu0 %4707, %v4670
    %v4709 = vpop.permute.xlu0 %4708
    %v4711 = vmul.f32 %v4092, %v4674
    %v4712 = vmul.f32 %v4093, %v4679
    %v4713 = vmul.f32 %v4094, %v4684
    %v4714 = vmul.f32 %v4095, %v4689
    %v4715 = vmul.f32 %v4096, %v4694
    %v4716 = vmul.f32 %v4097, %v4699
    %v4717 = vmul.f32 %v4098, %v4704
    %v4718 = vmul.f32 %v4099, %v4709
    %v4719 = vsel %vm134, %v4711, 0.0
    %v4720 = vsel %vm134, %v4712, 0.0
    %v4721 = vadd.f32 %v4719, %v4720
    %v4722 = vsel %vm134, %v4713, 0.0
    %v4723 = vadd.f32 %v4721, %v4722
    %v4724 = vsel %vm134, %v4714, 0.0
    %v4725 = vadd.f32 %v4723, %v4724
    %v4726 = vsel %vm134, %v4715, 0.0
    %v4727 = vadd.f32 %v4725, %v4726
    %v4728 = vsel %vm134, %v4716, 0.0
    %v4729 = vadd.f32 %v4727, %v4728
    %v4730 = vsel %vm134, %v4717, 0.0
    %v4731 = vadd.f32 %v4729, %v4730
    %v4732 = vsel %vm134, %v4718, 0.0
    %v4733 = vadd.f32 %v4731, %v4732
    %4734 = vst.msk [vmem:[#allocation13] sm:$0xff] %vm134, %v4733
    // Predicated region
    $region66: #{tpu_custom_call.1} parent=1 // pred_check
      _
    $region67: #{tpu_custom_call.1} parent=1 // pred_check_branch
      %4736 = sbr.rel (0) target = $region69
    $region68: #{tpu_custom_call.1} parent=1 // pred_region
      %4738 = vsyncadd [#allocation6], 0
      %s4740 = sshll.u32 [#allocation13], 4
      %s4741 = int_to_ptr.vmem [resolvable:$true] %s4740
      %s4742 = sshll.u32 %s11, 4
      %s4743 = int_to_ptr.hbm [resolvable:$true] %s4742
      %4745 = dma.vmem_to_hbm [thread:$0]  %s4741, 128, %s4743, [#allocation6]
    $region69: #{tpu_custom_call.1} parent=1 // pred_fallthru
      _
    // Predicated region
    $region70: #{tpu_custom_call.1} parent=1 // pred_check
      _
    $region71: #{tpu_custom_call.1} parent=1 // pred_check_branch
      %4747 = sbr.rel (0) target = $region73
    $region72: #{tpu_custom_call.1} parent=1 // pred_region
      %4749 = dma.done [#allocation6], 128
    $region73: #{tpu_custom_call.1} parent=1 // pred_fallthru
      _
    %4750 = vsyncpa [#allocation5], 1
    %4751 = vsyncpa [#allocation8], 1
    %4752 = vsyncpa [#allocation11], 1
    %4753 = vsyncpa [#allocation6], 1

</llo_original>
